<compile_context>
chip_gen: v7x
topology: tpu7x:2x2x1
jax: 0.10.0
libtpu: 0.0.40
codegen_flags: <defaults>
</compile_context>

<pallas_src>
import jax
import jax.numpy as jnp
from jax.experimental import pallas as pl
from jax.experimental.pallas import tpu as pltpu


def _round_up(x, m):
    return (x + m - 1) // m * m


def qstate_kernel(x_ref,
                  w1_ref, b1_ref,
                  w2_ref, b2_ref,
                  w3_ref, b3_ref,
                  w4_ref, b4_ref,
                  o_ref):
    # bf16 x bf16 matmuls on the MXU, f32 accumulation; bias/ReLU in f32.
    h = jnp.dot(x_ref[...], w1_ref[...], preferred_element_type=jnp.float32)
    h = jnp.maximum(h + b1_ref[...], 0.0)

    h = jnp.dot(h.astype(jnp.bfloat16), w2_ref[...],
                preferred_element_type=jnp.float32)
    h = jnp.maximum(h + b2_ref[...], 0.0)

    h = jnp.dot(h.astype(jnp.bfloat16), w3_ref[...],
                preferred_element_type=jnp.float32)
    h = jnp.maximum(h + b3_ref[...], 0.0)

    out = jnp.dot(h.astype(jnp.bfloat16), w4_ref[...],
                  preferred_element_type=jnp.float32)
    o_ref[...] = (out + b4_ref[...]).astype(o_ref.dtype)


def _choose_batch_tiling(B, max_tile=1024):
    """Pad batch only to the bf16 sublane multiple (16) and pick a tile so
    that (a) large batches get >= 2 grid steps (v7x: both TensorCores used),
    (b) the tile never exceeds max_tile, (c) over-padding is tiny."""
    b_pad = _round_up(max(B, 1), 16)
    min_steps = 2 if b_pad >= 512 else 1          # no point splitting tiny B
    steps = max(min_steps, pl.cdiv(b_pad, max_tile))
    tile_b = _round_up(pl.cdiv(b_pad, steps), 16)
    b_pad = tile_b * steps
    return b_pad, tile_b, steps


def qstate_forward(x, params, action_steps, max_tile_b=1024):
    """x: [B, state_dim] f32; params: 4x (W_padded bf16 [in_p, out_p],
    b_padded f32 [1, out_p]). Returns [B, action_steps] f32."""
    (w1, b1), (w2, b2), (w3, b3), (w4, b4) = params
    B, d_in = x.shape
    d_in_p = w1.shape[0]
    d_out_p = w4.shape[1]

    b_pad, tile_b, steps = _choose_batch_tiling(B, max_tile_b)

    # Cast first, pad (in bf16) only if needed: avoids a full-size f32
    # padded copy of x in HBM.
    xb = x.astype(jnp.bfloat16)
    pad_rows = b_pad - B
    pad_cols = d_in_p - d_in
    if pad_rows or pad_cols:
        xb = jnp.pad(xb, ((0, pad_rows), (0, pad_cols)))

    def const_spec(arr, single_buffer):
        # Grid-resident constants: constant index_map; single-buffer if the
        # installed jax supports it (saves ~0.8 MiB of duplicated weights).
        if single_buffer:
            return pl.BlockSpec(arr.shape, lambda i: (0, 0),
                                pipeline_mode=pl.Buffered(1))
        return pl.BlockSpec(arr.shape, lambda i: (0, 0))

    def run(single_buffer_consts):
        cs = lambda a: const_spec(a, single_buffer_consts)
        return pl.pallas_call(
            qstate_kernel,
            out_shape=jax.ShapeDtypeStruct((b_pad, d_out_p), jnp.bfloat16),
            grid=(b_pad // tile_b,),
            in_specs=[
                pl.BlockSpec((tile_b, d_in_p), lambda i: (i, 0)),
                cs(w1), cs(b1),
                cs(w2), cs(b2),
                cs(w3), cs(b3),
                cs(w4), cs(b4),
            ],
            out_specs=pl.BlockSpec((tile_b, d_out_p), lambda i: (i, 0)),
            compiler_params=pltpu.CompilerParams(
                dimension_semantics=("parallel",),
                vmem_limit_bytes=32 * 1024 * 1024),
        )(xb, w1, b1, w2, b2, w3, b3, w4, b4)

    try:
        out = run(True)
    except Exception:
        # Fallback: some jax versions reject Buffered(1) on top-level specs.
        out = run(False)

    return out[:B, :action_steps].astype(jnp.float32)


def init_params(key, state_dim, action_steps):
    """Mirrors the PyTorch module's init (applied to every Linear):
    weight ~ U(-1/sqrt(out_features), 1/sqrt(out_features))  (hidden_init uses
    weight.size()[0] == out_features); bias keeps the PyTorch Linear default
    U(-1/sqrt(in_features), 1/sqrt(in_features)).
    Weights are stored [in, out] (transpose of PyTorch), zero-padded to
    lane/sublane-aligned shapes (in padded to 16, out to 128-lane multiples),
    weights cast to bf16, biases kept f32."""
    dims = [state_dim, 400, 300, 300, action_steps]
    dims_p = [_round_up(state_dim, 16), 512, 384, 384,
              _round_up(action_steps, 128)]
    params = []
    for i in range(4):
        d_in, d_out = dims[i], dims[i + 1]
        d_in_p, d_out_p = dims_p[i], dims_p[i + 1]
        key, kw, kb = jax.random.split(key, 3)
        w_lim = 1.0 / jnp.sqrt(jnp.float32(d_out))
        b_lim = 1.0 / jnp.sqrt(jnp.float32(d_in))
        w = jax.random.uniform(kw, (d_in, d_out), jnp.float32,
                               minval=-w_lim, maxval=w_lim)
        b = jax.random.uniform(kb, (1, d_out), jnp.float32,
                               minval=-b_lim, maxval=b_lim)
        w_p = (jnp.zeros((d_in_p, d_out_p), jnp.float32)
               .at[:d_in, :d_out].set(w).astype(jnp.bfloat16))
        b_p = jnp.zeros((1, d_out_p), jnp.float32).at[:, :d_out].set(b)
        params.append((w_p, b_p))
    return params


def reference_forward(x, params, action_steps):
    """Pure-JAX reference mirroring the kernel's mixed precision
    (bf16 matmul inputs, f32 accumulate / bias / ReLU, bf16 output store)."""
    B, d_in = x.shape
    d_in_p = params[0][0].shape[0]
    h = jnp.zeros((B, d_in_p), jnp.float32).at[:, :d_in].set(x)
    h = h.astype(jnp.bfloat16).astype(jnp.float32)
    for i, (w, b) in enumerate(params):
        h = h @ w.astype(jnp.float32) + b
        if i < 3:
            h = jnp.maximum(h, 0.0)
            h = h.astype(jnp.bfloat16).astype(jnp.float32)
    # Kernel writes the final result as bf16; mirror that rounding.
    h = h.astype(jnp.bfloat16).astype(jnp.float32)
    return h[:, :action_steps]


if __name__ == "__main__":
    key = jax.random.PRNGKey(0)
    state_dim, action_steps, batch = 32, 8, 8

    k_params, k_x = jax.random.split(key)
    params = init_params(k_params, state_dim, action_steps)
    x = jax.random.normal(k_x, (batch, state_dim), jnp.float32)

    out = qstate_forward(x, params, action_steps)
    out = jax.block_until_ready(out)

    ref = reference_forward(x, params, action_steps)
    assert out.shape == (batch, action_steps)
    assert jnp.allclose(out, ref, atol=1e-2, rtol=1e-2), "mismatch vs reference"
    print("KERNEL_OK")
</pallas_src>

<mosaic_0001>
module attributes {stable_mosaic.version = 11 : i64} {
  func.func @qstate_kernel(%arg0: i32, %arg1: memref<16x32xbf16, #tpu.memory_space<vmem>>, %arg2: memref<32x512xbf16, #tpu.memory_space<vmem>>, %arg3: memref<1x512xf32, #tpu.memory_space<vmem>>, %arg4: memref<512x384xbf16, #tpu.memory_space<vmem>>, %arg5: memref<1x384xf32, #tpu.memory_space<vmem>>, %arg6: memref<384x384xbf16, #tpu.memory_space<vmem>>, %arg7: memref<1x384xf32, #tpu.memory_space<vmem>>, %arg8: memref<384x128xbf16, #tpu.memory_space<vmem>>, %arg9: memref<1x128xf32, #tpu.memory_space<vmem>>, %arg10: memref<16x128xbf16, #tpu.memory_space<vmem>>) attributes {dimension_semantics = [#tpu.dimension_semantics<parallel>], iteration_bounds = array<i64: 1>, scalar_prefetch = 0 : i64, scratch_operands = 0 : i64, tpu.core_type = #tpu.core_type<tc>, window_params = [{transform_indices = @transform_0, window_bounds = array<i64: 16, 32>}, {pipeline_mode = #tpu.pipeline_mode<synchronous>, transform_indices = @transform_1, window_bounds = array<i64: 32, 512>}, {pipeline_mode = #tpu.pipeline_mode<synchronous>, transform_indices = @transform_2, window_bounds = array<i64: 1, 512>}, {pipeline_mode = #tpu.pipeline_mode<synchronous>, transform_indices = @transform_3, window_bounds = array<i64: 512, 384>}, {pipeline_mode = #tpu.pipeline_mode<synchronous>, transform_indices = @transform_4, window_bounds = array<i64: 1, 384>}, {pipeline_mode = #tpu.pipeline_mode<synchronous>, transform_indices = @transform_5, window_bounds = array<i64: 384, 384>}, {pipeline_mode = #tpu.pipeline_mode<synchronous>, transform_indices = @transform_6, window_bounds = array<i64: 1, 384>}, {pipeline_mode = #tpu.pipeline_mode<synchronous>, transform_indices = @transform_7, window_bounds = array<i64: 384, 128>}, {pipeline_mode = #tpu.pipeline_mode<synchronous>, transform_indices = @transform_8, window_bounds = array<i64: 1, 128>}, {transform_indices = @transform_9, window_bounds = array<i64: 16, 128>}]} {
    %c0 = arith.constant 0 : index
    %c0_0 = arith.constant 0 : index
    %0 = vector.load %arg1[%c0, %c0_0] : memref<16x32xbf16, #tpu.memory_space<vmem>>, vector<16x32xbf16>
    %c0_1 = arith.constant 0 : index
    %c0_2 = arith.constant 0 : index
    %1 = vector.load %arg2[%c0_1, %c0_2] : memref<32x512xbf16, #tpu.memory_space<vmem>>, vector<32x512xbf16>
    %cst = arith.constant dense<0.000000e+00> : vector<16x512xf32>
    %2 = tpu.matmul %0, %1, %cst {dimension_numbers = #tpu.dot_dimension_numbers<[1], [0], [0], [1], [0, 0, 1, 1], [], []>} : vector<16x32xbf16>, vector<32x512xbf16>, vector<16x512xf32> -> vector<16x512xf32>
    %c0_3 = arith.constant 0 : index
    %c0_4 = arith.constant 0 : index
    %3 = vector.load %arg3[%c0_3, %c0_4] : memref<1x512xf32, #tpu.memory_space<vmem>>, vector<1x512xf32>
    %4 = vector.broadcast %3 : vector<1x512xf32> to vector<16x512xf32>
    %5 = arith.addf %2, %4 : vector<16x512xf32>
    %cst_5 = arith.constant 0.000000e+00 : f32
    %6 = vector.broadcast %cst_5 : f32 to vector<16x512xf32>
    %7 = arith.maximumf %5, %6 : vector<16x512xf32>
    %8 = arith.truncf %7 : vector<16x512xf32> to vector<16x512xbf16>
    %c0_6 = arith.constant 0 : index
    %c0_7 = arith.constant 0 : index
    %9 = vector.load %arg4[%c0_6, %c0_7] : memref<512x384xbf16, #tpu.memory_space<vmem>>, vector<512x384xbf16>
    %cst_8 = arith.constant dense<0.000000e+00> : vector<16x384xf32>
    %10 = tpu.matmul %8, %9, %cst_8 {dimension_numbers = #tpu.dot_dimension_numbers<[1], [0], [0], [1], [0, 0, 1, 1], [], []>} : vector<16x512xbf16>, vector<512x384xbf16>, vector<16x384xf32> -> vector<16x384xf32>
    %c0_9 = arith.constant 0 : index
    %c0_10 = arith.constant 0 : index
    %11 = vector.load %arg5[%c0_9, %c0_10] : memref<1x384xf32, #tpu.memory_space<vmem>>, vector<1x384xf32>
    %12 = vector.broadcast %11 : vector<1x384xf32> to vector<16x384xf32>
    %13 = arith.addf %10, %12 : vector<16x384xf32>
    %cst_11 = arith.constant 0.000000e+00 : f32
    %14 = vector.broadcast %cst_11 : f32 to vector<16x384xf32>
    %15 = arith.maximumf %13, %14 : vector<16x384xf32>
    %16 = arith.truncf %15 : vector<16x384xf32> to vector<16x384xbf16>
    %c0_12 = arith.constant 0 : index
    %c0_13 = arith.constant 0 : index
    %17 = vector.load %arg6[%c0_12, %c0_13] : memref<384x384xbf16, #tpu.memory_space<vmem>>, vector<384x384xbf16>
    %cst_14 = arith.constant dense<0.000000e+00> : vector<16x384xf32>
    %18 = tpu.matmul %16, %17, %cst_14 {dimension_numbers = #tpu.dot_dimension_numbers<[1], [0], [0], [1], [0, 0, 1, 1], [], []>} : vector<16x384xbf16>, vector<384x384xbf16>, vector<16x384xf32> -> vector<16x384xf32>
    %c0_15 = arith.constant 0 : index
    %c0_16 = arith.constant 0 : index
    %19 = vector.load %arg7[%c0_15, %c0_16] : memref<1x384xf32, #tpu.memory_space<vmem>>, vector<1x384xf32>
    %20 = vector.broadcast %19 : vector<1x384xf32> to vector<16x384xf32>
    %21 = arith.addf %18, %20 : vector<16x384xf32>
    %cst_17 = arith.constant 0.000000e+00 : f32
    %22 = vector.broadcast %cst_17 : f32 to vector<16x384xf32>
    %23 = arith.maximumf %21, %22 : vector<16x384xf32>
    %24 = arith.truncf %23 : vector<16x384xf32> to vector<16x384xbf16>
    %c0_18 = arith.constant 0 : index
    %c0_19 = arith.constant 0 : index
    %25 = vector.load %arg8[%c0_18, %c0_19] : memref<384x128xbf16, #tpu.memory_space<vmem>>, vector<384x128xbf16>
    %cst_20 = arith.constant dense<0.000000e+00> : vector<16x128xf32>
    %26 = tpu.matmul %24, %25, %cst_20 {dimension_numbers = #tpu.dot_dimension_numbers<[1], [0], [0], [1], [0, 0, 1, 1], [], []>} : vector<16x384xbf16>, vector<384x128xbf16>, vector<16x128xf32> -> vector<16x128xf32>
    %c0_21 = arith.constant 0 : index
    %c0_22 = arith.constant 0 : index
    %27 = vector.load %arg9[%c0_21, %c0_22] : memref<1x128xf32, #tpu.memory_space<vmem>>, vector<1x128xf32>
    %28 = vector.broadcast %27 : vector<1x128xf32> to vector<16x128xf32>
    %29 = arith.addf %26, %28 : vector<16x128xf32>
    %30 = arith.truncf %29 : vector<16x128xf32> to vector<16x128xbf16>
    %c0_23 = arith.constant 0 : index
    %c0_24 = arith.constant 0 : index
    %31 = vector.load %arg10[%c0_23, %c0_24] : memref<16x128xbf16, #tpu.memory_space<vmem>>, vector<16x128xbf16>
    tpu.vector_store %arg10[%c0_23, %c0_24], %30 {strides = array<i32>} : memref<16x128xbf16, #tpu.memory_space<vmem>>, vector<16x128xbf16>,
    return
  }
  func.func @transform_0(%arg0: i32) -> (i32, i32) {
    %c0_i32 = arith.constant 0 : i32
    %c0_i32_0 = arith.constant 0 : i32
    return %arg0, %c0_i32 : i32, i32
  }
  func.func @transform_1(%arg0: i32) -> (i32, i32) {
    %c0_i32 = arith.constant 0 : i32
    %c0_i32_0 = arith.constant 0 : i32
    %c0_i32_1 = arith.constant 0 : i32
    return %c0_i32, %c0_i32_0 : i32, i32
  }
  func.func @transform_2(%arg0: i32) -> (i32, i32) {
    %c0_i32 = arith.constant 0 : i32
    %c0_i32_0 = arith.constant 0 : i32
    %c0_i32_1 = arith.constant 0 : i32
    return %c0_i32, %c0_i32_0 : i32, i32
  }
  func.func @transform_3(%arg0: i32) -> (i32, i32) {
    %c0_i32 = arith.constant 0 : i32
    %c0_i32_0 = arith.constant 0 : i32
    %c0_i32_1 = arith.constant 0 : i32
    return %c0_i32, %c0_i32_0 : i32, i32
  }
  func.func @transform_4(%arg0: i32) -> (i32, i32) {
    %c0_i32 = arith.constant 0 : i32
    %c0_i32_0 = arith.constant 0 : i32
    %c0_i32_1 = arith.constant 0 : i32
    return %c0_i32, %c0_i32_0 : i32, i32
  }
  func.func @transform_5(%arg0: i32) -> (i32, i32) {
    %c0_i32 = arith.constant 0 : i32
    %c0_i32_0 = arith.constant 0 : i32
    %c0_i32_1 = arith.constant 0 : i32
    return %c0_i32, %c0_i32_0 : i32, i32
  }
  func.func @transform_6(%arg0: i32) -> (i32, i32) {
    %c0_i32 = arith.constant 0 : i32
    %c0_i32_0 = arith.constant 0 : i32
    %c0_i32_1 = arith.constant 0 : i32
    return %c0_i32, %c0_i32_0 : i32, i32
  }
  func.func @transform_7(%arg0: i32) -> (i32, i32) {
    %c0_i32 = arith.constant 0 : i32
    %c0_i32_0 = arith.constant 0 : i32
    %c0_i32_1 = arith.constant 0 : i32
    return %c0_i32, %c0_i32_0 : i32, i32
  }
  func.func @transform_8(%arg0: i32) -> (i32, i32) {
    %c0_i32 = arith.constant 0 : i32
    %c0_i32_0 = arith.constant 0 : i32
    %c0_i32_1 = arith.constant 0 : i32
    return %c0_i32, %c0_i32_0 : i32, i32
  }
  func.func @transform_9(%arg0: i32) -> (i32, i32) {
    %c0_i32 = arith.constant 0 : i32
    %c0_i32_0 = arith.constant 0 : i32
    return %arg0, %c0_i32 : i32, i32
  }
}

module attributes {stable_mosaic.version = 11 : i64} {
  func.func @qstate_kernel(%arg0: i32, %arg1: memref<16x32xbf16, #tpu.memory_space<vmem>>, %arg2: memref<32x512xbf16, #tpu.memory_space<vmem>>, %arg3: memref<1x512xf32, #tpu.memory_space<vmem>>, %arg4: memref<512x384xbf16, #tpu.memory_space<vmem>>, %arg5: memref<1x384xf32, #tpu.memory_space<vmem>>, %arg6: memref<384x384xbf16, #tpu.memory_space<vmem>>, %arg7: memref<1x384xf32, #tpu.memory_space<vmem>>, %arg8: memref<384x128xbf16, #tpu.memory_space<vmem>>, %arg9: memref<1x128xf32, #tpu.memory_space<vmem>>, %arg10: memref<16x128xbf16, #tpu.memory_space<vmem>>) attributes {dimension_semantics = [#tpu.dimension_semantics<parallel>], iteration_bounds = array<i64: 1>, scalar_prefetch = 0 : i64, scratch_operands = 0 : i64, tpu.core_type = #tpu.core_type<tc>, window_params = [{transform_indices = @transform_0, window_bounds = array<i64: 16, 32>}, {pipeline_mode = #tpu.pipeline_mode<synchronous>, transform_indices = @transform_1, window_bounds = array<i64: 32, 512>}, {pipeline_mode = #tpu.pipeline_mode<synchronous>, transform_indices = @transform_2, window_bounds = array<i64: 1, 512>}, {pipeline_mode = #tpu.pipeline_mode<synchronous>, transform_indices = @transform_3, window_bounds = array<i64: 512, 384>}, {pipeline_mode = #tpu.pipeline_mode<synchronous>, transform_indices = @transform_4, window_bounds = array<i64: 1, 384>}, {pipeline_mode = #tpu.pipeline_mode<synchronous>, transform_indices = @transform_5, window_bounds = array<i64: 384, 384>}, {pipeline_mode = #tpu.pipeline_mode<synchronous>, transform_indices = @transform_6, window_bounds = array<i64: 1, 384>}, {pipeline_mode = #tpu.pipeline_mode<synchronous>, transform_indices = @transform_7, window_bounds = array<i64: 384, 128>}, {pipeline_mode = #tpu.pipeline_mode<synchronous>, transform_indices = @transform_8, window_bounds = array<i64: 1, 128>}, {transform_indices = @transform_9, window_bounds = array<i64: 16, 128>}]} {
    %c0 = arith.constant 0 : index
    %c0_0 = arith.constant 0 : index
    %0 = vector.load %arg1[%c0, %c0_0] : memref<16x32xbf16, #tpu.memory_space<vmem>>, vector<16x32xbf16>
    %c0_1 = arith.constant 0 : index
    %c0_2 = arith.constant 0 : index
    %1 = vector.load %arg2[%c0_1, %c0_2] : memref<32x512xbf16, #tpu.memory_space<vmem>>, vector<32x512xbf16>
    %cst = arith.constant dense<0.000000e+00> : vector<16x512xf32>
    %2 = tpu.matmul %0, %1, %cst {dimension_numbers = #tpu.dot_dimension_numbers<[1], [0], [0], [1], [0, 0, 1, 1], [], []>} : vector<16x32xbf16>, vector<32x512xbf16>, vector<16x512xf32> -> vector<16x512xf32>
    %c0_3 = arith.constant 0 : index
    %c0_4 = arith.constant 0 : index
    %3 = vector.load %arg3[%c0_3, %c0_4] : memref<1x512xf32, #tpu.memory_space<vmem>>, vector<1x512xf32>
    %4 = vector.broadcast %3 : vector<1x512xf32> to vector<16x512xf32>
    %5 = arith.addf %2, %4 : vector<16x512xf32>
    %cst_5 = arith.constant 0.000000e+00 : f32
    %6 = vector.broadcast %cst_5 : f32 to vector<16x512xf32>
    %7 = arith.maximumf %5, %6 : vector<16x512xf32>
    %8 = arith.truncf %7 : vector<16x512xf32> to vector<16x512xbf16>
    %c0_6 = arith.constant 0 : index
    %c0_7 = arith.constant 0 : index
    %9 = vector.load %arg4[%c0_6, %c0_7] : memref<512x384xbf16, #tpu.memory_space<vmem>>, vector<512x384xbf16>
    %cst_8 = arith.constant dense<0.000000e+00> : vector<16x384xf32>
    %10 = tpu.matmul %8, %9, %cst_8 {dimension_numbers = #tpu.dot_dimension_numbers<[1], [0], [0], [1], [0, 0, 1, 1], [], []>} : vector<16x512xbf16>, vector<512x384xbf16>, vector<16x384xf32> -> vector<16x384xf32>
    %c0_9 = arith.constant 0 : index
    %c0_10 = arith.constant 0 : index
    %11 = vector.load %arg5[%c0_9, %c0_10] : memref<1x384xf32, #tpu.memory_space<vmem>>, vector<1x384xf32>
    %12 = vector.broadcast %11 : vector<1x384xf32> to vector<16x384xf32>
    %13 = arith.addf %10, %12 : vector<16x384xf32>
    %cst_11 = arith.constant 0.000000e+00 : f32
    %14 = vector.broadcast %cst_11 : f32 to vector<16x384xf32>
    %15 = arith.maximumf %13, %14 : vector<16x384xf32>
    %16 = arith.truncf %15 : vector<16x384xf32> to vector<16x384xbf16>
    %c0_12 = arith.constant 0 : index
    %c0_13 = arith.constant 0 : index
    %17 = vector.load %arg6[%c0_12, %c0_13] : memref<384x384xbf16, #tpu.memory_space<vmem>>, vector<384x384xbf16>
    %cst_14 = arith.constant dense<0.000000e+00> : vector<16x384xf32>
    %18 = tpu.matmul %16, %17, %cst_14 {dimension_numbers = #tpu.dot_dimension_numbers<[1], [0], [0], [1], [0, 0, 1, 1], [], []>} : vector<16x384xbf16>, vector<384x384xbf16>, vector<16x384xf32> -> vector<16x384xf32>
    %c0_15 = arith.constant 0 : index
    %c0_16 = arith.constant 0 : index
    %19 = vector.load %arg7[%c0_15, %c0_16] : memref<1x384xf32, #tpu.memory_space<vmem>>, vector<1x384xf32>
    %20 = vector.broadcast %19 : vector<1x384xf32> to vector<16x384xf32>
    %21 = arith.addf %18, %20 : vector<16x384xf32>
    %cst_17 = arith.constant 0.000000e+00 : f32
    %22 = vector.broadcast %cst_17 : f32 to vector<16x384xf32>
    %23 = arith.maximumf %21, %22 : vector<16x384xf32>
    %24 = arith.truncf %23 : vector<16x384xf32> to vector<16x384xbf16>
    %c0_18 = arith.constant 0 : index
    %c0_19 = arith.constant 0 : index
    %25 = vector.load %arg8[%c0_18, %c0_19] : memref<384x128xbf16, #tpu.memory_space<vmem>>, vector<384x128xbf16>
    %cst_20 = arith.constant dense<0.000000e+00> : vector<16x128xf32>
    %26 = tpu.matmul %24, %25, %cst_20 {dimension_numbers = #tpu.dot_dimension_numbers<[1], [0], [0], [1], [0, 0, 1, 1], [], []>} : vector<16x384xbf16>, vector<384x128xbf16>, vector<16x128xf32> -> vector<16x128xf32>
    %c0_21 = arith.constant 0 : index
    %c0_22 = arith.constant 0 : index
    %27 = vector.load %arg9[%c0_21, %c0_22] : memref<1x128xf32, #tpu.memory_space<vmem>>, vector<1x128xf32>
    %28 = vector.broadcast %27 : vector<1x128xf32> to vector<16x128xf32>
    %29 = arith.addf %26, %28 : vector<16x128xf32>
    %30 = arith.truncf %29 : vector<16x128xf32> to vector<16x128xbf16>
    %c0_23 = arith.constant 0 : index
    %c0_24 = arith.constant 0 : index
    %31 = vector.load %arg10[%c0_23, %c0_24] : memref<16x128xbf16, #tpu.memory_space<vmem>>, vector<16x128xbf16>
    tpu.vector_store %arg10[%c0_23, %c0_24], %30 {strides = array<i32>} : memref<16x128xbf16, #tpu.memory_space<vmem>>, vector<16x128xbf16>,
    return
  }
  func.func @transform_0(%arg0: i32) -> (i32, i32) {
    %c0_i32 = arith.constant 0 : i32
    %c0_i32_0 = arith.constant 0 : i32
    return %arg0, %c0_i32 : i32, i32
  }
  func.func @transform_1(%arg0: i32) -> (i32, i32) {
    %c0_i32 = arith.constant 0 : i32
    %c0_i32_0 = arith.constant 0 : i32
    %c0_i32_1 = arith.constant 0 : i32
    return %c0_i32, %c0_i32_0 : i32, i32
  }
  func.func @transform_2(%arg0: i32) -> (i32, i32) {
    %c0_i32 = arith.constant 0 : i32
    %c0_i32_0 = arith.constant 0 : i32
    %c0_i32_1 = arith.constant 0 : i32
    return %c0_i32, %c0_i32_0 : i32, i32
  }
  func.func @transform_3(%arg0: i32) -> (i32, i32) {
    %c0_i32 = arith.constant 0 : i32
    %c0_i32_0 = arith.constant 0 : i32
    %c0_i32_1 = arith.constant 0 : i32
    return %c0_i32, %c0_i32_0 : i32, i32
  }
  func.func @transform_4(%arg0: i32) -> (i32, i32) {
    %c0_i32 = arith.constant 0 : i32
    %c0_i32_0 = arith.constant 0 : i32
    %c0_i32_1 = arith.constant 0 : i32
    return %c0_i32, %c0_i32_0 : i32, i32
  }
  func.func @transform_5(%arg0: i32) -> (i32, i32) {
    %c0_i32 = arith.constant 0 : i32
    %c0_i32_0 = arith.constant 0 : i32
    %c0_i32_1 = arith.constant 0 : i32
    return %c0_i32, %c0_i32_0 : i32, i32
  }
  func.func @transform_6(%arg0: i32) -> (i32, i32) {
    %c0_i32 = arith.constant 0 : i32
    %c0_i32_0 = arith.constant 0 : i32
    %c0_i32_1 = arith.constant 0 : i32
    return %c0_i32, %c0_i32_0 : i32, i32
  }
  func.func @transform_7(%arg0: i32) -> (i32, i32) {
    %c0_i32 = arith.constant 0 : i32
    %c0_i32_0 = arith.constant 0 : i32
    %c0_i32_1 = arith.constant 0 : i32
    return %c0_i32, %c0_i32_0 : i32, i32
  }
  func.func @transform_8(%arg0: i32) -> (i32, i32) {
    %c0_i32 = arith.constant 0 : i32
    %c0_i32_0 = arith.constant 0 : i32
    %c0_i32_1 = arith.constant 0 : i32
    return %c0_i32, %c0_i32_0 : i32, i32
  }
  func.func @transform_9(%arg0: i32) -> (i32, i32) {
    %c0_i32 = arith.constant 0 : i32
    %c0_i32_0 = arith.constant 0 : i32
    return %arg0, %c0_i32 : i32, i32
  }
}

</mosaic_0001>

<llo_original>
// kernel: tpu_custom_call.1
$region0: #{tpu_custom_call.1}
  #allocation0 [shape = 'u32[]', space=smem, size = 0x4, offset = 0x4, fixed_abs, tag = 'smem constant byte address 0x4 - core index']
  #allocation1 [shape = 'u32[144,128]{1,0:T(1,128)}', space=vmem, size = 0x12000, scoped, tag = 'internal scratch']
  %s0 = inlined_call_operand.hbm [shape: bf16[16,32], index: 0, kind: input, shape index: {}]
  %s1 = inlined_call_operand.hbm [shape: bf16[32,512], index: 1, kind: input, shape index: {}]
  %s2 = inlined_call_operand.vmem [shape: f32[1,512], index: 2, kind: input, shape index: {}]
  %s3 = inlined_call_operand.hbm [shape: bf16[512,384], index: 3, kind: input, shape index: {}]
  %s4 = inlined_call_operand.vmem [shape: f32[1,384], index: 4, kind: input, shape index: {}]
  %s5 = inlined_call_operand.hbm [shape: bf16[384,384], index: 5, kind: input, shape index: {}]
  %s6 = inlined_call_operand.vmem [shape: f32[1,384], index: 6, kind: input, shape index: {}]
  %s7 = inlined_call_operand.hbm [shape: bf16[384,128], index: 7, kind: input, shape index: {}]
  %s8 = inlined_call_operand.vmem [shape: f32[1,128], index: 8, kind: input, shape index: {}]
  %s9 = inlined_call_operand.hbm [shape: bf16[16,128], index: 9, kind: output, shape index: {}]
  %s10 = sld [smem:[#allocation0]]
  $region66: #{tpu_custom_call.1} parent=0
    _
  %s12 = ssub.s32 1, %s10
  %s13 = scalar_select 0, %s12, %s10
  $region1: #{tpu_custom_call.1} parent=0
    #allocation2 [shape = 'u8[4096]{0}', space=vmem, size = 0x1000, scoped, tag = 'input window, operand 0, single buffered']
    #allocation3 [shape = 's32[1]{0}', space=sflag, size = 0x4, scoped, tag = 'scoped memory for tpu_custom_call.1']
    #allocation4 [shape = 's32[1]{0}', space=sflag, size = 0x4, scoped, tag = 'scoped memory for tpu_custom_call.1']
    #allocation5 [shape = 'u8[32768]{0}', space=vmem, size = 0x8000, scoped, tag = 'input window, operand 1, single buffered']
    #allocation6 [shape = 's32[1]{0}', space=sflag, size = 0x4, scoped, tag = 'scoped memory for tpu_custom_call.1']
    #allocation7 [shape = 'u8[393216]{0}', space=vmem, size = 0x60000, scoped, tag = 'input window, operand 3, single buffered']
    #allocation8 [shape = 'u8[294912]{0}', space=vmem, size = 0x48000, scoped, tag = 'input window, operand 5, single buffered']
    #allocation9 [shape = 's32[1]{0}', space=sflag, size = 0x4, scoped, tag = 'scoped memory for tpu_custom_call.1']
    #allocation10 [shape = 'u8[98304]{0}', space=vmem, size = 0x18000, scoped, tag = 'input window, operand 7, single buffered']
    #allocation11 [shape = 'u8[4096]{0}', space=vmem, size = 0x1000, scoped, tag = 'output window, operand 0, single buffered']
    %14 = vsyncpa [#allocation3], 0
    %15 = vsyncpa [#allocation6], 0
    %16 = vsyncpa [#allocation9], 0
    %17 = vsyncpa [#allocation4], 0
    // Predicated region
    $region2: #{tpu_custom_call.1} parent=1 // pred_check
      _
    $region3: #{tpu_custom_call.1} parent=1 // pred_check_branch
      %19 = sbr.rel (0) target = $region5
    $region4: #{tpu_custom_call.1} parent=1 // pred_region
      %s21 = ssub.s32 128, 128
      %22 = vsyncadd [#allocation3], %s21
      %s23 = sshll.u32 [#allocation2], 4
      %s24 = int_to_ptr.vmem [resolvable:$true] %s23
      %29 = dma.hbm_to_vmem [thread:$0]  %s0, 128, %s24, [#allocation3], 64, 64, 4
    $region5: #{tpu_custom_call.1} parent=1 // pred_fallthru
      _
    // Predicated region
    $region6: #{tpu_custom_call.1} parent=1 // pred_check
      _
    $region7: #{tpu_custom_call.1} parent=1 // pred_check_branch
      %31 = sbr.rel (0) target = $region9
    $region8: #{tpu_custom_call.1} parent=1 // pred_region
      %s33 = ssub.s32 1024, 1024
      %34 = vsyncadd [#allocation6], %s33
      %s35 = sshll.u32 [#allocation5], 4
      %s36 = int_to_ptr.vmem [resolvable:$true] %s35
      %41 = dma.hbm_to_vmem [thread:$0]  %s1, 1024, %s36, [#allocation6], 256, 256, 16
    $region9: #{tpu_custom_call.1} parent=1 // pred_fallthru
      _
    // Predicated region
    $region10: #{tpu_custom_call.1} parent=1 // pred_check
      _
    $region11: #{tpu_custom_call.1} parent=1 // pred_check_branch
      %43 = sbr.rel (0) target = $region13
    $region12: #{tpu_custom_call.1} parent=1 // pred_region
      _
    $region13: #{tpu_custom_call.1} parent=1 // pred_fallthru
      _
    // Predicated region
    $region14: #{tpu_custom_call.1} parent=1 // pred_check
      _
    $region15: #{tpu_custom_call.1} parent=1 // pred_check_branch
      %45 = sbr.rel (0) target = $region17
    $region16: #{tpu_custom_call.1} parent=1 // pred_region
      %s47 = ssub.s32 12288, 12288
      %48 = vsyncadd [#allocation6], %s47
      %s49 = sshll.u32 [#allocation7], 4
      %s50 = int_to_ptr.vmem [resolvable:$true] %s49
      %55 = dma.hbm_to_vmem [thread:$0]  %s3, 12288, %s50, [#allocation6], 192, 192, 12
    $region17: #{tpu_custom_call.1} parent=1 // pred_fallthru
      _
    // Predicated region
    $region18: #{tpu_custom_call.1} parent=1 // pred_check
      _
    $region19: #{tpu_custom_call.1} parent=1 // pred_check_branch
      %57 = sbr.rel (0) target = $region21
    $region20: #{tpu_custom_call.1} parent=1 // pred_region
      _
    $region21: #{tpu_custom_call.1} parent=1 // pred_fallthru
      _
    // Predicated region
    $region22: #{tpu_custom_call.1} parent=1 // pred_check
      _
    $region23: #{tpu_custom_call.1} parent=1 // pred_check_branch
      %59 = sbr.rel (0) target = $region25
    $region24: #{tpu_custom_call.1} parent=1 // pred_region
      %s61 = ssub.s32 9216, 9216
      %62 = vsyncadd [#allocation9], %s61
      %s63 = sshll.u32 [#allocation8], 4
      %s64 = int_to_ptr.vmem [resolvable:$true] %s63
      %69 = dma.hbm_to_vmem [thread:$0]  %s5, 9216, %s64, [#allocation9], 192, 192, 12
    $region25: #{tpu_custom_call.1} parent=1 // pred_fallthru
      _
    // Predicated region
    $region26: #{tpu_custom_call.1} parent=1 // pred_check
      _
    $region27: #{tpu_custom_call.1} parent=1 // pred_check_branch
      %71 = sbr.rel (0) target = $region29
    $region28: #{tpu_custom_call.1} parent=1 // pred_region
      _
    $region29: #{tpu_custom_call.1} parent=1 // pred_fallthru
      _
    // Predicated region
    $region30: #{tpu_custom_call.1} parent=1 // pred_check
      _
    $region31: #{tpu_custom_call.1} parent=1 // pred_check_branch
      %73 = sbr.rel (0) target = $region33
    $region32: #{tpu_custom_call.1} parent=1 // pred_region
      %s75 = ssub.s32 3072, 3072
      %76 = vsyncadd [#allocation9], %s75
      %s77 = sshll.u32 [#allocation10], 4
      %s78 = int_to_ptr.vmem [resolvable:$true] %s77
      %83 = dma.hbm_to_vmem [thread:$0]  %s7, 3072, %s78, [#allocation9], 64, 64, 4
    $region33: #{tpu_custom_call.1} parent=1 // pred_fallthru
      _
    // Predicated region
    $region34: #{tpu_custom_call.1} parent=1 // pred_check
      _
    $region35: #{tpu_custom_call.1} parent=1 // pred_check_branch
      %85 = sbr.rel (0) target = $region37
    $region36: #{tpu_custom_call.1} parent=1 // pred_region
      _
    $region37: #{tpu_custom_call.1} parent=1 // pred_fallthru
      _
    // Predicated region
    $region38: #{tpu_custom_call.1} parent=1 // pred_check
      _
    $region39: #{tpu_custom_call.1} parent=1 // pred_check_branch
      %87 = sbr.rel (0) target = $region41
    $region40: #{tpu_custom_call.1} parent=1 // pred_region
      %88 = dma.done [#allocation3], 128
    $region41: #{tpu_custom_call.1} parent=1 // pred_fallthru
      _
    // Predicated region
    $region42: #{tpu_custom_call.1} parent=1 // pred_check
      _
    $region43: #{tpu_custom_call.1} parent=1 // pred_check_branch
      %90 = sbr.rel (0) target = $region45
    $region44: #{tpu_custom_call.1} parent=1 // pred_region
      %91 = dma.done [#allocation6], 1024
    $region45: #{tpu_custom_call.1} parent=1 // pred_fallthru
      _
    // Predicated region
    $region46: #{tpu_custom_call.1} parent=1 // pred_check
      _
    $region47: #{tpu_custom_call.1} parent=1 // pred_check_branch
      %93 = sbr.rel (0) target = $region49
    $region48: #{tpu_custom_call.1} parent=1 // pred_region
      %94 = dma.done [#allocation6], 12288
    $region49: #{tpu_custom_call.1} parent=1 // pred_fallthru
      _
    // Predicated region
    $region50: #{tpu_custom_call.1} parent=1 // pred_check
      _
    $region51: #{tpu_custom_call.1} parent=1 // pred_check_branch
      %96 = sbr.rel (0) target = $region53
    $region52: #{tpu_custom_call.1} parent=1 // pred_region
      %97 = dma.done [#allocation9], 9216
    $region53: #{tpu_custom_call.1} parent=1 // pred_fallthru
      _
    // Predicated region
    $region54: #{tpu_custom_call.1} parent=1 // pred_check
      _
    $region55: #{tpu_custom_call.1} parent=1 // pred_check_branch
      %99 = sbr.rel (0) target = $region57
    $region56: #{tpu_custom_call.1} parent=1 // pred_region
      %100 = dma.done [#allocation9], 3072
    $region57: #{tpu_custom_call.1} parent=1 // pred_fallthru
      _
    %v102 = vld [vmem:[#allocation2] sm:$0xf]
    %v103 = vld [vmem:[#allocation2 + $0x4] sm:$0xf]
    %v104 = vld [vmem:[#allocation5] sm:$0xff]
    %v105 = vld [vmem:[#allocation5 + $0x8] sm:$0xff]
    %v106 = vld [vmem:[#allocation5 + $0x10] sm:$0xff]
    %v107 = vld [vmem:[#allocation5 + $0x18] sm:$0xff]
    %v108 = vld [vmem:[#allocation5 + $0x20] sm:$0xff]
    %v109 = vld [vmem:[#allocation5 + $0x28] sm:$0xff]
    %v110 = vld [vmem:[#allocation5 + $0x30] sm:$0xff]
    %v111 = vld [vmem:[#allocation5 + $0x38] sm:$0xff]
    %v112 = vld [vmem:[%s2] sm:$0xf]
    %v114 = vlaneseq
    %v115 = vshrl.u32 %v114, 7
    %v116 = vsub.s32 0, %v115
    %v117 = vrot.slane %v112, %v116
    %v118 = vlaneseq
    %v119 = vshrl.u32 %v118, 7
    %v120 = vsub.s32 1, %v119
    %v121 = vrot.slane %v112, %v120
    %v122 = vlaneseq
    %v123 = vshrl.u32 %v122, 7
    %v124 = vsub.s32 2, %v123
    %v125 = vrot.slane %v112, %v124
    %v126 = vlaneseq
    %v127 = vshrl.u32 %v126, 7
    %v128 = vsub.s32 3, %v127
    %v129 = vrot.slane %v112, %v128
    %v136 = vunpack.c.l.b16 %v102
    %v137 = vunpack.c.l.b16 %v103
    %v138 = vpack.c.b16 %v137, %v136
    %v147 = vunpack.c.l.b16 %v104
    %v148 = vunpack.c.h.b16 %v104
    %v149 = vunpack.c.l.b16 %v105
    %v150 = vunpack.c.h.b16 %v105
    %v151 = vunpack.c.l.b16 %v106
    %v152 = vunpack.c.h.b16 %v106
    %v153 = vunpack.c.l.b16 %v107
    %v154 = vunpack.c.h.b16 %v107
    %v155 = vunpack.c.l.b16 %v108
    %v156 = vunpack.c.h.b16 %v108
    %v157 = vunpack.c.l.b16 %v109
    %v158 = vunpack.c.h.b16 %v109
    %v159 = vunpack.c.l.b16 %v110
    %v160 = vunpack.c.h.b16 %v110
    %v161 = vunpack.c.l.b16 %v111
    %v162 = vunpack.c.h.b16 %v111
    %v163 = vpack.c.b16 %v151, %v147
    %v164 = vpack.c.b16 %v152, %v148
    %v165 = vpack.c.b16 %v153, %v149
    %v166 = vpack.c.b16 %v154, %v150
    %v167 = vpack.c.b16 %v159, %v155
    %v168 = vpack.c.b16 %v160, %v156
    %v169 = vpack.c.b16 %v161, %v157
    %v170 = vpack.c.b16 %v162, %v158
    %vm179 = vcmask 261120
    %v181 = vsel %vm179, %v138, 0
    %183 = vmatprep.subr.bf16.mxu0 %v164
    %184 = vmatpush1.bf16.msra.mxu0 %v163
    %185 = vmatprep.subr.bf16.mxu0 %v168
    %186 = vmatpush1.bf16.msra.mxu0 %v167
    %187 = vmatprep.subr.bf16.mxu0 0
    %188 = vmatpush1.bf16.msra.mxu0 0
    %189 = vmatprep.subr.bf16.mxu0 0
    %190 = vmatpush1.bf16.msra.mxu0 0
    %191 = vmatprep.subr.bf16.mxu0 0
    %192 = vmatpush1.bf16.msra.mxu0 0
    %193 = vmatprep.subr.bf16.mxu0 0
    %194 = vmatpush1.bf16.msra.mxu0 0
    %195 = vmatprep.subr.bf16.mxu0 0
    %196 = vmatpush1.bf16.msra.mxu0 0
    %197 = vmatprep.subr.bf16.mxu0 0
    %198 = vmatpush1.bf16.msra.mxu0 0
    %199 = vmatprep.subr.bf16.mxu0 0
    %200 = vmatpush1.bf16.msra.mxu0 0
    %201 = vmatprep.subr.bf16.mxu0 0
    %202 = vmatpush1.bf16.msra.mxu0 0
    %203 = vmatprep.subr.bf16.mxu0 0
    %204 = vmatpush1.bf16.msra.mxu0 0
    %205 = vmatprep.subr.bf16.mxu0 0
    %206 = vmatpush1.bf16.msra.mxu0 0
    %207 = vmatprep.subr.bf16.mxu0 0
    %208 = vmatpush1.bf16.msra.mxu0 0
    %209 = vmatprep.subr.bf16.mxu0 0
    %210 = vmatpush1.bf16.msra.mxu0 0
    %211 = vmatprep.subr.bf16.mxu0 0
    %212 = vmatpush1.bf16.msra.mxu0 0
    %213 = vmatprep.subr.bf16.mxu0 0
    %214 = vmatpush1.bf16.msra.mxu0 0
    %215 = vmatprep.mubr.bf16.mxu0 0
    %216 = vmatmul.mubr.bf16.gmra.mrb[0].mxu0 %v181
    %v217 = vpop.f32.mrb[0].mxu0
    %v218 = vadd.f32 %v117, %v217
    %v219 = vpop.f32.mrb[0].mxu0
    %v220 = vadd.f32 %v121, %v219
    %v221 = vpop.f32.mrb[0].mxu0
    %v222 = vadd.f32 %v117, %v221
    %v223 = vpop.f32.mrb[0].mxu0
    %v224 = vadd.f32 %v121, %v223
    %225 = vdwg.mxu0
    %226 = vmatprep.subr.bf16.mxu0 %v166
    %227 = vmatpush1.bf16.msra.mxu0 %v165
    %228 = vmatprep.subr.bf16.mxu0 %v170
    %229 = vmatpush1.bf16.msra.mxu0 %v169
    %230 = vmatprep.subr.bf16.mxu0 0
    %231 = vmatpush1.bf16.msra.mxu0 0
    %232 = vmatprep.subr.bf16.mxu0 0
    %233 = vmatpush1.bf16.msra.mxu0 0
    %234 = vmatprep.subr.bf16.mxu0 0
    %235 = vmatpush1.bf16.msra.mxu0 0
    %236 = vmatprep.subr.bf16.mxu0 0
    %237 = vmatpush1.bf16.msra.mxu0 0
    %238 = vmatprep.subr.bf16.mxu0 0
    %239 = vmatpush1.bf16.msra.mxu0 0
    %240 = vmatprep.subr.bf16.mxu0 0
    %241 = vmatpush1.bf16.msra.mxu0 0
    %242 = vmatprep.subr.bf16.mxu0 0
    %243 = vmatpush1.bf16.msra.mxu0 0
    %244 = vmatprep.subr.bf16.mxu0 0
    %245 = vmatpush1.bf16.msra.mxu0 0
    %246 = vmatprep.subr.bf16.mxu0 0
    %247 = vmatpush1.bf16.msra.mxu0 0
    %248 = vmatprep.subr.bf16.mxu0 0
    %249 = vmatpush1.bf16.msra.mxu0 0
    %250 = vmatprep.subr.bf16.mxu0 0
    %251 = vmatpush1.bf16.msra.mxu0 0
    %252 = vmatprep.subr.bf16.mxu0 0
    %253 = vmatpush1.bf16.msra.mxu0 0
    %254 = vmatprep.subr.bf16.mxu0 0
    %255 = vmatpush1.bf16.msra.mxu0 0
    %256 = vmatprep.subr.bf16.mxu0 0
    %257 = vmatpush1.bf16.msra.mxu0 0
    %258 = vmatprep.mubr.bf16.mxu0 0
    %259 = vmatmul.mubr.bf16.gmra.mrb[0].mxu0 %v181
    %v260 = vpop.f32.mrb[0].mxu0
    %v261 = vadd.f32 %v125, %v260
    %v262 = vpop.f32.mrb[0].mxu0
    %v263 = vadd.f32 %v129, %v262
    %v264 = vpop.f32.mrb[0].mxu0
    %v265 = vadd.f32 %v125, %v264
    %v266 = vpop.f32.mrb[0].mxu0
    %v267 = vadd.f32 %v129, %v266
    %268 = vdwg.mxu0
    %v269 = vmax.f32 %v218, 0.0
    %v270 = vmax.f32 %v220, 0.0
    %v271 = vmax.f32 %v261, 0.0
    %v272 = vmax.f32 %v263, 0.0
    %v273 = vmax.f32 %v222, 0.0
    %v274 = vmax.f32 %v224, 0.0
    %v275 = vmax.f32 %v265, 0.0
    %v276 = vmax.f32 %v267, 0.0
    %v277 = vpack.c.bf16 %v273, %v269
    %v278 = vpack.c.bf16 %v274, %v270
    %v279 = vpack.c.bf16 %v275, %v271
    %v280 = vpack.c.bf16 %v276, %v272
    %v281 = vld [vmem:[#allocation7] sm:$0xff]
    %v282 = vld [vmem:[#allocation7 + $0x8] sm:$0xf]
    %v283 = vld [vmem:[#allocation7 + $0xc] sm:$0xff]
    %v284 = vld [vmem:[#allocation7 + $0x14] sm:$0xf]
    %v285 = vld [vmem:[#allocation7 + $0x18] sm:$0xff]
    %v286 = vld [vmem:[#allocation7 + $0x20] sm:$0xf]
    %v287 = vld [vmem:[#allocation7 + $0x24] sm:$0xff]
    %v288 = vld [vmem:[#allocation7 + $0x2c] sm:$0xf]
    %v289 = vld [vmem:[#allocation7 + $0x30] sm:$0xff]
    %v290 = vld [vmem:[#allocation7 + $0x38] sm:$0xf]
    %v291 = vld [vmem:[#allocation7 + $0x3c] sm:$0xff]
    %v292 = vld [vmem:[#allocation7 + $0x44] sm:$0xf]
    %v293 = vld [vmem:[#allocation7 + $0x48] sm:$0xff]
    %v294 = vld [vmem:[#allocation7 + $0x50] sm:$0xf]
    %v295 = vld [vmem:[#allocation7 + $0x54] sm:$0xff]
    %v296 = vld [vmem:[#allocation7 + $0x5c] sm:$0xf]
    %v297 = vld [vmem:[#allocation7 + $0x60] sm:$0xff]
    %v298 = vld [vmem:[#allocation7 + $0x68] sm:$0xf]
    %v299 = vld [vmem:[#allocation7 + $0x6c] sm:$0xff]
    %v300 = vld [vmem:[#allocation7 + $0x74] sm:$0xf]
    %v301 = vld [vmem:[#allocation7 + $0x78] sm:$0xff]
    %v302 = vld [vmem:[#allocation7 + $0x80] sm:$0xf]
    %v303 = vld [vmem:[#allocation7 + $0x84] sm:$0xff]
    %v304 = vld [vmem:[#allocation7 + $0x8c] sm:$0xf]
    %v305 = vld [vmem:[#allocation7 + $0x90] sm:$0xff]
    %v306 = vld [vmem:[#allocation7 + $0x98] sm:$0xf]
    %v307 = vld [vmem:[#allocation7 + $0x9c] sm:$0xff]
    %v308 = vld [vmem:[#allocation7 + $0xa4] sm:$0xf]
    %v309 = vld [vmem:[#allocation7 + $0xa8] sm:$0xff]
    %v310 = vld [vmem:[#allocation7 + $0xb0] sm:$0xf]
    %v311 = vld [vmem:[#allocation7 + $0xb4] sm:$0xff]
    %v312 = vld [vmem:[#allocation7 + $0xbc] sm:$0xf]
    %v313 = vld [vmem:[#allocation7 + $0xc0] sm:$0xff]
    %v314 = vld [vmem:[#allocation7 + $0xc8] sm:$0xf]
    %v315 = vld [vmem:[#allocation7 + $0xcc] sm:$0xff]
    %v316 = vld [vmem:[#allocation7 + $0xd4] sm:$0xf]
    %v317 = vld [vmem:[#allocation7 + $0xd8] sm:$0xff]
    %v318 = vld [vmem:[#allocation7 + $0xe0] sm:$0xf]
    %v319 = vld [vmem:[#allocation7 + $0xe4] sm:$0xff]
    %v320 = vld [vmem:[#allocation7 + $0xec] sm:$0xf]
    %v321 = vld [vmem:[#allocation7 + $0xf0] sm:$0xff]
    %v322 = vld [vmem:[#allocation7 + $0xf8] sm:$0xf]
    %v323 = vld [vmem:[#allocation7 + $0xfc] sm:$0xff]
    %v324 = vld [vmem:[#allocation7 + $0x104] sm:$0xf]
    %v325 = vld [vmem:[#allocation7 + $0x108] sm:$0xff]
    %v326 = vld [vmem:[#allocation7 + $0x110] sm:$0xf]
    %v327 = vld [vmem:[#allocation7 + $0x114] sm:$0xff]
    %v328 = vld [vmem:[#allocation7 + $0x11c] sm:$0xf]
    %v329 = vld [vmem:[#allocation7 + $0x120] sm:$0xff]
    %v330 = vld [vmem:[#allocation7 + $0x128] sm:$0xf]
    %v331 = vld [vmem:[#allocation7 + $0x12c] sm:$0xff]
    %v332 = vld [vmem:[#allocation7 + $0x134] sm:$0xf]
    %v333 = vld [vmem:[#allocation7 + $0x138] sm:$0xff]
    %v334 = vld [vmem:[#allocation7 + $0x140] sm:$0xf]
    %v335 = vld [vmem:[#allocation7 + $0x144] sm:$0xff]
    %v336 = vld [vmem:[#allocation7 + $0x14c] sm:$0xf]
    %v337 = vld [vmem:[#allocation7 + $0x150] sm:$0xff]
    %v338 = vld [vmem:[#allocation7 + $0x158] sm:$0xf]
    %v339 = vld [vmem:[#allocation7 + $0x15c] sm:$0xff]
    %v340 = vld [vmem:[#allocation7 + $0x164] sm:$0xf]
    %v341 = vld [vmem:[#allocation7 + $0x168] sm:$0xff]
    %v342 = vld [vmem:[#allocation7 + $0x170] sm:$0xf]
    %v343 = vld [vmem:[#allocation7 + $0x174] sm:$0xff]
    %v344 = vld [vmem:[#allocation7 + $0x17c] sm:$0xf]
    %v345 = vld [vmem:[#allocation7 + $0x180] sm:$0xff]
    %v346 = vld [vmem:[#allocation7 + $0x188] sm:$0xf]
    %v347 = vld [vmem:[#allocation7 + $0x18c] sm:$0xff]
    %v348 = vld [vmem:[#allocation7 + $0x194] sm:$0xf]
    %v349 = vld [vmem:[#allocation7 + $0x198] sm:$0xff]
    %v350 = vld [vmem:[#allocation7 + $0x1a0] sm:$0xf]
    %v351 = vld [vmem:[#allocation7 + $0x1a4] sm:$0xff]
    %v352 = vld [vmem:[#allocation7 + $0x1ac] sm:$0xf]
    %v353 = vld [vmem:[#allocation7 + $0x1b0] sm:$0xff]
    %v354 = vld [vmem:[#allocation7 + $0x1b8] sm:$0xf]
    %v355 = vld [vmem:[#allocation7 + $0x1bc] sm:$0xff]
    %v356 = vld [vmem:[#allocation7 + $0x1c4] sm:$0xf]
    %v357 = vld [vmem:[#allocation7 + $0x1c8] sm:$0xff]
    %v358 = vld [vmem:[#allocation7 + $0x1d0] sm:$0xf]
    %v359 = vld [vmem:[#allocation7 + $0x1d4] sm:$0xff]
    %v360 = vld [vmem:[#allocation7 + $0x1dc] sm:$0xf]
    %v361 = vld [vmem:[#allocation7 + $0x1e0] sm:$0xff]
    %v362 = vld [vmem:[#allocation7 + $0x1e8] sm:$0xf]
    %v363 = vld [vmem:[#allocation7 + $0x1ec] sm:$0xff]
    %v364 = vld [vmem:[#allocation7 + $0x1f4] sm:$0xf]
    %v365 = vld [vmem:[#allocation7 + $0x1f8] sm:$0xff]
    %v366 = vld [vmem:[#allocation7 + $0x200] sm:$0xf]
    %v367 = vld [vmem:[#allocation7 + $0x204] sm:$0xff]
    %v368 = vld [vmem:[#allocation7 + $0x20c] sm:$0xf]
    %v369 = vld [vmem:[#allocation7 + $0x210] sm:$0xff]
    %v370 = vld [vmem:[#allocation7 + $0x218] sm:$0xf]
    %v371 = vld [vmem:[#allocation7 + $0x21c] sm:$0xff]
    %v372 = vld [vmem:[#allocation7 + $0x224] sm:$0xf]
    %v373 = vld [vmem:[#allocation7 + $0x228] sm:$0xff]
    %v374 = vld [vmem:[#allocation7 + $0x230] sm:$0xf]
    %v375 = vld [vmem:[#allocation7 + $0x234] sm:$0xff]
    %v376 = vld [vmem:[#allocation7 + $0x23c] sm:$0xf]
    %v377 = vld [vmem:[#allocation7 + $0x240] sm:$0xff]
    %v378 = vld [vmem:[#allocation7 + $0x248] sm:$0xf]
    %v379 = vld [vmem:[#allocation7 + $0x24c] sm:$0xff]
    %v380 = vld [vmem:[#allocation7 + $0x254] sm:$0xf]
    %v381 = vld [vmem:[#allocation7 + $0x258] sm:$0xff]
    %v382 = vld [vmem:[#allocation7 + $0x260] sm:$0xf]
    %v383 = vld [vmem:[#allocation7 + $0x264] sm:$0xff]
    %v384 = vld [vmem:[#allocation7 + $0x26c] sm:$0xf]
    %v385 = vld [vmem:[#allocation7 + $0x270] sm:$0xff]
    %v386 = vld [vmem:[#allocation7 + $0x278] sm:$0xf]
    %v387 = vld [vmem:[#allocation7 + $0x27c] sm:$0xff]
    %v388 = vld [vmem:[#allocation7 + $0x284] sm:$0xf]
    %v389 = vld [vmem:[#allocation7 + $0x288] sm:$0xff]
    %v390 = vld [vmem:[#allocation7 + $0x290] sm:$0xf]
    %v391 = vld [vmem:[#allocation7 + $0x294] sm:$0xff]
    %v392 = vld [vmem:[#allocation7 + $0x29c] sm:$0xf]
    %v393 = vld [vmem:[#allocation7 + $0x2a0] sm:$0xff]
    %v394 = vld [vmem:[#allocation7 + $0x2a8] sm:$0xf]
    %v395 = vld [vmem:[#allocation7 + $0x2ac] sm:$0xff]
    %v396 = vld [vmem:[#allocation7 + $0x2b4] sm:$0xf]
    %v397 = vld [vmem:[#allocation7 + $0x2b8] sm:$0xff]
    %v398 = vld [vmem:[#allocation7 + $0x2c0] sm:$0xf]
    %v399 = vld [vmem:[#allocation7 + $0x2c4] sm:$0xff]
    %v400 = vld [vmem:[#allocation7 + $0x2cc] sm:$0xf]
    %v401 = vld [vmem:[#allocation7 + $0x2d0] sm:$0xff]
    %v402 = vld [vmem:[#allocation7 + $0x2d8] sm:$0xf]
    %v403 = vld [vmem:[#allocation7 + $0x2dc] sm:$0xff]
    %v404 = vld [vmem:[#allocation7 + $0x2e4] sm:$0xf]
    %v405 = vld [vmem:[#allocation7 + $0x2e8] sm:$0xff]
    %v406 = vld [vmem:[#allocation7 + $0x2f0] sm:$0xf]
    %v407 = vld [vmem:[#allocation7 + $0x2f4] sm:$0xff]
    %v408 = vld [vmem:[#allocation7 + $0x2fc] sm:$0xf]
    %v409 = vld [vmem:[%s4] sm:$0x7]
    %v411 = vlaneseq
    %v412 = vshrl.u32 %v411, 7
    %v413 = vsub.s32 0, %v412
    %v414 = vrot.slane %v409, %v413
    %v415 = vlaneseq
    %v416 = vshrl.u32 %v415, 7
    %v417 = vsub.s32 1, %v416
    %v418 = vrot.slane %v409, %v417
    %v419 = vlaneseq
    %v420 = vshrl.u32 %v419, 7
    %v421 = vsub.s32 2, %v420
    %v422 = vrot.slane %v409, %v421
    %v554 = vunpack.c.l.b16 %v281
    %v555 = vunpack.c.h.b16 %v281
    %v556 = vunpack.c.l.b16 %v282
    %v557 = vunpack.c.l.b16 %v283
    %v558 = vunpack.c.h.b16 %v283
    %v559 = vunpack.c.l.b16 %v284
    %v560 = vunpack.c.l.b16 %v285
    %v561 = vunpack.c.h.b16 %v285
    %v562 = vunpack.c.l.b16 %v286
    %v563 = vunpack.c.l.b16 %v287
    %v564 = vunpack.c.h.b16 %v287
    %v565 = vunpack.c.l.b16 %v288
    %v566 = vunpack.c.l.b16 %v289
    %v567 = vunpack.c.h.b16 %v289
    %v568 = vunpack.c.l.b16 %v290
    %v569 = vunpack.c.l.b16 %v291
    %v570 = vunpack.c.h.b16 %v291
    %v571 = vunpack.c.l.b16 %v292
    %v572 = vunpack.c.l.b16 %v293
    %v573 = vunpack.c.h.b16 %v293
    %v574 = vunpack.c.l.b16 %v294
    %v575 = vunpack.c.l.b16 %v295
    %v576 = vunpack.c.h.b16 %v295
    %v577 = vunpack.c.l.b16 %v296
    %v578 = vunpack.c.l.b16 %v297
    %v579 = vunpack.c.h.b16 %v297
    %v580 = vunpack.c.l.b16 %v298
    %v581 = vunpack.c.l.b16 %v299
    %v582 = vunpack.c.h.b16 %v299
    %v583 = vunpack.c.l.b16 %v300
    %v584 = vunpack.c.l.b16 %v301
    %v585 = vunpack.c.h.b16 %v301
    %v586 = vunpack.c.l.b16 %v302
    %v587 = vunpack.c.l.b16 %v303
    %v588 = vunpack.c.h.b16 %v303
    %v589 = vunpack.c.l.b16 %v304
    %v590 = vunpack.c.l.b16 %v305
    %v591 = vunpack.c.h.b16 %v305
    %v592 = vunpack.c.l.b16 %v306
    %v593 = vunpack.c.l.b16 %v307
    %v594 = vunpack.c.h.b16 %v307
    %v595 = vunpack.c.l.b16 %v308
    %v596 = vunpack.c.l.b16 %v309
    %v597 = vunpack.c.h.b16 %v309
    %v598 = vunpack.c.l.b16 %v310
    %v599 = vunpack.c.l.b16 %v311
    %v600 = vunpack.c.h.b16 %v311
    %v601 = vunpack.c.l.b16 %v312
    %v602 = vunpack.c.l.b16 %v313
    %v603 = vunpack.c.h.b16 %v313
    %v604 = vunpack.c.l.b16 %v314
    %v605 = vunpack.c.l.b16 %v315
    %v606 = vunpack.c.h.b16 %v315
    %v607 = vunpack.c.l.b16 %v316
    %v608 = vunpack.c.l.b16 %v317
    %v609 = vunpack.c.h.b16 %v317
    %v610 = vunpack.c.l.b16 %v318
    %v611 = vunpack.c.l.b16 %v319
    %v612 = vunpack.c.h.b16 %v319
    %v613 = vunpack.c.l.b16 %v320
    %v614 = vunpack.c.l.b16 %v321
    %v615 = vunpack.c.h.b16 %v321
    %v616 = vunpack.c.l.b16 %v322
    %v617 = vunpack.c.l.b16 %v323
    %v618 = vunpack.c.h.b16 %v323
    %v619 = vunpack.c.l.b16 %v324
    %v620 = vunpack.c.l.b16 %v325
    %v621 = vunpack.c.h.b16 %v325
    %v622 = vunpack.c.l.b16 %v326
    %v623 = vunpack.c.l.b16 %v327
    %v624 = vunpack.c.h.b16 %v327
    %v625 = vunpack.c.l.b16 %v328
    %v626 = vunpack.c.l.b16 %v329
    %v627 = vunpack.c.h.b16 %v329
    %v628 = vunpack.c.l.b16 %v330
    %v629 = vunpack.c.l.b16 %v331
    %v630 = vunpack.c.h.b16 %v331
    %v631 = vunpack.c.l.b16 %v332
    %v632 = vunpack.c.l.b16 %v333
    %v633 = vunpack.c.h.b16 %v333
    %v634 = vunpack.c.l.b16 %v334
    %v635 = vunpack.c.l.b16 %v335
    %v636 = vunpack.c.h.b16 %v335
    %v637 = vunpack.c.l.b16 %v336
    %v638 = vunpack.c.l.b16 %v337
    %v639 = vunpack.c.h.b16 %v337
    %v640 = vunpack.c.l.b16 %v338
    %v641 = vunpack.c.l.b16 %v339
    %v642 = vunpack.c.h.b16 %v339
    %v643 = vunpack.c.l.b16 %v340
    %v644 = vunpack.c.l.b16 %v341
    %v645 = vunpack.c.h.b16 %v341
    %v646 = vunpack.c.l.b16 %v342
    %v647 = vunpack.c.l.b16 %v343
    %v648 = vunpack.c.h.b16 %v343
    %v649 = vunpack.c.l.b16 %v344
    %v650 = vunpack.c.l.b16 %v345
    %v651 = vunpack.c.h.b16 %v345
    %v652 = vunpack.c.l.b16 %v346
    %v653 = vunpack.c.l.b16 %v347
    %v654 = vunpack.c.h.b16 %v347
    %v655 = vunpack.c.l.b16 %v348
    %v656 = vunpack.c.l.b16 %v349
    %v657 = vunpack.c.h.b16 %v349
    %v658 = vunpack.c.l.b16 %v350
    %v659 = vunpack.c.l.b16 %v351
    %v660 = vunpack.c.h.b16 %v351
    %v661 = vunpack.c.l.b16 %v352
    %v662 = vunpack.c.l.b16 %v353
    %v663 = vunpack.c.h.b16 %v353
    %v664 = vunpack.c.l.b16 %v354
    %v665 = vunpack.c.l.b16 %v355
    %v666 = vunpack.c.h.b16 %v355
    %v667 = vunpack.c.l.b16 %v356
    %v668 = vunpack.c.l.b16 %v357
    %v669 = vunpack.c.h.b16 %v357
    %v670 = vunpack.c.l.b16 %v358
    %v671 = vunpack.c.l.b16 %v359
    %v672 = vunpack.c.h.b16 %v359
    %v673 = vunpack.c.l.b16 %v360
    %v674 = vunpack.c.l.b16 %v361
    %v675 = vunpack.c.h.b16 %v361
    %v676 = vunpack.c.l.b16 %v362
    %v677 = vunpack.c.l.b16 %v363
    %v678 = vunpack.c.h.b16 %v363
    %v679 = vunpack.c.l.b16 %v364
    %v680 = vunpack.c.l.b16 %v365
    %v681 = vunpack.c.h.b16 %v365
    %v682 = vunpack.c.l.b16 %v366
    %v683 = vunpack.c.l.b16 %v367
    %v684 = vunpack.c.h.b16 %v367
    %v685 = vunpack.c.l.b16 %v368
    %v686 = vunpack.c.l.b16 %v369
    %v687 = vunpack.c.h.b16 %v369
    %v688 = vunpack.c.l.b16 %v370
    %v689 = vunpack.c.l.b16 %v371
    %v690 = vunpack.c.h.b16 %v371
    %v691 = vunpack.c.l.b16 %v372
    %v692 = vunpack.c.l.b16 %v373
    %v693 = vunpack.c.h.b16 %v373
    %v694 = vunpack.c.l.b16 %v374
    %v695 = vunpack.c.l.b16 %v375
    %v696 = vunpack.c.h.b16 %v375
    %v697 = vunpack.c.l.b16 %v376
    %v698 = vunpack.c.l.b16 %v377
    %v699 = vunpack.c.h.b16 %v377
    %v700 = vunpack.c.l.b16 %v378
    %v701 = vunpack.c.l.b16 %v379
    %v702 = vunpack.c.h.b16 %v379
    %v703 = vunpack.c.l.b16 %v380
    %v704 = vunpack.c.l.b16 %v381
    %v705 = vunpack.c.h.b16 %v381
    %v706 = vunpack.c.l.b16 %v382
    %v707 = vunpack.c.l.b16 %v383
    %v708 = vunpack.c.h.b16 %v383
    %v709 = vunpack.c.l.b16 %v384
    %v710 = vunpack.c.l.b16 %v385
    %v711 = vunpack.c.h.b16 %v385
    %v712 = vunpack.c.l.b16 %v386
    %v713 = vunpack.c.l.b16 %v387
    %v714 = vunpack.c.h.b16 %v387
    %v715 = vunpack.c.l.b16 %v388
    %v716 = vunpack.c.l.b16 %v389
    %v717 = vunpack.c.h.b16 %v389
    %v718 = vunpack.c.l.b16 %v390
    %v719 = vunpack.c.l.b16 %v391
    %v720 = vunpack.c.h.b16 %v391
    %v721 = vunpack.c.l.b16 %v392
    %v722 = vunpack.c.l.b16 %v393
    %v723 = vunpack.c.h.b16 %v393
    %v724 = vunpack.c.l.b16 %v394
    %v725 = vunpack.c.l.b16 %v395
    %v726 = vunpack.c.h.b16 %v395
    %v727 = vunpack.c.l.b16 %v396
    %v728 = vunpack.c.l.b16 %v397
    %v729 = vunpack.c.h.b16 %v397
    %v730 = vunpack.c.l.b16 %v398
    %v731 = vunpack.c.l.b16 %v399
    %v732 = vunpack.c.h.b16 %v399
    %v733 = vunpack.c.l.b16 %v400
    %v734 = vunpack.c.l.b16 %v401
    %v735 = vunpack.c.h.b16 %v401
    %v736 = vunpack.c.l.b16 %v402
    %v737 = vunpack.c.l.b16 %v403
    %v738 = vunpack.c.h.b16 %v403
    %v739 = vunpack.c.l.b16 %v404
    %v740 = vunpack.c.l.b16 %v405
    %v741 = vunpack.c.h.b16 %v405
    %v742 = vunpack.c.l.b16 %v406
    %v743 = vunpack.c.l.b16 %v407
    %v744 = vunpack.c.h.b16 %v407
    %v745 = vunpack.c.l.b16 %v408
    %v746 = vpack.c.b16 %v557, %v554
    %v747 = vpack.c.b16 %v558, %v555
    %v748 = vpack.c.b16 %v559, %v556
    %v749 = vpack.c.b16 %v563, %v560
    %v750 = vpack.c.b16 %v564, %v561
    %v751 = vpack.c.b16 %v565, %v562
    %v752 = vpack.c.b16 %v569, %v566
    %v753 = vpack.c.b16 %v570, %v567
    %v754 = vpack.c.b16 %v571, %v568
    %v755 = vpack.c.b16 %v575, %v572
    %v756 = vpack.c.b16 %v576, %v573
    %v757 = vpack.c.b16 %v577, %v574
    %v758 = vpack.c.b16 %v581, %v578
    %v759 = vpack.c.b16 %v582, %v579
    %v760 = vpack.c.b16 %v583, %v580
    %v761 = vpack.c.b16 %v587, %v584
    %v762 = vpack.c.b16 %v588, %v585
    %v763 = vpack.c.b16 %v589, %v586
    %v764 = vpack.c.b16 %v593, %v590
    %v765 = vpack.c.b16 %v594, %v591
    %v766 = vpack.c.b16 %v595, %v592
    %v767 = vpack.c.b16 %v599, %v596
    %v768 = vpack.c.b16 %v600, %v597
    %v769 = vpack.c.b16 %v601, %v598
    %v770 = vpack.c.b16 %v605, %v602
    %v771 = vpack.c.b16 %v606, %v603
    %v772 = vpack.c.b16 %v607, %v604
    %v773 = vpack.c.b16 %v611, %v608
    %v774 = vpack.c.b16 %v612, %v609
    %v775 = vpack.c.b16 %v613, %v610
    %v776 = vpack.c.b16 %v617, %v614
    %v777 = vpack.c.b16 %v618, %v615
    %v778 = vpack.c.b16 %v619, %v616
    %v779 = vpack.c.b16 %v623, %v620
    %v780 = vpack.c.b16 %v624, %v621
    %v781 = vpack.c.b16 %v625, %v622
    %v782 = vpack.c.b16 %v629, %v626
    %v783 = vpack.c.b16 %v630, %v627
    %v784 = vpack.c.b16 %v631, %v628
    %v785 = vpack.c.b16 %v635, %v632
    %v786 = vpack.c.b16 %v636, %v633
    %v787 = vpack.c.b16 %v637, %v634
    %v788 = vpack.c.b16 %v641, %v638
    %v789 = vpack.c.b16 %v642, %v639
    %v790 = vpack.c.b16 %v643, %v640
    %v791 = vpack.c.b16 %v647, %v644
    %v792 = vpack.c.b16 %v648, %v645
    %v793 = vpack.c.b16 %v649, %v646
    %v794 = vpack.c.b16 %v653, %v650
    %v795 = vpack.c.b16 %v654, %v651
    %v796 = vpack.c.b16 %v655, %v652
    %v797 = vpack.c.b16 %v659, %v656
    %v798 = vpack.c.b16 %v660, %v657
    %v799 = vpack.c.b16 %v661, %v658
    %v800 = vpack.c.b16 %v665, %v662
    %v801 = vpack.c.b16 %v666, %v663
    %v802 = vpack.c.b16 %v667, %v664
    %v803 = vpack.c.b16 %v671, %v668
    %v804 = vpack.c.b16 %v672, %v669
    %v805 = vpack.c.b16 %v673, %v670
    %v806 = vpack.c.b16 %v677, %v674
    %v807 = vpack.c.b16 %v678, %v675
    %v808 = vpack.c.b16 %v679, %v676
    %v809 = vpack.c.b16 %v683, %v680
    %v810 = vpack.c.b16 %v684, %v681
    %v811 = vpack.c.b16 %v685, %v682
    %v812 = vpack.c.b16 %v689, %v686
    %v813 = vpack.c.b16 %v690, %v687
    %v814 = vpack.c.b16 %v691, %v688
    %v815 = vpack.c.b16 %v695, %v692
    %v816 = vpack.c.b16 %v696, %v693
    %v817 = vpack.c.b16 %v697, %v694
    %v818 = vpack.c.b16 %v701, %v698
    %v819 = vpack.c.b16 %v702, %v699
    %v820 = vpack.c.b16 %v703, %v700
    %v821 = vpack.c.b16 %v707, %v704
    %v822 = vpack.c.b16 %v708, %v705
    %v823 = vpack.c.b16 %v709, %v706
    %v824 = vpack.c.b16 %v713, %v710
    %v825 = vpack.c.b16 %v714, %v711
    %v826 = vpack.c.b16 %v715, %v712
    %v827 = vpack.c.b16 %v719, %v716
    %v828 = vpack.c.b16 %v720, %v717
    %v829 = vpack.c.b16 %v721, %v718
    %v830 = vpack.c.b16 %v725, %v722
    %v831 = vpack.c.b16 %v726, %v723
    %v832 = vpack.c.b16 %v727, %v724
    %v833 = vpack.c.b16 %v731, %v728
    %v834 = vpack.c.b16 %v732, %v729
    %v835 = vpack.c.b16 %v733, %v730
    %v836 = vpack.c.b16 %v737, %v734
    %v837 = vpack.c.b16 %v738, %v735
    %v838 = vpack.c.b16 %v739, %v736
    %v839 = vpack.c.b16 %v743, %v740
    %v840 = vpack.c.b16 %v744, %v741
    %v841 = vpack.c.b16 %v745, %v742
    %938 = vmatprep.subr.bf16.mxu0 %v747
    %939 = vmatpush1.bf16.msra.mxu0 %v746
    %940 = vmatprep.subr.bf16.mxu0 %v750
    %941 = vmatpush1.bf16.msra.mxu0 %v749
    %942 = vmatprep.subr.bf16.mxu0 %v753
    %943 = vmatpush1.bf16.msra.mxu0 %v752
    %944 = vmatprep.subr.bf16.mxu0 %v756
    %945 = vmatpush1.bf16.msra.mxu0 %v755
    %946 = vmatprep.subr.bf16.mxu0 %v759
    %947 = vmatpush1.bf16.msra.mxu0 %v758
    %948 = vmatprep.subr.bf16.mxu0 %v762
    %949 = vmatpush1.bf16.msra.mxu0 %v761
    %950 = vmatprep.subr.bf16.mxu0 %v765
    %951 = vmatpush1.bf16.msra.mxu0 %v764
    %952 = vmatprep.subr.bf16.mxu0 %v768
    %953 = vmatpush1.bf16.msra.mxu0 %v767
    %954 = vmatprep.subr.bf16.mxu0 %v771
    %955 = vmatpush1.bf16.msra.mxu0 %v770
    %956 = vmatprep.subr.bf16.mxu0 %v774
    %957 = vmatpush1.bf16.msra.mxu0 %v773
    %958 = vmatprep.subr.bf16.mxu0 %v777
    %959 = vmatpush1.bf16.msra.mxu0 %v776
    %960 = vmatprep.subr.bf16.mxu0 %v780
    %961 = vmatpush1.bf16.msra.mxu0 %v779
    %962 = vmatprep.subr.bf16.mxu0 %v783
    %963 = vmatpush1.bf16.msra.mxu0 %v782
    %964 = vmatprep.subr.bf16.mxu0 %v786
    %965 = vmatpush1.bf16.msra.mxu0 %v785
    %966 = vmatprep.subr.bf16.mxu0 %v789
    %967 = vmatpush1.bf16.msra.mxu0 %v788
    %968 = vmatprep.subr.bf16.mxu0 %v792
    %969 = vmatpush1.bf16.msra.mxu0 %v791
    %970 = vmatprep.mubr.bf16.mxu0 %v278
    %971 = vmatmul.mubr.bf16.gmra.mrb[0].mxu0 %v277
    %v972 = vpop.f32.mrb[0].mxu0
    %v973 = vadd.f32 %v414, %v972
    %v974 = vpop.f32.mrb[0].mxu0
    %v975 = vadd.f32 %v418, %v974
    %v976 = vpop.f32.mrb[0].mxu0
    %v977 = vadd.f32 %v414, %v976
    %v978 = vpop.f32.mrb[0].mxu0
    %v979 = vadd.f32 %v418, %v978
    %980 = vdwg.mxu0
    %981 = vmatprep.subr.bf16.mxu0 %v795
    %982 = vmatpush1.bf16.msra.mxu0 %v794
    %983 = vmatprep.subr.bf16.mxu0 %v798
    %984 = vmatpush1.bf16.msra.mxu0 %v797
    %985 = vmatprep.subr.bf16.mxu0 %v801
    %986 = vmatpush1.bf16.msra.mxu0 %v800
    %987 = vmatprep.subr.bf16.mxu0 %v804
    %988 = vmatpush1.bf16.msra.mxu0 %v803
    %989 = vmatprep.subr.bf16.mxu0 %v807
    %990 = vmatpush1.bf16.msra.mxu0 %v806
    %991 = vmatprep.subr.bf16.mxu0 %v810
    %992 = vmatpush1.bf16.msra.mxu0 %v809
    %993 = vmatprep.subr.bf16.mxu0 %v813
    %994 = vmatpush1.bf16.msra.mxu0 %v812
    %995 = vmatprep.subr.bf16.mxu0 %v816
    %996 = vmatpush1.bf16.msra.mxu0 %v815
    %997 = vmatprep.subr.bf16.mxu0 %v819
    %998 = vmatpush1.bf16.msra.mxu0 %v818
    %999 = vmatprep.subr.bf16.mxu0 %v822
    %1000 = vmatpush1.bf16.msra.mxu0 %v821
    %1001 = vmatprep.subr.bf16.mxu0 %v825
    %1002 = vmatpush1.bf16.msra.mxu0 %v824
    %1003 = vmatprep.subr.bf16.mxu0 %v828
    %1004 = vmatpush1.bf16.msra.mxu0 %v827
    %1005 = vmatprep.subr.bf16.mxu0 %v831
    %1006 = vmatpush1.bf16.msra.mxu0 %v830
    %1007 = vmatprep.subr.bf16.mxu0 %v834
    %1008 = vmatpush1.bf16.msra.mxu0 %v833
    %1009 = vmatprep.subr.bf16.mxu0 %v837
    %1010 = vmatpush1.bf16.msra.mxu0 %v836
    %1011 = vmatprep.subr.bf16.mxu0 %v840
    %1012 = vmatpush1.bf16.msra.mxu0 %v839
    %1013 = vmatprep.mubr.bf16.mxu0 %v280
    %1014 = vmatmul.mubr.bf16.gmra.mrb[0].mxu0 %v279
    %v1015 = vpop.f32.mrb[0].mxu0
    %v1016 = vadd.f32 %v973, %v1015
    %v1017 = vpop.f32.mrb[0].mxu0
    %v1018 = vadd.f32 %v975, %v1017
    %v1019 = vpop.f32.mrb[0].mxu0
    %v1020 = vadd.f32 %v977, %v1019
    %v1021 = vpop.f32.mrb[0].mxu0
    %v1022 = vadd.f32 %v979, %v1021
    %1023 = vdwg.mxu0
    %1024 = vmatprep.subr.bf16.mxu0 0
    %1025 = vmatpush1.bf16.msra.mxu0 %v748
    %1026 = vmatprep.subr.bf16.mxu0 0
    %1027 = vmatpush1.bf16.msra.mxu0 %v751
    %1028 = vmatprep.subr.bf16.mxu0 0
    %1029 = vmatpush1.bf16.msra.mxu0 %v754
    %1030 = vmatprep.subr.bf16.mxu0 0
    %1031 = vmatpush1.bf16.msra.mxu0 %v757
    %1032 = vmatprep.subr.bf16.mxu0 0
    %1033 = vmatpush1.bf16.msra.mxu0 %v760
    %1034 = vmatprep.subr.bf16.mxu0 0
    %1035 = vmatpush1.bf16.msra.mxu0 %v763
    %1036 = vmatprep.subr.bf16.mxu0 0
    %1037 = vmatpush1.bf16.msra.mxu0 %v766
    %1038 = vmatprep.subr.bf16.mxu0 0
    %1039 = vmatpush1.bf16.msra.mxu0 %v769
    %1040 = vmatprep.subr.bf16.mxu0 0
    %1041 = vmatpush1.bf16.msra.mxu0 %v772
    %1042 = vmatprep.subr.bf16.mxu0 0
    %1043 = vmatpush1.bf16.msra.mxu0 %v775
    %1044 = vmatprep.subr.bf16.mxu0 0
    %1045 = vmatpush1.bf16.msra.mxu0 %v778
    %1046 = vmatprep.subr.bf16.mxu0 0
    %1047 = vmatpush1.bf16.msra.mxu0 %v781
    %1048 = vmatprep.subr.bf16.mxu0 0
    %1049 = vmatpush1.bf16.msra.mxu0 %v784
    %1050 = vmatprep.subr.bf16.mxu0 0
    %1051 = vmatpush1.bf16.msra.mxu0 %v787
    %1052 = vmatprep.subr.bf16.mxu0 0
    %1053 = vmatpush1.bf16.msra.mxu0 %v790
    %1054 = vmatprep.subr.bf16.mxu0 0
    %1055 = vmatpush1.bf16.msra.mxu0 %v793
    %1056 = vmatprep.mubr.bf16.mxu0 %v278
    %1057 = vmatmul.mubr.bf16.gmra.mrb[0].mxu0 %v277
    %v1058 = vpop.f32.mrb[0].mxu0
    %v1059 = vadd.f32 %v422, %v1058
    %v1060 = vpop.f32.mrb[0].mxu0
    %v1061 = vpop.f32.mrb[0].mxu0
    %v1062 = vadd.f32 %v422, %v1061
    %v1063 = vpop.f32.mrb[0].mxu0
    %1064 = vdwg.mxu0
    %1065 = vmatprep.subr.bf16.mxu0 0
    %1066 = vmatpush1.bf16.msra.mxu0 %v796
    %1067 = vmatprep.subr.bf16.mxu0 0
    %1068 = vmatpush1.bf16.msra.mxu0 %v799
    %1069 = vmatprep.subr.bf16.mxu0 0
    %1070 = vmatpush1.bf16.msra.mxu0 %v802
    %1071 = vmatprep.subr.bf16.mxu0 0
    %1072 = vmatpush1.bf16.msra.mxu0 %v805
    %1073 = vmatprep.subr.bf16.mxu0 0
    %1074 = vmatpush1.bf16.msra.mxu0 %v808
    %1075 = vmatprep.subr.bf16.mxu0 0
    %1076 = vmatpush1.bf16.msra.mxu0 %v811
    %1077 = vmatprep.subr.bf16.mxu0 0
    %1078 = vmatpush1.bf16.msra.mxu0 %v814
    %1079 = vmatprep.subr.bf16.mxu0 0
    %1080 = vmatpush1.bf16.msra.mxu0 %v817
    %1081 = vmatprep.subr.bf16.mxu0 0
    %1082 = vmatpush1.bf16.msra.mxu0 %v820
    %1083 = vmatprep.subr.bf16.mxu0 0
    %1084 = vmatpush1.bf16.msra.mxu0 %v823
    %1085 = vmatprep.subr.bf16.mxu0 0
    %1086 = vmatpush1.bf16.msra.mxu0 %v826
    %1087 = vmatprep.subr.bf16.mxu0 0
    %1088 = vmatpush1.bf16.msra.mxu0 %v829
    %1089 = vmatprep.subr.bf16.mxu0 0
    %1090 = vmatpush1.bf16.msra.mxu0 %v832
    %1091 = vmatprep.subr.bf16.mxu0 0
    %1092 = vmatpush1.bf16.msra.mxu0 %v835
    %1093 = vmatprep.subr.bf16.mxu0 0
    %1094 = vmatpush1.bf16.msra.mxu0 %v838
    %1095 = vmatprep.subr.bf16.mxu0 0
    %1096 = vmatpush1.bf16.msra.mxu0 %v841
    %1097 = vmatprep.mubr.bf16.mxu0 %v280
    %1098 = vmatmul.mubr.bf16.gmra.mrb[0].mxu0 %v279
    %v1099 = vpop.f32.mrb[0].mxu0
    %v1100 = vadd.f32 %v1059, %v1099
    %v1101 = vpop.f32.mrb[0].mxu0
    %v1102 = vpop.f32.mrb[0].mxu0
    %v1103 = vadd.f32 %v1062, %v1102
    %v1104 = vpop.f32.mrb[0].mxu0
    %1105 = vdwg.mxu0
    %v1106 = vmax.f32 %v1016, 0.0
    %v1107 = vmax.f32 %v1018, 0.0
    %v1108 = vmax.f32 %v1100, 0.0
    %v1109 = vmax.f32 %v1020, 0.0
    %v1110 = vmax.f32 %v1022, 0.0
    %v1111 = vmax.f32 %v1103, 0.0
    %v1112 = vpack.c.bf16 %v1109, %v1106
    %v1113 = vpack.c.bf16 %v1110, %v1107
    %v1114 = vpack.c.bf16 %v1111, %v1108
    %v1115 = vld [vmem:[#allocation8] sm:$0xff]
    %v1116 = vld [vmem:[#allocation8 + $0x8] sm:$0xf]
    %v1117 = vld [vmem:[#allocation8 + $0xc] sm:$0xff]
    %v1118 = vld [vmem:[#allocation8 + $0x14] sm:$0xf]
    %v1119 = vld [vmem:[#allocation8 + $0x18] sm:$0xff]
    %v1120 = vld [vmem:[#allocation8 + $0x20] sm:$0xf]
    %v1121 = vld [vmem:[#allocation8 + $0x24] sm:$0xff]
    %v1122 = vld [vmem:[#allocation8 + $0x2c] sm:$0xf]
    %v1123 = vld [vmem:[#allocation8 + $0x30] sm:$0xff]
    %v1124 = vld [vmem:[#allocation8 + $0x38] sm:$0xf]
    %v1125 = vld [vmem:[#allocation8 + $0x3c] sm:$0xff]
    %v1126 = vld [vmem:[#allocation8 + $0x44] sm:$0xf]
    %v1127 = vld [vmem:[#allocation8 + $0x48] sm:$0xff]
    %v1128 = vld [vmem:[#allocation8 + $0x50] sm:$0xf]
    %v1129 = vld [vmem:[#allocation8 + $0x54] sm:$0xff]
    %v1130 = vld [vmem:[#allocation8 + $0x5c] sm:$0xf]
    %v1131 = vld [vmem:[#allocation8 + $0x60] sm:$0xff]
    %v1132 = vld [vmem:[#allocation8 + $0x68] sm:$0xf]
    %v1133 = vld [vmem:[#allocation8 + $0x6c] sm:$0xff]
    %v1134 = vld [vmem:[#allocation8 + $0x74] sm:$0xf]
    %v1135 = vld [vmem:[#allocation8 + $0x78] sm:$0xff]
    %v1136 = vld [vmem:[#allocation8 + $0x80] sm:$0xf]
    %v1137 = vld [vmem:[#allocation8 + $0x84] sm:$0xff]
    %v1138 = vld [vmem:[#allocation8 + $0x8c] sm:$0xf]
    %v1139 = vld [vmem:[#allocation8 + $0x90] sm:$0xff]
    %v1140 = vld [vmem:[#allocation8 + $0x98] sm:$0xf]
    %v1141 = vld [vmem:[#allocation8 + $0x9c] sm:$0xff]
    %v1142 = vld [vmem:[#allocation8 + $0xa4] sm:$0xf]
    %v1143 = vld [vmem:[#allocation8 + $0xa8] sm:$0xff]
    %v1144 = vld [vmem:[#allocation8 + $0xb0] sm:$0xf]
    %v1145 = vld [vmem:[#allocation8 + $0xb4] sm:$0xff]
    %v1146 = vld [vmem:[#allocation8 + $0xbc] sm:$0xf]
    %v1147 = vld [vmem:[#allocation8 + $0xc0] sm:$0xff]
    %v1148 = vld [vmem:[#allocation8 + $0xc8] sm:$0xf]
    %v1149 = vld [vmem:[#allocation8 + $0xcc] sm:$0xff]
    %v1150 = vld [vmem:[#allocation8 + $0xd4] sm:$0xf]
    %v1151 = vld [vmem:[#allocation8 + $0xd8] sm:$0xff]
    %v1152 = vld [vmem:[#allocation8 + $0xe0] sm:$0xf]
    %v1153 = vld [vmem:[#allocation8 + $0xe4] sm:$0xff]
    %v1154 = vld [vmem:[#allocation8 + $0xec] sm:$0xf]
    %v1155 = vld [vmem:[#allocation8 + $0xf0] sm:$0xff]
    %v1156 = vld [vmem:[#allocation8 + $0xf8] sm:$0xf]
    %v1157 = vld [vmem:[#allocation8 + $0xfc] sm:$0xff]
    %v1158 = vld [vmem:[#allocation8 + $0x104] sm:$0xf]
    %v1159 = vld [vmem:[#allocation8 + $0x108] sm:$0xff]
    %v1160 = vld [vmem:[#allocation8 + $0x110] sm:$0xf]
    %v1161 = vld [vmem:[#allocation8 + $0x114] sm:$0xff]
    %v1162 = vld [vmem:[#allocation8 + $0x11c] sm:$0xf]
    %v1163 = vld [vmem:[#allocation8 + $0x120] sm:$0xff]
    %v1164 = vld [vmem:[#allocation8 + $0x128] sm:$0xf]
    %v1165 = vld [vmem:[#allocation8 + $0x12c] sm:$0xff]
    %v1166 = vld [vmem:[#allocation8 + $0x134] sm:$0xf]
    %v1167 = vld [vmem:[#allocation8 + $0x138] sm:$0xff]
    %v1168 = vld [vmem:[#allocation8 + $0x140] sm:$0xf]
    %v1169 = vld [vmem:[#allocation8 + $0x144] sm:$0xff]
    %v1170 = vld [vmem:[#allocation8 + $0x14c] sm:$0xf]
    %v1171 = vld [vmem:[#allocation8 + $0x150] sm:$0xff]
    %v1172 = vld [vmem:[#allocation8 + $0x158] sm:$0xf]
    %v1173 = vld [vmem:[#allocation8 + $0x15c] sm:$0xff]
    %v1174 = vld [vmem:[#allocation8 + $0x164] sm:$0xf]
    %v1175 = vld [vmem:[#allocation8 + $0x168] sm:$0xff]
    %v1176 = vld [vmem:[#allocation8 + $0x170] sm:$0xf]
    %v1177 = vld [vmem:[#allocation8 + $0x174] sm:$0xff]
    %v1178 = vld [vmem:[#allocation8 + $0x17c] sm:$0xf]
    %v1179 = vld [vmem:[#allocation8 + $0x180] sm:$0xff]
    %v1180 = vld [vmem:[#allocation8 + $0x188] sm:$0xf]
    %v1181 = vld [vmem:[#allocation8 + $0x18c] sm:$0xff]
    %v1182 = vld [vmem:[#allocation8 + $0x194] sm:$0xf]
    %v1183 = vld [vmem:[#allocation8 + $0x198] sm:$0xff]
    %v1184 = vld [vmem:[#allocation8 + $0x1a0] sm:$0xf]
    %v1185 = vld [vmem:[#allocation8 + $0x1a4] sm:$0xff]
    %v1186 = vld [vmem:[#allocation8 + $0x1ac] sm:$0xf]
    %v1187 = vld [vmem:[#allocation8 + $0x1b0] sm:$0xff]
    %v1188 = vld [vmem:[#allocation8 + $0x1b8] sm:$0xf]
    %v1189 = vld [vmem:[#allocation8 + $0x1bc] sm:$0xff]
    %v1190 = vld [vmem:[#allocation8 + $0x1c4] sm:$0xf]
    %v1191 = vld [vmem:[#allocation8 + $0x1c8] sm:$0xff]
    %v1192 = vld [vmem:[#allocation8 + $0x1d0] sm:$0xf]
    %v1193 = vld [vmem:[#allocation8 + $0x1d4] sm:$0xff]
    %v1194 = vld [vmem:[#allocation8 + $0x1dc] sm:$0xf]
    %v1195 = vld [vmem:[#allocation8 + $0x1e0] sm:$0xff]
    %v1196 = vld [vmem:[#allocation8 + $0x1e8] sm:$0xf]
    %v1197 = vld [vmem:[#allocation8 + $0x1ec] sm:$0xff]
    %v1198 = vld [vmem:[#allocation8 + $0x1f4] sm:$0xf]
    %v1199 = vld [vmem:[#allocation8 + $0x1f8] sm:$0xff]
    %v1200 = vld [vmem:[#allocation8 + $0x200] sm:$0xf]
    %v1201 = vld [vmem:[#allocation8 + $0x204] sm:$0xff]
    %v1202 = vld [vmem:[#allocation8 + $0x20c] sm:$0xf]
    %v1203 = vld [vmem:[#allocation8 + $0x210] sm:$0xff]
    %v1204 = vld [vmem:[#allocation8 + $0x218] sm:$0xf]
    %v1205 = vld [vmem:[#allocation8 + $0x21c] sm:$0xff]
    %v1206 = vld [vmem:[#allocation8 + $0x224] sm:$0xf]
    %v1207 = vld [vmem:[#allocation8 + $0x228] sm:$0xff]
    %v1208 = vld [vmem:[#allocation8 + $0x230] sm:$0xf]
    %v1209 = vld [vmem:[#allocation8 + $0x234] sm:$0xff]
    %v1210 = vld [vmem:[#allocation8 + $0x23c] sm:$0xf]
    %v1211 = vld [vmem:[%s6] sm:$0x7]
    %v1213 = vlaneseq
    %v1214 = vshrl.u32 %v1213, 7
    %v1215 = vsub.s32 0, %v1214
    %v1216 = vrot.slane %v1211, %v1215
    %v1217 = vlaneseq
    %v1218 = vshrl.u32 %v1217, 7
    %v1219 = vsub.s32 1, %v1218
    %v1220 = vrot.slane %v1211, %v1219
    %v1221 = vlaneseq
    %v1222 = vshrl.u32 %v1221, 7
    %v1223 = vsub.s32 2, %v1222
    %v1224 = vrot.slane %v1211, %v1223
    %v1324 = vunpack.c.l.b16 %v1115
    %v1325 = vunpack.c.h.b16 %v1115
    %v1326 = vunpack.c.l.b16 %v1116
    %v1327 = vunpack.c.l.b16 %v1117
    %v1328 = vunpack.c.h.b16 %v1117
    %v1329 = vunpack.c.l.b16 %v1118
    %v1330 = vunpack.c.l.b16 %v1119
    %v1331 = vunpack.c.h.b16 %v1119
    %v1332 = vunpack.c.l.b16 %v1120
    %v1333 = vunpack.c.l.b16 %v1121
    %v1334 = vunpack.c.h.b16 %v1121
    %v1335 = vunpack.c.l.b16 %v1122
    %v1336 = vunpack.c.l.b16 %v1123
    %v1337 = vunpack.c.h.b16 %v1123
    %v1338 = vunpack.c.l.b16 %v1124
    %v1339 = vunpack.c.l.b16 %v1125
    %v1340 = vunpack.c.h.b16 %v1125
    %v1341 = vunpack.c.l.b16 %v1126
    %v1342 = vunpack.c.l.b16 %v1127
    %v1343 = vunpack.c.h.b16 %v1127
    %v1344 = vunpack.c.l.b16 %v1128
    %v1345 = vunpack.c.l.b16 %v1129
    %v1346 = vunpack.c.h.b16 %v1129
    %v1347 = vunpack.c.l.b16 %v1130
    %v1348 = vunpack.c.l.b16 %v1131
    %v1349 = vunpack.c.h.b16 %v1131
    %v1350 = vunpack.c.l.b16 %v1132
    %v1351 = vunpack.c.l.b16 %v1133
    %v1352 = vunpack.c.h.b16 %v1133
    %v1353 = vunpack.c.l.b16 %v1134
    %v1354 = vunpack.c.l.b16 %v1135
    %v1355 = vunpack.c.h.b16 %v1135
    %v1356 = vunpack.c.l.b16 %v1136
    %v1357 = vunpack.c.l.b16 %v1137
    %v1358 = vunpack.c.h.b16 %v1137
    %v1359 = vunpack.c.l.b16 %v1138
    %v1360 = vunpack.c.l.b16 %v1139
    %v1361 = vunpack.c.h.b16 %v1139
    %v1362 = vunpack.c.l.b16 %v1140
    %v1363 = vunpack.c.l.b16 %v1141
    %v1364 = vunpack.c.h.b16 %v1141
    %v1365 = vunpack.c.l.b16 %v1142
    %v1366 = vunpack.c.l.b16 %v1143
    %v1367 = vunpack.c.h.b16 %v1143
    %v1368 = vunpack.c.l.b16 %v1144
    %v1369 = vunpack.c.l.b16 %v1145
    %v1370 = vunpack.c.h.b16 %v1145
    %v1371 = vunpack.c.l.b16 %v1146
    %v1372 = vunpack.c.l.b16 %v1147
    %v1373 = vunpack.c.h.b16 %v1147
    %v1374 = vunpack.c.l.b16 %v1148
    %v1375 = vunpack.c.l.b16 %v1149
    %v1376 = vunpack.c.h.b16 %v1149
    %v1377 = vunpack.c.l.b16 %v1150
    %v1378 = vunpack.c.l.b16 %v1151
    %v1379 = vunpack.c.h.b16 %v1151
    %v1380 = vunpack.c.l.b16 %v1152
    %v1381 = vunpack.c.l.b16 %v1153
    %v1382 = vunpack.c.h.b16 %v1153
    %v1383 = vunpack.c.l.b16 %v1154
    %v1384 = vunpack.c.l.b16 %v1155
    %v1385 = vunpack.c.h.b16 %v1155
    %v1386 = vunpack.c.l.b16 %v1156
    %v1387 = vunpack.c.l.b16 %v1157
    %v1388 = vunpack.c.h.b16 %v1157
    %v1389 = vunpack.c.l.b16 %v1158
    %v1390 = vunpack.c.l.b16 %v1159
    %v1391 = vunpack.c.h.b16 %v1159
    %v1392 = vunpack.c.l.b16 %v1160
    %v1393 = vunpack.c.l.b16 %v1161
    %v1394 = vunpack.c.h.b16 %v1161
    %v1395 = vunpack.c.l.b16 %v1162
    %v1396 = vunpack.c.l.b16 %v1163
    %v1397 = vunpack.c.h.b16 %v1163
    %v1398 = vunpack.c.l.b16 %v1164
    %v1399 = vunpack.c.l.b16 %v1165
    %v1400 = vunpack.c.h.b16 %v1165
    %v1401 = vunpack.c.l.b16 %v1166
    %v1402 = vunpack.c.l.b16 %v1167
    %v1403 = vunpack.c.h.b16 %v1167
    %v1404 = vunpack.c.l.b16 %v1168
    %v1405 = vunpack.c.l.b16 %v1169
    %v1406 = vunpack.c.h.b16 %v1169
    %v1407 = vunpack.c.l.b16 %v1170
    %v1408 = vunpack.c.l.b16 %v1171
    %v1409 = vunpack.c.h.b16 %v1171
    %v1410 = vunpack.c.l.b16 %v1172
    %v1411 = vunpack.c.l.b16 %v1173
    %v1412 = vunpack.c.h.b16 %v1173
    %v1413 = vunpack.c.l.b16 %v1174
    %v1414 = vunpack.c.l.b16 %v1175
    %v1415 = vunpack.c.h.b16 %v1175
    %v1416 = vunpack.c.l.b16 %v1176
    %v1417 = vunpack.c.l.b16 %v1177
    %v1418 = vunpack.c.h.b16 %v1177
    %v1419 = vunpack.c.l.b16 %v1178
    %v1420 = vunpack.c.l.b16 %v1179
    %v1421 = vunpack.c.h.b16 %v1179
    %v1422 = vunpack.c.l.b16 %v1180
    %v1423 = vunpack.c.l.b16 %v1181
    %v1424 = vunpack.c.h.b16 %v1181
    %v1425 = vunpack.c.l.b16 %v1182
    %v1426 = vunpack.c.l.b16 %v1183
    %v1427 = vunpack.c.h.b16 %v1183
    %v1428 = vunpack.c.l.b16 %v1184
    %v1429 = vunpack.c.l.b16 %v1185
    %v1430 = vunpack.c.h.b16 %v1185
    %v1431 = vunpack.c.l.b16 %v1186
    %v1432 = vunpack.c.l.b16 %v1187
    %v1433 = vunpack.c.h.b16 %v1187
    %v1434 = vunpack.c.l.b16 %v1188
    %v1435 = vunpack.c.l.b16 %v1189
    %v1436 = vunpack.c.h.b16 %v1189
    %v1437 = vunpack.c.l.b16 %v1190
    %v1438 = vunpack.c.l.b16 %v1191
    %v1439 = vunpack.c.h.b16 %v1191
    %v1440 = vunpack.c.l.b16 %v1192
    %v1441 = vunpack.c.l.b16 %v1193
    %v1442 = vunpack.c.h.b16 %v1193
    %v1443 = vunpack.c.l.b16 %v1194
    %v1444 = vunpack.c.l.b16 %v1195
    %v1445 = vunpack.c.h.b16 %v1195
    %v1446 = vunpack.c.l.b16 %v1196
    %v1447 = vunpack.c.l.b16 %v1197
    %v1448 = vunpack.c.h.b16 %v1197
    %v1449 = vunpack.c.l.b16 %v1198
    %v1450 = vunpack.c.l.b16 %v1199
    %v1451 = vunpack.c.h.b16 %v1199
    %v1452 = vunpack.c.l.b16 %v1200
    %v1453 = vunpack.c.l.b16 %v1201
    %v1454 = vunpack.c.h.b16 %v1201
    %v1455 = vunpack.c.l.b16 %v1202
    %v1456 = vunpack.c.l.b16 %v1203
    %v1457 = vunpack.c.h.b16 %v1203
    %v1458 = vunpack.c.l.b16 %v1204
    %v1459 = vunpack.c.l.b16 %v1205
    %v1460 = vunpack.c.h.b16 %v1205
    %v1461 = vunpack.c.l.b16 %v1206
    %v1462 = vunpack.c.l.b16 %v1207
    %v1463 = vunpack.c.h.b16 %v1207
    %v1464 = vunpack.c.l.b16 %v1208
    %v1465 = vunpack.c.l.b16 %v1209
    %v1466 = vunpack.c.h.b16 %v1209
    %v1467 = vunpack.c.l.b16 %v1210
    %v1468 = vpack.c.b16 %v1327, %v1324
    %v1469 = vpack.c.b16 %v1328, %v1325
    %v1470 = vpack.c.b16 %v1329, %v1326
    %v1471 = vpack.c.b16 %v1333, %v1330
    %v1472 = vpack.c.b16 %v1334, %v1331
    %v1473 = vpack.c.b16 %v1335, %v1332
    %v1474 = vpack.c.b16 %v1339, %v1336
    %v1475 = vpack.c.b16 %v1340, %v1337
    %v1476 = vpack.c.b16 %v1341, %v1338
    %v1477 = vpack.c.b16 %v1345, %v1342
    %v1478 = vpack.c.b16 %v1346, %v1343
    %v1479 = vpack.c.b16 %v1347, %v1344
    %v1480 = vpack.c.b16 %v1351, %v1348
    %v1481 = vpack.c.b16 %v1352, %v1349
    %v1482 = vpack.c.b16 %v1353, %v1350
    %v1483 = vpack.c.b16 %v1357, %v1354
    %v1484 = vpack.c.b16 %v1358, %v1355
    %v1485 = vpack.c.b16 %v1359, %v1356
    %v1486 = vpack.c.b16 %v1363, %v1360
    %v1487 = vpack.c.b16 %v1364, %v1361
    %v1488 = vpack.c.b16 %v1365, %v1362
    %v1489 = vpack.c.b16 %v1369, %v1366
    %v1490 = vpack.c.b16 %v1370, %v1367
    %v1491 = vpack.c.b16 %v1371, %v1368
    %v1492 = vpack.c.b16 %v1375, %v1372
    %v1493 = vpack.c.b16 %v1376, %v1373
    %v1494 = vpack.c.b16 %v1377, %v1374
    %v1495 = vpack.c.b16 %v1381, %v1378
    %v1496 = vpack.c.b16 %v1382, %v1379
    %v1497 = vpack.c.b16 %v1383, %v1380
    %v1498 = vpack.c.b16 %v1387, %v1384
    %v1499 = vpack.c.b16 %v1388, %v1385
    %v1500 = vpack.c.b16 %v1389, %v1386
    %v1501 = vpack.c.b16 %v1393, %v1390
    %v1502 = vpack.c.b16 %v1394, %v1391
    %v1503 = vpack.c.b16 %v1395, %v1392
    %v1504 = vpack.c.b16 %v1399, %v1396
    %v1505 = vpack.c.b16 %v1400, %v1397
    %v1506 = vpack.c.b16 %v1401, %v1398
    %v1507 = vpack.c.b16 %v1405, %v1402
    %v1508 = vpack.c.b16 %v1406, %v1403
    %v1509 = vpack.c.b16 %v1407, %v1404
    %v1510 = vpack.c.b16 %v1411, %v1408
    %v1511 = vpack.c.b16 %v1412, %v1409
    %v1512 = vpack.c.b16 %v1413, %v1410
    %v1513 = vpack.c.b16 %v1417, %v1414
    %v1514 = vpack.c.b16 %v1418, %v1415
    %v1515 = vpack.c.b16 %v1419, %v1416
    %v1516 = vpack.c.b16 %v1423, %v1420
    %v1517 = vpack.c.b16 %v1424, %v1421
    %v1518 = vpack.c.b16 %v1425, %v1422
    %v1519 = vpack.c.b16 %v1429, %v1426
    %v1520 = vpack.c.b16 %v1430, %v1427
    %v1521 = vpack.c.b16 %v1431, %v1428
    %v1522 = vpack.c.b16 %v1435, %v1432
    %v1523 = vpack.c.b16 %v1436, %v1433
    %v1524 = vpack.c.b16 %v1437, %v1434
    %v1525 = vpack.c.b16 %v1441, %v1438
    %v1526 = vpack.c.b16 %v1442, %v1439
    %v1527 = vpack.c.b16 %v1443, %v1440
    %v1528 = vpack.c.b16 %v1447, %v1444
    %v1529 = vpack.c.b16 %v1448, %v1445
    %v1530 = vpack.c.b16 %v1449, %v1446
    %v1531 = vpack.c.b16 %v1453, %v1450
    %v1532 = vpack.c.b16 %v1454, %v1451
    %v1533 = vpack.c.b16 %v1455, %v1452
    %v1534 = vpack.c.b16 %v1459, %v1456
    %v1535 = vpack.c.b16 %v1460, %v1457
    %v1536 = vpack.c.b16 %v1461, %v1458
    %v1537 = vpack.c.b16 %v1465, %v1462
    %v1538 = vpack.c.b16 %v1466, %v1463
    %v1539 = vpack.c.b16 %v1467, %v1464
    %1612 = vmatprep.subr.bf16.mxu0 %v1469
    %1613 = vmatpush1.bf16.msra.mxu0 %v1468
    %1614 = vmatprep.subr.bf16.mxu0 %v1472
    %1615 = vmatpush1.bf16.msra.mxu0 %v1471
    %1616 = vmatprep.subr.bf16.mxu0 %v1475
    %1617 = vmatpush1.bf16.msra.mxu0 %v1474
    %1618 = vmatprep.subr.bf16.mxu0 %v1478
    %1619 = vmatpush1.bf16.msra.mxu0 %v1477
    %1620 = vmatprep.subr.bf16.mxu0 %v1481
    %1621 = vmatpush1.bf16.msra.mxu0 %v1480
    %1622 = vmatprep.subr.bf16.mxu0 %v1484
    %1623 = vmatpush1.bf16.msra.mxu0 %v1483
    %1624 = vmatprep.subr.bf16.mxu0 %v1487
    %1625 = vmatpush1.bf16.msra.mxu0 %v1486
    %1626 = vmatprep.subr.bf16.mxu0 %v1490
    %1627 = vmatpush1.bf16.msra.mxu0 %v1489
    %1628 = vmatprep.subr.bf16.mxu0 %v1493
    %1629 = vmatpush1.bf16.msra.mxu0 %v1492
    %1630 = vmatprep.subr.bf16.mxu0 %v1496
    %1631 = vmatpush1.bf16.msra.mxu0 %v1495
    %1632 = vmatprep.subr.bf16.mxu0 %v1499
    %1633 = vmatpush1.bf16.msra.mxu0 %v1498
    %1634 = vmatprep.subr.bf16.mxu0 %v1502
    %1635 = vmatpush1.bf16.msra.mxu0 %v1501
    %1636 = vmatprep.subr.bf16.mxu0 %v1505
    %1637 = vmatpush1.bf16.msra.mxu0 %v1504
    %1638 = vmatprep.subr.bf16.mxu0 %v1508
    %1639 = vmatpush1.bf16.msra.mxu0 %v1507
    %1640 = vmatprep.subr.bf16.mxu0 %v1511
    %1641 = vmatpush1.bf16.msra.mxu0 %v1510
    %1642 = vmatprep.subr.bf16.mxu0 %v1514
    %1643 = vmatpush1.bf16.msra.mxu0 %v1513
    %1644 = vmatprep.mubr.bf16.mxu0 %v1113
    %1645 = vmatmul.mubr.bf16.gmra.mrb[0].mxu0 %v1112
    %v1646 = vpop.f32.mrb[0].mxu0
    %v1647 = vadd.f32 %v1216, %v1646
    %v1648 = vpop.f32.mrb[0].mxu0
    %v1649 = vadd.f32 %v1220, %v1648
    %v1650 = vpop.f32.mrb[0].mxu0
    %v1651 = vadd.f32 %v1216, %v1650
    %v1652 = vpop.f32.mrb[0].mxu0
    %v1653 = vadd.f32 %v1220, %v1652
    %1654 = vdwg.mxu0
    %1655 = vmatprep.subr.bf16.mxu0 %v1517
    %1656 = vmatpush1.bf16.msra.mxu0 %v1516
    %1657 = vmatprep.subr.bf16.mxu0 %v1520
    %1658 = vmatpush1.bf16.msra.mxu0 %v1519
    %1659 = vmatprep.subr.bf16.mxu0 %v1523
    %1660 = vmatpush1.bf16.msra.mxu0 %v1522
    %1661 = vmatprep.subr.bf16.mxu0 %v1526
    %1662 = vmatpush1.bf16.msra.mxu0 %v1525
    %1663 = vmatprep.subr.bf16.mxu0 %v1529
    %1664 = vmatpush1.bf16.msra.mxu0 %v1528
    %1665 = vmatprep.subr.bf16.mxu0 %v1532
    %1666 = vmatpush1.bf16.msra.mxu0 %v1531
    %1667 = vmatprep.subr.bf16.mxu0 %v1535
    %1668 = vmatpush1.bf16.msra.mxu0 %v1534
    %1669 = vmatprep.subr.bf16.mxu0 %v1538
    %1670 = vmatpush1.bf16.msra.mxu0 %v1537
    %1671 = vmatprep.subr.bf16.mxu0 0
    %1672 = vmatpush1.bf16.msra.mxu0 0
    %1673 = vmatprep.subr.bf16.mxu0 0
    %1674 = vmatpush1.bf16.msra.mxu0 0
    %1675 = vmatprep.subr.bf16.mxu0 0
    %1676 = vmatpush1.bf16.msra.mxu0 0
    %1677 = vmatprep.subr.bf16.mxu0 0
    %1678 = vmatpush1.bf16.msra.mxu0 0
    %1679 = vmatprep.subr.bf16.mxu0 0
    %1680 = vmatpush1.bf16.msra.mxu0 0
    %1681 = vmatprep.subr.bf16.mxu0 0
    %1682 = vmatpush1.bf16.msra.mxu0 0
    %1683 = vmatprep.subr.bf16.mxu0 0
    %1684 = vmatpush1.bf16.msra.mxu0 0
    %1685 = vmatprep.subr.bf16.mxu0 0
    %1686 = vmatpush1.bf16.msra.mxu0 0
    %1687 = vmatprep.mubr.bf16.mxu0 0
    %1688 = vmatmul.mubr.bf16.gmra.mrb[0].mxu0 %v1114
    %v1689 = vpop.f32.mrb[0].mxu0
    %v1690 = vadd.f32 %v1647, %v1689
    %v1691 = vpop.f32.mrb[0].mxu0
    %v1692 = vadd.f32 %v1649, %v1691
    %v1693 = vpop.f32.mrb[0].mxu0
    %v1694 = vadd.f32 %v1651, %v1693
    %v1695 = vpop.f32.mrb[0].mxu0
    %v1696 = vadd.f32 %v1653, %v1695
    %1697 = vdwg.mxu0
    %1698 = vmatprep.subr.bf16.mxu0 0
    %1699 = vmatpush1.bf16.msra.mxu0 %v1470
    %1700 = vmatprep.subr.bf16.mxu0 0
    %1701 = vmatpush1.bf16.msra.mxu0 %v1473
    %1702 = vmatprep.subr.bf16.mxu0 0
    %1703 = vmatpush1.bf16.msra.mxu0 %v1476
    %1704 = vmatprep.subr.bf16.mxu0 0
    %1705 = vmatpush1.bf16.msra.mxu0 %v1479
    %1706 = vmatprep.subr.bf16.mxu0 0
    %1707 = vmatpush1.bf16.msra.mxu0 %v1482
    %1708 = vmatprep.subr.bf16.mxu0 0
    %1709 = vmatpush1.bf16.msra.mxu0 %v1485
    %1710 = vmatprep.subr.bf16.mxu0 0
    %1711 = vmatpush1.bf16.msra.mxu0 %v1488
    %1712 = vmatprep.subr.bf16.mxu0 0
    %1713 = vmatpush1.bf16.msra.mxu0 %v1491
    %1714 = vmatprep.subr.bf16.mxu0 0
    %1715 = vmatpush1.bf16.msra.mxu0 %v1494
    %1716 = vmatprep.subr.bf16.mxu0 0
    %1717 = vmatpush1.bf16.msra.mxu0 %v1497
    %1718 = vmatprep.subr.bf16.mxu0 0
    %1719 = vmatpush1.bf16.msra.mxu0 %v1500
    %1720 = vmatprep.subr.bf16.mxu0 0
    %1721 = vmatpush1.bf16.msra.mxu0 %v1503
    %1722 = vmatprep.subr.bf16.mxu0 0
    %1723 = vmatpush1.bf16.msra.mxu0 %v1506
    %1724 = vmatprep.subr.bf16.mxu0 0
    %1725 = vmatpush1.bf16.msra.mxu0 %v1509
    %1726 = vmatprep.subr.bf16.mxu0 0
    %1727 = vmatpush1.bf16.msra.mxu0 %v1512
    %1728 = vmatprep.subr.bf16.mxu0 0
    %1729 = vmatpush1.bf16.msra.mxu0 %v1515
    %1730 = vmatprep.mubr.bf16.mxu0 %v1113
    %1731 = vmatmul.mubr.bf16.gmra.mrb[0].mxu0 %v1112
    %v1732 = vpop.f32.mrb[0].mxu0
    %v1733 = vadd.f32 %v1224, %v1732
    %v1734 = vpop.f32.mrb[0].mxu0
    %v1735 = vpop.f32.mrb[0].mxu0
    %v1736 = vadd.f32 %v1224, %v1735
    %v1737 = vpop.f32.mrb[0].mxu0
    %1738 = vdwg.mxu0
    %1739 = vmatprep.subr.bf16.mxu0 0
    %1740 = vmatpush1.bf16.msra.mxu0 %v1518
    %1741 = vmatprep.subr.bf16.mxu0 0
    %1742 = vmatpush1.bf16.msra.mxu0 %v1521
    %1743 = vmatprep.subr.bf16.mxu0 0
    %1744 = vmatpush1.bf16.msra.mxu0 %v1524
    %1745 = vmatprep.subr.bf16.mxu0 0
    %1746 = vmatpush1.bf16.msra.mxu0 %v1527
    %1747 = vmatprep.subr.bf16.mxu0 0
    %1748 = vmatpush1.bf16.msra.mxu0 %v1530
    %1749 = vmatprep.subr.bf16.mxu0 0
    %1750 = vmatpush1.bf16.msra.mxu0 %v1533
    %1751 = vmatprep.subr.bf16.mxu0 0
    %1752 = vmatpush1.bf16.msra.mxu0 %v1536
    %1753 = vmatprep.subr.bf16.mxu0 0
    %1754 = vmatpush1.bf16.msra.mxu0 %v1539
    %1755 = vmatprep.subr.bf16.mxu0 0
    %1756 = vmatpush1.bf16.msra.mxu0 0
    %1757 = vmatprep.subr.bf16.mxu0 0
    %1758 = vmatpush1.bf16.msra.mxu0 0
    %1759 = vmatprep.subr.bf16.mxu0 0
    %1760 = vmatpush1.bf16.msra.mxu0 0
    %1761 = vmatprep.subr.bf16.mxu0 0
    %1762 = vmatpush1.bf16.msra.mxu0 0
    %1763 = vmatprep.subr.bf16.mxu0 0
    %1764 = vmatpush1.bf16.msra.mxu0 0
    %1765 = vmatprep.subr.bf16.mxu0 0
    %1766 = vmatpush1.bf16.msra.mxu0 0
    %1767 = vmatprep.subr.bf16.mxu0 0
    %1768 = vmatpush1.bf16.msra.mxu0 0
    %1769 = vmatprep.subr.bf16.mxu0 0
    %1770 = vmatpush1.bf16.msra.mxu0 0
    %1771 = vmatprep.mubr.bf16.mxu0 0
    %1772 = vmatmul.mubr.bf16.gmra.mrb[0].mxu0 %v1114
    %v1773 = vpop.f32.mrb[0].mxu0
    %v1774 = vadd.f32 %v1733, %v1773
    %v1775 = vpop.f32.mrb[0].mxu0
    %v1776 = vpop.f32.mrb[0].mxu0
    %v1777 = vadd.f32 %v1736, %v1776
    %v1778 = vpop.f32.mrb[0].mxu0
    %1779 = vdwg.mxu0
    %v1780 = vmax.f32 %v1690, 0.0
    %v1781 = vmax.f32 %v1692, 0.0
    %v1782 = vmax.f32 %v1774, 0.0
    %v1783 = vmax.f32 %v1694, 0.0
    %v1784 = vmax.f32 %v1696, 0.0
    %v1785 = vmax.f32 %v1777, 0.0
    %v1786 = vpack.c.bf16 %v1783, %v1780
    %v1787 = vpack.c.bf16 %v1784, %v1781
    %v1788 = vpack.c.bf16 %v1785, %v1782
    %v1789 = vld [vmem:[#allocation10] sm:$0xf]
    %v1790 = vld [vmem:[#allocation10 + $0x4] sm:$0xf]
    %v1791 = vld [vmem:[#allocation10 + $0x8] sm:$0xf]
    %v1792 = vld [vmem:[#allocation10 + $0xc] sm:$0xf]
    %v1793 = vld [vmem:[#allocation10 + $0x10] sm:$0xf]
    %v1794 = vld [vmem:[#allocation10 + $0x14] sm:$0xf]
    %v1795 = vld [vmem:[#allocation10 + $0x18] sm:$0xf]
    %v1796 = vld [vmem:[#allocation10 + $0x1c] sm:$0xf]
    %v1797 = vld [vmem:[#allocation10 + $0x20] sm:$0xf]
    %v1798 = vld [vmem:[#allocation10 + $0x24] sm:$0xf]
    %v1799 = vld [vmem:[#allocation10 + $0x28] sm:$0xf]
    %v1800 = vld [vmem:[#allocation10 + $0x2c] sm:$0xf]
    %v1801 = vld [vmem:[#allocation10 + $0x30] sm:$0xf]
    %v1802 = vld [vmem:[#allocation10 + $0x34] sm:$0xf]
    %v1803 = vld [vmem:[#allocation10 + $0x38] sm:$0xf]
    %v1804 = vld [vmem:[#allocation10 + $0x3c] sm:$0xf]
    %v1805 = vld [vmem:[#allocation10 + $0x40] sm:$0xf]
    %v1806 = vld [vmem:[#allocation10 + $0x44] sm:$0xf]
    %v1807 = vld [vmem:[#allocation10 + $0x48] sm:$0xf]
    %v1808 = vld [vmem:[#allocation10 + $0x4c] sm:$0xf]
    %v1809 = vld [vmem:[#allocation10 + $0x50] sm:$0xf]
    %v1810 = vld [vmem:[#allocation10 + $0x54] sm:$0xf]
    %v1811 = vld [vmem:[#allocation10 + $0x58] sm:$0xf]
    %v1812 = vld [vmem:[#allocation10 + $0x5c] sm:$0xf]
    %v1813 = vld [vmem:[#allocation10 + $0x60] sm:$0xf]
    %v1814 = vld [vmem:[#allocation10 + $0x64] sm:$0xf]
    %v1815 = vld [vmem:[#allocation10 + $0x68] sm:$0xf]
    %v1816 = vld [vmem:[#allocation10 + $0x6c] sm:$0xf]
    %v1817 = vld [vmem:[#allocation10 + $0x70] sm:$0xf]
    %v1818 = vld [vmem:[#allocation10 + $0x74] sm:$0xf]
    %v1819 = vld [vmem:[#allocation10 + $0x78] sm:$0xf]
    %v1820 = vld [vmem:[#allocation10 + $0x7c] sm:$0xf]
    %v1821 = vld [vmem:[#allocation10 + $0x80] sm:$0xf]
    %v1822 = vld [vmem:[#allocation10 + $0x84] sm:$0xf]
    %v1823 = vld [vmem:[#allocation10 + $0x88] sm:$0xf]
    %v1824 = vld [vmem:[#allocation10 + $0x8c] sm:$0xf]
    %v1825 = vld [vmem:[#allocation10 + $0x90] sm:$0xf]
    %v1826 = vld [vmem:[#allocation10 + $0x94] sm:$0xf]
    %v1827 = vld [vmem:[#allocation10 + $0x98] sm:$0xf]
    %v1828 = vld [vmem:[#allocation10 + $0x9c] sm:$0xf]
    %v1829 = vld [vmem:[#allocation10 + $0xa0] sm:$0xf]
    %v1830 = vld [vmem:[#allocation10 + $0xa4] sm:$0xf]
    %v1831 = vld [vmem:[#allocation10 + $0xa8] sm:$0xf]
    %v1832 = vld [vmem:[#allocation10 + $0xac] sm:$0xf]
    %v1833 = vld [vmem:[#allocation10 + $0xb0] sm:$0xf]
    %v1834 = vld [vmem:[#allocation10 + $0xb4] sm:$0xf]
    %v1835 = vld [vmem:[#allocation10 + $0xb8] sm:$0xf]
    %v1836 = vld [vmem:[#allocation10 + $0xbc] sm:$0xf]
    %v1837 = vld [vmem:[%s8] sm:$0x1]
    %v1839 = vlaneseq
    %v1840 = vshrl.u32 %v1839, 7
    %v1841 = vsub.s32 0, %v1840
    %v1842 = vrot.slane %v1837, %v1841
    %v1892 = vunpack.c.l.b16 %v1789
    %v1893 = vunpack.c.l.b16 %v1790
    %v1894 = vunpack.c.l.b16 %v1791
    %v1895 = vunpack.c.l.b16 %v1792
    %v1896 = vunpack.c.l.b16 %v1793
    %v1897 = vunpack.c.l.b16 %v1794
    %v1898 = vunpack.c.l.b16 %v1795
    %v1899 = vunpack.c.l.b16 %v1796
    %v1900 = vunpack.c.l.b16 %v1797
    %v1901 = vunpack.c.l.b16 %v1798
    %v1902 = vunpack.c.l.b16 %v1799
    %v1903 = vunpack.c.l.b16 %v1800
    %v1904 = vunpack.c.l.b16 %v1801
    %v1905 = vunpack.c.l.b16 %v1802
    %v1906 = vunpack.c.l.b16 %v1803
    %v1907 = vunpack.c.l.b16 %v1804
    %v1908 = vunpack.c.l.b16 %v1805
    %v1909 = vunpack.c.l.b16 %v1806
    %v1910 = vunpack.c.l.b16 %v1807
    %v1911 = vunpack.c.l.b16 %v1808
    %v1912 = vunpack.c.l.b16 %v1809
    %v1913 = vunpack.c.l.b16 %v1810
    %v1914 = vunpack.c.l.b16 %v1811
    %v1915 = vunpack.c.l.b16 %v1812
    %v1916 = vunpack.c.l.b16 %v1813
    %v1917 = vunpack.c.l.b16 %v1814
    %v1918 = vunpack.c.l.b16 %v1815
    %v1919 = vunpack.c.l.b16 %v1816
    %v1920 = vunpack.c.l.b16 %v1817
    %v1921 = vunpack.c.l.b16 %v1818
    %v1922 = vunpack.c.l.b16 %v1819
    %v1923 = vunpack.c.l.b16 %v1820
    %v1924 = vunpack.c.l.b16 %v1821
    %v1925 = vunpack.c.l.b16 %v1822
    %v1926 = vunpack.c.l.b16 %v1823
    %v1927 = vunpack.c.l.b16 %v1824
    %v1928 = vunpack.c.l.b16 %v1825
    %v1929 = vunpack.c.l.b16 %v1826
    %v1930 = vunpack.c.l.b16 %v1827
    %v1931 = vunpack.c.l.b16 %v1828
    %v1932 = vunpack.c.l.b16 %v1829
    %v1933 = vunpack.c.l.b16 %v1830
    %v1934 = vunpack.c.l.b16 %v1831
    %v1935 = vunpack.c.l.b16 %v1832
    %v1936 = vunpack.c.l.b16 %v1833
    %v1937 = vunpack.c.l.b16 %v1834
    %v1938 = vunpack.c.l.b16 %v1835
    %v1939 = vunpack.c.l.b16 %v1836
    %v1940 = vpack.c.b16 %v1893, %v1892
    %v1941 = vpack.c.b16 %v1895, %v1894
    %v1942 = vpack.c.b16 %v1897, %v1896
    %v1943 = vpack.c.b16 %v1899, %v1898
    %v1944 = vpack.c.b16 %v1901, %v1900
    %v1945 = vpack.c.b16 %v1903, %v1902
    %v1946 = vpack.c.b16 %v1905, %v1904
    %v1947 = vpack.c.b16 %v1907, %v1906
    %v1948 = vpack.c.b16 %v1909, %v1908
    %v1949 = vpack.c.b16 %v1911, %v1910
    %v1950 = vpack.c.b16 %v1913, %v1912
    %v1951 = vpack.c.b16 %v1915, %v1914
    %v1952 = vpack.c.b16 %v1917, %v1916
    %v1953 = vpack.c.b16 %v1919, %v1918
    %v1954 = vpack.c.b16 %v1921, %v1920
    %v1955 = vpack.c.b16 %v1923, %v1922
    %v1956 = vpack.c.b16 %v1925, %v1924
    %v1957 = vpack.c.b16 %v1927, %v1926
    %v1958 = vpack.c.b16 %v1929, %v1928
    %v1959 = vpack.c.b16 %v1931, %v1930
    %v1960 = vpack.c.b16 %v1933, %v1932
    %v1961 = vpack.c.b16 %v1935, %v1934
    %v1962 = vpack.c.b16 %v1937, %v1936
    %v1963 = vpack.c.b16 %v1939, %v1938
    %1988 = vmatprep.subr.bf16.mxu0 0
    %1989 = vmatpush1.bf16.msra.mxu0 %v1940
    %1990 = vmatprep.subr.bf16.mxu0 0
    %1991 = vmatpush1.bf16.msra.mxu0 %v1941
    %1992 = vmatprep.subr.bf16.mxu0 0
    %1993 = vmatpush1.bf16.msra.mxu0 %v1942
    %1994 = vmatprep.subr.bf16.mxu0 0
    %1995 = vmatpush1.bf16.msra.mxu0 %v1943
    %1996 = vmatprep.subr.bf16.mxu0 0
    %1997 = vmatpush1.bf16.msra.mxu0 %v1944
    %1998 = vmatprep.subr.bf16.mxu0 0
    %1999 = vmatpush1.bf16.msra.mxu0 %v1945
    %2000 = vmatprep.subr.bf16.mxu0 0
    %2001 = vmatpush1.bf16.msra.mxu0 %v1946
    %2002 = vmatprep.subr.bf16.mxu0 0
    %2003 = vmatpush1.bf16.msra.mxu0 %v1947
    %2004 = vmatprep.subr.bf16.mxu0 0
    %2005 = vmatpush1.bf16.msra.mxu0 %v1948
    %2006 = vmatprep.subr.bf16.mxu0 0
    %2007 = vmatpush1.bf16.msra.mxu0 %v1949
    %2008 = vmatprep.subr.bf16.mxu0 0
    %2009 = vmatpush1.bf16.msra.mxu0 %v1950
    %2010 = vmatprep.subr.bf16.mxu0 0
    %2011 = vmatpush1.bf16.msra.mxu0 %v1951
    %2012 = vmatprep.subr.bf16.mxu0 0
    %2013 = vmatpush1.bf16.msra.mxu0 %v1952
    %2014 = vmatprep.subr.bf16.mxu0 0
    %2015 = vmatpush1.bf16.msra.mxu0 %v1953
    %2016 = vmatprep.subr.bf16.mxu0 0
    %2017 = vmatpush1.bf16.msra.mxu0 %v1954
    %2018 = vmatprep.subr.bf16.mxu0 0
    %2019 = vmatpush1.bf16.msra.mxu0 %v1955
    %2020 = vmatprep.mubr.bf16.mxu0 %v1787
    %2021 = vmatmul.mubr.bf16.gmra.mrb[0].mxu0 %v1786
    %v2022 = vpop.f32.mrb[0].mxu0
    %v2023 = vadd.f32 %v1842, %v2022
    %v2024 = vpop.f32.mrb[0].mxu0
    %v2025 = vpop.f32.mrb[0].mxu0
    %v2026 = vadd.f32 %v1842, %v2025
    %v2027 = vpop.f32.mrb[0].mxu0
    %2028 = vdwg.mxu0
    %2029 = vmatprep.subr.bf16.mxu0 0
    %2030 = vmatpush1.bf16.msra.mxu0 %v1956
    %2031 = vmatprep.subr.bf16.mxu0 0
    %2032 = vmatpush1.bf16.msra.mxu0 %v1957
    %2033 = vmatprep.subr.bf16.mxu0 0
    %2034 = vmatpush1.bf16.msra.mxu0 %v1958
    %2035 = vmatprep.subr.bf16.mxu0 0
    %2036 = vmatpush1.bf16.msra.mxu0 %v1959
    %2037 = vmatprep.subr.bf16.mxu0 0
    %2038 = vmatpush1.bf16.msra.mxu0 %v1960
    %2039 = vmatprep.subr.bf16.mxu0 0
    %2040 = vmatpush1.bf16.msra.mxu0 %v1961
    %2041 = vmatprep.subr.bf16.mxu0 0
    %2042 = vmatpush1.bf16.msra.mxu0 %v1962
    %2043 = vmatprep.subr.bf16.mxu0 0
    %2044 = vmatpush1.bf16.msra.mxu0 %v1963
    %2045 = vmatprep.subr.bf16.mxu0 0
    %2046 = vmatpush1.bf16.msra.mxu0 0
    %2047 = vmatprep.subr.bf16.mxu0 0
    %2048 = vmatpush1.bf16.msra.mxu0 0
    %2049 = vmatprep.subr.bf16.mxu0 0
    %2050 = vmatpush1.bf16.msra.mxu0 0
    %2051 = vmatprep.subr.bf16.mxu0 0
    %2052 = vmatpush1.bf16.msra.mxu0 0
    %2053 = vmatprep.subr.bf16.mxu0 0
    %2054 = vmatpush1.bf16.msra.mxu0 0
    %2055 = vmatprep.subr.bf16.mxu0 0
    %2056 = vmatpush1.bf16.msra.mxu0 0
    %2057 = vmatprep.subr.bf16.mxu0 0
    %2058 = vmatpush1.bf16.msra.mxu0 0
    %2059 = vmatprep.subr.bf16.mxu0 0
    %2060 = vmatpush1.bf16.msra.mxu0 0
    %2061 = vmatprep.mubr.bf16.mxu0 0
    %2062 = vmatmul.mubr.bf16.gmra.mrb[0].mxu0 %v1788
    %v2063 = vpop.f32.mrb[0].mxu0
    %v2064 = vadd.f32 %v2023, %v2063
    %v2065 = vpop.f32.mrb[0].mxu0
    %v2066 = vpop.f32.mrb[0].mxu0
    %v2067 = vadd.f32 %v2026, %v2066
    %v2068 = vpop.f32.mrb[0].mxu0
    %2069 = vdwg.mxu0
    %v2070 = vpack.c.bf16 %v2067, %v2064
    %v2072 = vunpack.c.l.b16 %v2070
    %v2073 = vunpack.c.h.b16 %v2070
    %v2074 = vpack.c.b16 %v2072, %v2072
    %v2075 = vpack.c.b16 %v2073, %v2073
    %2078 = vst [vmem:[#allocation11] sm:$0xf] %v2074
    %2079 = vst [vmem:[#allocation11 + $0x4] sm:$0xf] %v2075
    // Predicated region
    $region58: #{tpu_custom_call.1} parent=1 // pred_check
      _
    $region59: #{tpu_custom_call.1} parent=1 // pred_check_branch
      %2081 = sbr.rel (0) target = $region61
    $region60: #{tpu_custom_call.1} parent=1 // pred_region
      %s2083 = ssub.s32 128, 128
      %2084 = vsyncadd [#allocation4], %s2083
      %s2085 = sshll.u32 [#allocation11], 4
      %s2086 = int_to_ptr.vmem [resolvable:$true] %s2085
      %2091 = dma.vmem_to_hbm [thread:$0]  %s2086, 128, %s9, [#allocation4], 64, 64, 4
    $region61: #{tpu_custom_call.1} parent=1 // pred_fallthru
      _
    // Predicated region
    $region62: #{tpu_custom_call.1} parent=1 // pred_check
      _
    $region63: #{tpu_custom_call.1} parent=1 // pred_check_branch
      %2093 = sbr.rel (0) target = $region65
    $region64: #{tpu_custom_call.1} parent=1 // pred_region
      %2094 = dma.done [#allocation4], 128
    $region65: #{tpu_custom_call.1} parent=1 // pred_fallthru
      _
    %2095 = vsyncpa [#allocation3], 1
    %2096 = vsyncpa [#allocation6], 1
    %2097 = vsyncpa [#allocation9], 1
    %2098 = vsyncpa [#allocation4], 1

// kernel: tpu_custom_call.1
$region0: #{tpu_custom_call.1}
  #allocation0 [shape = 'u32[]', space=smem, size = 0x4, offset = 0x4, fixed_abs, tag = 'smem constant byte address 0x4 - core index']
  #allocation1 [shape = 'u32[144,128]{1,0:T(1,128)}', space=vmem, size = 0x12000, scoped, tag = 'internal scratch']
  %s0 = inlined_call_operand.hbm [shape: bf16[16,32], index: 0, kind: input, shape index: {}]
  %s1 = inlined_call_operand.hbm [shape: bf16[32,512], index: 1, kind: input, shape index: {}]
  %s2 = inlined_call_operand.vmem [shape: f32[1,512], index: 2, kind: input, shape index: {}]
  %s3 = inlined_call_operand.hbm [shape: bf16[512,384], index: 3, kind: input, shape index: {}]
  %s4 = inlined_call_operand.vmem [shape: f32[1,384], index: 4, kind: input, shape index: {}]
  %s5 = inlined_call_operand.hbm [shape: bf16[384,384], index: 5, kind: input, shape index: {}]
  %s6 = inlined_call_operand.vmem [shape: f32[1,384], index: 6, kind: input, shape index: {}]
  %s7 = inlined_call_operand.hbm [shape: bf16[384,128], index: 7, kind: input, shape index: {}]
  %s8 = inlined_call_operand.vmem [shape: f32[1,128], index: 8, kind: input, shape index: {}]
  %s9 = inlined_call_operand.hbm [shape: bf16[16,128], index: 9, kind: output, shape index: {}]
  %s10 = sld [smem:[#allocation0]]
  $region66: #{tpu_custom_call.1} parent=0
    _
  %s12 = ssub.s32 1, %s10
  %s13 = scalar_select 0, %s12, %s10
  $region1: #{tpu_custom_call.1} parent=0
    #allocation2 [shape = 'u8[4096]{0}', space=vmem, size = 0x1000, scoped, tag = 'input window, operand 0, single buffered']
    #allocation3 [shape = 's32[1]{0}', space=sflag, size = 0x4, scoped, tag = 'scoped memory for tpu_custom_call.1']
    #allocation4 [shape = 's32[1]{0}', space=sflag, size = 0x4, scoped, tag = 'scoped memory for tpu_custom_call.1']
    #allocation5 [shape = 'u8[32768]{0}', space=vmem, size = 0x8000, scoped, tag = 'input window, operand 1, single buffered']
    #allocation6 [shape = 's32[1]{0}', space=sflag, size = 0x4, scoped, tag = 'scoped memory for tpu_custom_call.1']
    #allocation7 [shape = 'u8[393216]{0}', space=vmem, size = 0x60000, scoped, tag = 'input window, operand 3, single buffered']
    #allocation8 [shape = 'u8[294912]{0}', space=vmem, size = 0x48000, scoped, tag = 'input window, operand 5, single buffered']
    #allocation9 [shape = 's32[1]{0}', space=sflag, size = 0x4, scoped, tag = 'scoped memory for tpu_custom_call.1']
    #allocation10 [shape = 'u8[98304]{0}', space=vmem, size = 0x18000, scoped, tag = 'input window, operand 7, single buffered']
    #allocation11 [shape = 'u8[4096]{0}', space=vmem, size = 0x1000, scoped, tag = 'output window, operand 0, single buffered']
    %14 = vsyncpa [#allocation3], 0
    %15 = vsyncpa [#allocation6], 0
    %16 = vsyncpa [#allocation9], 0
    %17 = vsyncpa [#allocation4], 0
    // Predicated region
    $region2: #{tpu_custom_call.1} parent=1 // pred_check
      _
    $region3: #{tpu_custom_call.1} parent=1 // pred_check_branch
      %19 = sbr.rel (0) target = $region5
    $region4: #{tpu_custom_call.1} parent=1 // pred_region
      %s21 = ssub.s32 128, 128
      %22 = vsyncadd [#allocation3], %s21
      %s23 = sshll.u32 [#allocation2], 4
      %s24 = int_to_ptr.vmem [resolvable:$true] %s23
      %29 = dma.hbm_to_vmem [thread:$0]  %s0, 128, %s24, [#allocation3], 64, 64, 4
    $region5: #{tpu_custom_call.1} parent=1 // pred_fallthru
      _
    // Predicated region
    $region6: #{tpu_custom_call.1} parent=1 // pred_check
      _
    $region7: #{tpu_custom_call.1} parent=1 // pred_check_branch
      %31 = sbr.rel (0) target = $region9
    $region8: #{tpu_custom_call.1} parent=1 // pred_region
      %s33 = ssub.s32 1024, 1024
      %34 = vsyncadd [#allocation6], %s33
      %s35 = sshll.u32 [#allocation5], 4
      %s36 = int_to_ptr.vmem [resolvable:$true] %s35
      %41 = dma.hbm_to_vmem [thread:$0]  %s1, 1024, %s36, [#allocation6], 256, 256, 16
    $region9: #{tpu_custom_call.1} parent=1 // pred_fallthru
      _
    // Predicated region
    $region10: #{tpu_custom_call.1} parent=1 // pred_check
      _
    $region11: #{tpu_custom_call.1} parent=1 // pred_check_branch
      %43 = sbr.rel (0) target = $region13
    $region12: #{tpu_custom_call.1} parent=1 // pred_region
      _
    $region13: #{tpu_custom_call.1} parent=1 // pred_fallthru
      _
    // Predicated region
    $region14: #{tpu_custom_call.1} parent=1 // pred_check
      _
    $region15: #{tpu_custom_call.1} parent=1 // pred_check_branch
      %45 = sbr.rel (0) target = $region17
    $region16: #{tpu_custom_call.1} parent=1 // pred_region
      %s47 = ssub.s32 12288, 12288
      %48 = vsyncadd [#allocation6], %s47
      %s49 = sshll.u32 [#allocation7], 4
      %s50 = int_to_ptr.vmem [resolvable:$true] %s49
      %55 = dma.hbm_to_vmem [thread:$0]  %s3, 12288, %s50, [#allocation6], 192, 192, 12
    $region17: #{tpu_custom_call.1} parent=1 // pred_fallthru
      _
    // Predicated region
    $region18: #{tpu_custom_call.1} parent=1 // pred_check
      _
    $region19: #{tpu_custom_call.1} parent=1 // pred_check_branch
      %57 = sbr.rel (0) target = $region21
    $region20: #{tpu_custom_call.1} parent=1 // pred_region
      _
    $region21: #{tpu_custom_call.1} parent=1 // pred_fallthru
      _
    // Predicated region
    $region22: #{tpu_custom_call.1} parent=1 // pred_check
      _
    $region23: #{tpu_custom_call.1} parent=1 // pred_check_branch
      %59 = sbr.rel (0) target = $region25
    $region24: #{tpu_custom_call.1} parent=1 // pred_region
      %s61 = ssub.s32 9216, 9216
      %62 = vsyncadd [#allocation9], %s61
      %s63 = sshll.u32 [#allocation8], 4
      %s64 = int_to_ptr.vmem [resolvable:$true] %s63
      %69 = dma.hbm_to_vmem [thread:$0]  %s5, 9216, %s64, [#allocation9], 192, 192, 12
    $region25: #{tpu_custom_call.1} parent=1 // pred_fallthru
      _
    // Predicated region
    $region26: #{tpu_custom_call.1} parent=1 // pred_check
      _
    $region27: #{tpu_custom_call.1} parent=1 // pred_check_branch
      %71 = sbr.rel (0) target = $region29
    $region28: #{tpu_custom_call.1} parent=1 // pred_region
      _
    $region29: #{tpu_custom_call.1} parent=1 // pred_fallthru
      _
    // Predicated region
    $region30: #{tpu_custom_call.1} parent=1 // pred_check
      _
    $region31: #{tpu_custom_call.1} parent=1 // pred_check_branch
      %73 = sbr.rel (0) target = $region33
    $region32: #{tpu_custom_call.1} parent=1 // pred_region
      %s75 = ssub.s32 3072, 3072
      %76 = vsyncadd [#allocation9], %s75
      %s77 = sshll.u32 [#allocation10], 4
      %s78 = int_to_ptr.vmem [resolvable:$true] %s77
      %83 = dma.hbm_to_vmem [thread:$0]  %s7, 3072, %s78, [#allocation9], 64, 64, 4
    $region33: #{tpu_custom_call.1} parent=1 // pred_fallthru
      _
    // Predicated region
    $region34: #{tpu_custom_call.1} parent=1 // pred_check
      _
    $region35: #{tpu_custom_call.1} parent=1 // pred_check_branch
      %85 = sbr.rel (0) target = $region37
    $region36: #{tpu_custom_call.1} parent=1 // pred_region
      _
    $region37: #{tpu_custom_call.1} parent=1 // pred_fallthru
      _
    // Predicated region
    $region38: #{tpu_custom_call.1} parent=1 // pred_check
      _
    $region39: #{tpu_custom_call.1} parent=1 // pred_check_branch
      %87 = sbr.rel (0) target = $region41
    $region40: #{tpu_custom_call.1} parent=1 // pred_region
      %88 = dma.done [#allocation3], 128
    $region41: #{tpu_custom_call.1} parent=1 // pred_fallthru
      _
    // Predicated region
    $region42: #{tpu_custom_call.1} parent=1 // pred_check
      _
    $region43: #{tpu_custom_call.1} parent=1 // pred_check_branch
      %90 = sbr.rel (0) target = $region45
    $region44: #{tpu_custom_call.1} parent=1 // pred_region
      %91 = dma.done [#allocation6], 1024
    $region45: #{tpu_custom_call.1} parent=1 // pred_fallthru
      _
    // Predicated region
    $region46: #{tpu_custom_call.1} parent=1 // pred_check
      _
    $region47: #{tpu_custom_call.1} parent=1 // pred_check_branch
      %93 = sbr.rel (0) target = $region49
    $region48: #{tpu_custom_call.1} parent=1 // pred_region
      %94 = dma.done [#allocation6], 12288
    $region49: #{tpu_custom_call.1} parent=1 // pred_fallthru
      _
    // Predicated region
    $region50: #{tpu_custom_call.1} parent=1 // pred_check
      _
    $region51: #{tpu_custom_call.1} parent=1 // pred_check_branch
      %96 = sbr.rel (0) target = $region53
    $region52: #{tpu_custom_call.1} parent=1 // pred_region
      %97 = dma.done [#allocation9], 9216
    $region53: #{tpu_custom_call.1} parent=1 // pred_fallthru
      _
    // Predicated region
    $region54: #{tpu_custom_call.1} parent=1 // pred_check
      _
    $region55: #{tpu_custom_call.1} parent=1 // pred_check_branch
      %99 = sbr.rel (0) target = $region57
    $region56: #{tpu_custom_call.1} parent=1 // pred_region
      %100 = dma.done [#allocation9], 3072
    $region57: #{tpu_custom_call.1} parent=1 // pred_fallthru
      _
    %v102 = vld [vmem:[#allocation2] sm:$0xf]
    %v103 = vld [vmem:[#allocation2 + $0x4] sm:$0xf]
    %v104 = vld [vmem:[#allocation5] sm:$0xff]
    %v105 = vld [vmem:[#allocation5 + $0x8] sm:$0xff]
    %v106 = vld [vmem:[#allocation5 + $0x10] sm:$0xff]
    %v107 = vld [vmem:[#allocation5 + $0x18] sm:$0xff]
    %v108 = vld [vmem:[#allocation5 + $0x20] sm:$0xff]
    %v109 = vld [vmem:[#allocation5 + $0x28] sm:$0xff]
    %v110 = vld [vmem:[#allocation5 + $0x30] sm:$0xff]
    %v111 = vld [vmem:[#allocation5 + $0x38] sm:$0xff]
    %v112 = vld [vmem:[%s2] sm:$0xf]
    %v114 = vlaneseq
    %v115 = vshrl.u32 %v114, 7
    %v116 = vsub.s32 0, %v115
    %v117 = vrot.slane %v112, %v116
    %v118 = vlaneseq
    %v119 = vshrl.u32 %v118, 7
    %v120 = vsub.s32 1, %v119
    %v121 = vrot.slane %v112, %v120
    %v122 = vlaneseq
    %v123 = vshrl.u32 %v122, 7
    %v124 = vsub.s32 2, %v123
    %v125 = vrot.slane %v112, %v124
    %v126 = vlaneseq
    %v127 = vshrl.u32 %v126, 7
    %v128 = vsub.s32 3, %v127
    %v129 = vrot.slane %v112, %v128
    %v136 = vunpack.c.l.b16 %v102
    %v137 = vunpack.c.l.b16 %v103
    %v138 = vpack.c.b16 %v137, %v136
    %v147 = vunpack.c.l.b16 %v104
    %v148 = vunpack.c.h.b16 %v104
    %v149 = vunpack.c.l.b16 %v105
    %v150 = vunpack.c.h.b16 %v105
    %v151 = vunpack.c.l.b16 %v106
    %v152 = vunpack.c.h.b16 %v106
    %v153 = vunpack.c.l.b16 %v107
    %v154 = vunpack.c.h.b16 %v107
    %v155 = vunpack.c.l.b16 %v108
    %v156 = vunpack.c.h.b16 %v108
    %v157 = vunpack.c.l.b16 %v109
    %v158 = vunpack.c.h.b16 %v109
    %v159 = vunpack.c.l.b16 %v110
    %v160 = vunpack.c.h.b16 %v110
    %v161 = vunpack.c.l.b16 %v111
    %v162 = vunpack.c.h.b16 %v111
    %v163 = vpack.c.b16 %v151, %v147
    %v164 = vpack.c.b16 %v152, %v148
    %v165 = vpack.c.b16 %v153, %v149
    %v166 = vpack.c.b16 %v154, %v150
    %v167 = vpack.c.b16 %v159, %v155
    %v168 = vpack.c.b16 %v160, %v156
    %v169 = vpack.c.b16 %v161, %v157
    %v170 = vpack.c.b16 %v162, %v158
    %vm179 = vcmask 261120
    %v181 = vsel %vm179, %v138, 0
    %183 = vmatprep.subr.bf16.mxu0 %v164
    %184 = vmatpush1.bf16.msra.mxu0 %v163
    %185 = vmatprep.subr.bf16.mxu0 %v168
    %186 = vmatpush1.bf16.msra.mxu0 %v167
    %187 = vmatprep.subr.bf16.mxu0 0
    %188 = vmatpush1.bf16.msra.mxu0 0
    %189 = vmatprep.subr.bf16.mxu0 0
    %190 = vmatpush1.bf16.msra.mxu0 0
    %191 = vmatprep.subr.bf16.mxu0 0
    %192 = vmatpush1.bf16.msra.mxu0 0
    %193 = vmatprep.subr.bf16.mxu0 0
    %194 = vmatpush1.bf16.msra.mxu0 0
    %195 = vmatprep.subr.bf16.mxu0 0
    %196 = vmatpush1.bf16.msra.mxu0 0
    %197 = vmatprep.subr.bf16.mxu0 0
    %198 = vmatpush1.bf16.msra.mxu0 0
    %199 = vmatprep.subr.bf16.mxu0 0
    %200 = vmatpush1.bf16.msra.mxu0 0
    %201 = vmatprep.subr.bf16.mxu0 0
    %202 = vmatpush1.bf16.msra.mxu0 0
    %203 = vmatprep.subr.bf16.mxu0 0
    %204 = vmatpush1.bf16.msra.mxu0 0
    %205 = vmatprep.subr.bf16.mxu0 0
    %206 = vmatpush1.bf16.msra.mxu0 0
    %207 = vmatprep.subr.bf16.mxu0 0
    %208 = vmatpush1.bf16.msra.mxu0 0
    %209 = vmatprep.subr.bf16.mxu0 0
    %210 = vmatpush1.bf16.msra.mxu0 0
    %211 = vmatprep.subr.bf16.mxu0 0
    %212 = vmatpush1.bf16.msra.mxu0 0
    %213 = vmatprep.subr.bf16.mxu0 0
    %214 = vmatpush1.bf16.msra.mxu0 0
    %215 = vmatprep.mubr.bf16.mxu0 0
    %216 = vmatmul.mubr.bf16.gmra.mrb[0].mxu0 %v181
    %v217 = vpop.f32.mrb[0].mxu0
    %v218 = vadd.f32 %v117, %v217
    %v219 = vpop.f32.mrb[0].mxu0
    %v220 = vadd.f32 %v121, %v219
    %v221 = vpop.f32.mrb[0].mxu0
    %v222 = vadd.f32 %v117, %v221
    %v223 = vpop.f32.mrb[0].mxu0
    %v224 = vadd.f32 %v121, %v223
    %225 = vdwg.mxu0
    %226 = vmatprep.subr.bf16.mxu0 %v166
    %227 = vmatpush1.bf16.msra.mxu0 %v165
    %228 = vmatprep.subr.bf16.mxu0 %v170
    %229 = vmatpush1.bf16.msra.mxu0 %v169
    %230 = vmatprep.subr.bf16.mxu0 0
    %231 = vmatpush1.bf16.msra.mxu0 0
    %232 = vmatprep.subr.bf16.mxu0 0
    %233 = vmatpush1.bf16.msra.mxu0 0
    %234 = vmatprep.subr.bf16.mxu0 0
    %235 = vmatpush1.bf16.msra.mxu0 0
    %236 = vmatprep.subr.bf16.mxu0 0
    %237 = vmatpush1.bf16.msra.mxu0 0
    %238 = vmatprep.subr.bf16.mxu0 0
    %239 = vmatpush1.bf16.msra.mxu0 0
    %240 = vmatprep.subr.bf16.mxu0 0
    %241 = vmatpush1.bf16.msra.mxu0 0
    %242 = vmatprep.subr.bf16.mxu0 0
    %243 = vmatpush1.bf16.msra.mxu0 0
    %244 = vmatprep.subr.bf16.mxu0 0
    %245 = vmatpush1.bf16.msra.mxu0 0
    %246 = vmatprep.subr.bf16.mxu0 0
    %247 = vmatpush1.bf16.msra.mxu0 0
    %248 = vmatprep.subr.bf16.mxu0 0
    %249 = vmatpush1.bf16.msra.mxu0 0
    %250 = vmatprep.subr.bf16.mxu0 0
    %251 = vmatpush1.bf16.msra.mxu0 0
    %252 = vmatprep.subr.bf16.mxu0 0
    %253 = vmatpush1.bf16.msra.mxu0 0
    %254 = vmatprep.subr.bf16.mxu0 0
    %255 = vmatpush1.bf16.msra.mxu0 0
    %256 = vmatprep.subr.bf16.mxu0 0
    %257 = vmatpush1.bf16.msra.mxu0 0
    %258 = vmatprep.mubr.bf16.mxu0 0
    %259 = vmatmul.mubr.bf16.gmra.mrb[0].mxu0 %v181
    %v260 = vpop.f32.mrb[0].mxu0
    %v261 = vadd.f32 %v125, %v260
    %v262 = vpop.f32.mrb[0].mxu0
    %v263 = vadd.f32 %v129, %v262
    %v264 = vpop.f32.mrb[0].mxu0
    %v265 = vadd.f32 %v125, %v264
    %v266 = vpop.f32.mrb[0].mxu0
    %v267 = vadd.f32 %v129, %v266
    %268 = vdwg.mxu0
    %v269 = vmax.f32 %v218, 0.0
    %v270 = vmax.f32 %v220, 0.0
    %v271 = vmax.f32 %v261, 0.0
    %v272 = vmax.f32 %v263, 0.0
    %v273 = vmax.f32 %v222, 0.0
    %v274 = vmax.f32 %v224, 0.0
    %v275 = vmax.f32 %v265, 0.0
    %v276 = vmax.f32 %v267, 0.0
    %v277 = vpack.c.bf16 %v273, %v269
    %v278 = vpack.c.bf16 %v274, %v270
    %v279 = vpack.c.bf16 %v275, %v271
    %v280 = vpack.c.bf16 %v276, %v272
    %v281 = vld [vmem:[#allocation7] sm:$0xff]
    %v282 = vld [vmem:[#allocation7 + $0x8] sm:$0xf]
    %v283 = vld [vmem:[#allocation7 + $0xc] sm:$0xff]
    %v284 = vld [vmem:[#allocation7 + $0x14] sm:$0xf]
    %v285 = vld [vmem:[#allocation7 + $0x18] sm:$0xff]
    %v286 = vld [vmem:[#allocation7 + $0x20] sm:$0xf]
    %v287 = vld [vmem:[#allocation7 + $0x24] sm:$0xff]
    %v288 = vld [vmem:[#allocation7 + $0x2c] sm:$0xf]
    %v289 = vld [vmem:[#allocation7 + $0x30] sm:$0xff]
    %v290 = vld [vmem:[#allocation7 + $0x38] sm:$0xf]
    %v291 = vld [vmem:[#allocation7 + $0x3c] sm:$0xff]
    %v292 = vld [vmem:[#allocation7 + $0x44] sm:$0xf]
    %v293 = vld [vmem:[#allocation7 + $0x48] sm:$0xff]
    %v294 = vld [vmem:[#allocation7 + $0x50] sm:$0xf]
    %v295 = vld [vmem:[#allocation7 + $0x54] sm:$0xff]
    %v296 = vld [vmem:[#allocation7 + $0x5c] sm:$0xf]
    %v297 = vld [vmem:[#allocation7 + $0x60] sm:$0xff]
    %v298 = vld [vmem:[#allocation7 + $0x68] sm:$0xf]
    %v299 = vld [vmem:[#allocation7 + $0x6c] sm:$0xff]
    %v300 = vld [vmem:[#allocation7 + $0x74] sm:$0xf]
    %v301 = vld [vmem:[#allocation7 + $0x78] sm:$0xff]
    %v302 = vld [vmem:[#allocation7 + $0x80] sm:$0xf]
    %v303 = vld [vmem:[#allocation7 + $0x84] sm:$0xff]
    %v304 = vld [vmem:[#allocation7 + $0x8c] sm:$0xf]
    %v305 = vld [vmem:[#allocation7 + $0x90] sm:$0xff]
    %v306 = vld [vmem:[#allocation7 + $0x98] sm:$0xf]
    %v307 = vld [vmem:[#allocation7 + $0x9c] sm:$0xff]
    %v308 = vld [vmem:[#allocation7 + $0xa4] sm:$0xf]
    %v309 = vld [vmem:[#allocation7 + $0xa8] sm:$0xff]
    %v310 = vld [vmem:[#allocation7 + $0xb0] sm:$0xf]
    %v311 = vld [vmem:[#allocation7 + $0xb4] sm:$0xff]
    %v312 = vld [vmem:[#allocation7 + $0xbc] sm:$0xf]
    %v313 = vld [vmem:[#allocation7 + $0xc0] sm:$0xff]
    %v314 = vld [vmem:[#allocation7 + $0xc8] sm:$0xf]
    %v315 = vld [vmem:[#allocation7 + $0xcc] sm:$0xff]
    %v316 = vld [vmem:[#allocation7 + $0xd4] sm:$0xf]
    %v317 = vld [vmem:[#allocation7 + $0xd8] sm:$0xff]
    %v318 = vld [vmem:[#allocation7 + $0xe0] sm:$0xf]
    %v319 = vld [vmem:[#allocation7 + $0xe4] sm:$0xff]
    %v320 = vld [vmem:[#allocation7 + $0xec] sm:$0xf]
    %v321 = vld [vmem:[#allocation7 + $0xf0] sm:$0xff]
    %v322 = vld [vmem:[#allocation7 + $0xf8] sm:$0xf]
    %v323 = vld [vmem:[#allocation7 + $0xfc] sm:$0xff]
    %v324 = vld [vmem:[#allocation7 + $0x104] sm:$0xf]
    %v325 = vld [vmem:[#allocation7 + $0x108] sm:$0xff]
    %v326 = vld [vmem:[#allocation7 + $0x110] sm:$0xf]
    %v327 = vld [vmem:[#allocation7 + $0x114] sm:$0xff]
    %v328 = vld [vmem:[#allocation7 + $0x11c] sm:$0xf]
    %v329 = vld [vmem:[#allocation7 + $0x120] sm:$0xff]
    %v330 = vld [vmem:[#allocation7 + $0x128] sm:$0xf]
    %v331 = vld [vmem:[#allocation7 + $0x12c] sm:$0xff]
    %v332 = vld [vmem:[#allocation7 + $0x134] sm:$0xf]
    %v333 = vld [vmem:[#allocation7 + $0x138] sm:$0xff]
    %v334 = vld [vmem:[#allocation7 + $0x140] sm:$0xf]
    %v335 = vld [vmem:[#allocation7 + $0x144] sm:$0xff]
    %v336 = vld [vmem:[#allocation7 + $0x14c] sm:$0xf]
    %v337 = vld [vmem:[#allocation7 + $0x150] sm:$0xff]
    %v338 = vld [vmem:[#allocation7 + $0x158] sm:$0xf]
    %v339 = vld [vmem:[#allocation7 + $0x15c] sm:$0xff]
    %v340 = vld [vmem:[#allocation7 + $0x164] sm:$0xf]
    %v341 = vld [vmem:[#allocation7 + $0x168] sm:$0xff]
    %v342 = vld [vmem:[#allocation7 + $0x170] sm:$0xf]
    %v343 = vld [vmem:[#allocation7 + $0x174] sm:$0xff]
    %v344 = vld [vmem:[#allocation7 + $0x17c] sm:$0xf]
    %v345 = vld [vmem:[#allocation7 + $0x180] sm:$0xff]
    %v346 = vld [vmem:[#allocation7 + $0x188] sm:$0xf]
    %v347 = vld [vmem:[#allocation7 + $0x18c] sm:$0xff]
    %v348 = vld [vmem:[#allocation7 + $0x194] sm:$0xf]
    %v349 = vld [vmem:[#allocation7 + $0x198] sm:$0xff]
    %v350 = vld [vmem:[#allocation7 + $0x1a0] sm:$0xf]
    %v351 = vld [vmem:[#allocation7 + $0x1a4] sm:$0xff]
    %v352 = vld [vmem:[#allocation7 + $0x1ac] sm:$0xf]
    %v353 = vld [vmem:[#allocation7 + $0x1b0] sm:$0xff]
    %v354 = vld [vmem:[#allocation7 + $0x1b8] sm:$0xf]
    %v355 = vld [vmem:[#allocation7 + $0x1bc] sm:$0xff]
    %v356 = vld [vmem:[#allocation7 + $0x1c4] sm:$0xf]
    %v357 = vld [vmem:[#allocation7 + $0x1c8] sm:$0xff]
    %v358 = vld [vmem:[#allocation7 + $0x1d0] sm:$0xf]
    %v359 = vld [vmem:[#allocation7 + $0x1d4] sm:$0xff]
    %v360 = vld [vmem:[#allocation7 + $0x1dc] sm:$0xf]
    %v361 = vld [vmem:[#allocation7 + $0x1e0] sm:$0xff]
    %v362 = vld [vmem:[#allocation7 + $0x1e8] sm:$0xf]
    %v363 = vld [vmem:[#allocation7 + $0x1ec] sm:$0xff]
    %v364 = vld [vmem:[#allocation7 + $0x1f4] sm:$0xf]
    %v365 = vld [vmem:[#allocation7 + $0x1f8] sm:$0xff]
    %v366 = vld [vmem:[#allocation7 + $0x200] sm:$0xf]
    %v367 = vld [vmem:[#allocation7 + $0x204] sm:$0xff]
    %v368 = vld [vmem:[#allocation7 + $0x20c] sm:$0xf]
    %v369 = vld [vmem:[#allocation7 + $0x210] sm:$0xff]
    %v370 = vld [vmem:[#allocation7 + $0x218] sm:$0xf]
    %v371 = vld [vmem:[#allocation7 + $0x21c] sm:$0xff]
    %v372 = vld [vmem:[#allocation7 + $0x224] sm:$0xf]
    %v373 = vld [vmem:[#allocation7 + $0x228] sm:$0xff]
    %v374 = vld [vmem:[#allocation7 + $0x230] sm:$0xf]
    %v375 = vld [vmem:[#allocation7 + $0x234] sm:$0xff]
    %v376 = vld [vmem:[#allocation7 + $0x23c] sm:$0xf]
    %v377 = vld [vmem:[#allocation7 + $0x240] sm:$0xff]
    %v378 = vld [vmem:[#allocation7 + $0x248] sm:$0xf]
    %v379 = vld [vmem:[#allocation7 + $0x24c] sm:$0xff]
    %v380 = vld [vmem:[#allocation7 + $0x254] sm:$0xf]
    %v381 = vld [vmem:[#allocation7 + $0x258] sm:$0xff]
    %v382 = vld [vmem:[#allocation7 + $0x260] sm:$0xf]
    %v383 = vld [vmem:[#allocation7 + $0x264] sm:$0xff]
    %v384 = vld [vmem:[#allocation7 + $0x26c] sm:$0xf]
    %v385 = vld [vmem:[#allocation7 + $0x270] sm:$0xff]
    %v386 = vld [vmem:[#allocation7 + $0x278] sm:$0xf]
    %v387 = vld [vmem:[#allocation7 + $0x27c] sm:$0xff]
    %v388 = vld [vmem:[#allocation7 + $0x284] sm:$0xf]
    %v389 = vld [vmem:[#allocation7 + $0x288] sm:$0xff]
    %v390 = vld [vmem:[#allocation7 + $0x290] sm:$0xf]
    %v391 = vld [vmem:[#allocation7 + $0x294] sm:$0xff]
    %v392 = vld [vmem:[#allocation7 + $0x29c] sm:$0xf]
    %v393 = vld [vmem:[#allocation7 + $0x2a0] sm:$0xff]
    %v394 = vld [vmem:[#allocation7 + $0x2a8] sm:$0xf]
    %v395 = vld [vmem:[#allocation7 + $0x2ac] sm:$0xff]
    %v396 = vld [vmem:[#allocation7 + $0x2b4] sm:$0xf]
    %v397 = vld [vmem:[#allocation7 + $0x2b8] sm:$0xff]
    %v398 = vld [vmem:[#allocation7 + $0x2c0] sm:$0xf]
    %v399 = vld [vmem:[#allocation7 + $0x2c4] sm:$0xff]
    %v400 = vld [vmem:[#allocation7 + $0x2cc] sm:$0xf]
    %v401 = vld [vmem:[#allocation7 + $0x2d0] sm:$0xff]
    %v402 = vld [vmem:[#allocation7 + $0x2d8] sm:$0xf]
    %v403 = vld [vmem:[#allocation7 + $0x2dc] sm:$0xff]
    %v404 = vld [vmem:[#allocation7 + $0x2e4] sm:$0xf]
    %v405 = vld [vmem:[#allocation7 + $0x2e8] sm:$0xff]
    %v406 = vld [vmem:[#allocation7 + $0x2f0] sm:$0xf]
    %v407 = vld [vmem:[#allocation7 + $0x2f4] sm:$0xff]
    %v408 = vld [vmem:[#allocation7 + $0x2fc] sm:$0xf]
    %v409 = vld [vmem:[%s4] sm:$0x7]
    %v411 = vlaneseq
    %v412 = vshrl.u32 %v411, 7
    %v413 = vsub.s32 0, %v412
    %v414 = vrot.slane %v409, %v413
    %v415 = vlaneseq
    %v416 = vshrl.u32 %v415, 7
    %v417 = vsub.s32 1, %v416
    %v418 = vrot.slane %v409, %v417
    %v419 = vlaneseq
    %v420 = vshrl.u32 %v419, 7
    %v421 = vsub.s32 2, %v420
    %v422 = vrot.slane %v409, %v421
    %v554 = vunpack.c.l.b16 %v281
    %v555 = vunpack.c.h.b16 %v281
    %v556 = vunpack.c.l.b16 %v282
    %v557 = vunpack.c.l.b16 %v283
    %v558 = vunpack.c.h.b16 %v283
    %v559 = vunpack.c.l.b16 %v284
    %v560 = vunpack.c.l.b16 %v285
    %v561 = vunpack.c.h.b16 %v285
    %v562 = vunpack.c.l.b16 %v286
    %v563 = vunpack.c.l.b16 %v287
    %v564 = vunpack.c.h.b16 %v287
    %v565 = vunpack.c.l.b16 %v288
    %v566 = vunpack.c.l.b16 %v289
    %v567 = vunpack.c.h.b16 %v289
    %v568 = vunpack.c.l.b16 %v290
    %v569 = vunpack.c.l.b16 %v291
    %v570 = vunpack.c.h.b16 %v291
    %v571 = vunpack.c.l.b16 %v292
    %v572 = vunpack.c.l.b16 %v293
    %v573 = vunpack.c.h.b16 %v293
    %v574 = vunpack.c.l.b16 %v294
    %v575 = vunpack.c.l.b16 %v295
    %v576 = vunpack.c.h.b16 %v295
    %v577 = vunpack.c.l.b16 %v296
    %v578 = vunpack.c.l.b16 %v297
    %v579 = vunpack.c.h.b16 %v297
    %v580 = vunpack.c.l.b16 %v298
    %v581 = vunpack.c.l.b16 %v299
    %v582 = vunpack.c.h.b16 %v299
    %v583 = vunpack.c.l.b16 %v300
    %v584 = vunpack.c.l.b16 %v301
    %v585 = vunpack.c.h.b16 %v301
    %v586 = vunpack.c.l.b16 %v302
    %v587 = vunpack.c.l.b16 %v303
    %v588 = vunpack.c.h.b16 %v303
    %v589 = vunpack.c.l.b16 %v304
    %v590 = vunpack.c.l.b16 %v305
    %v591 = vunpack.c.h.b16 %v305
    %v592 = vunpack.c.l.b16 %v306
    %v593 = vunpack.c.l.b16 %v307
    %v594 = vunpack.c.h.b16 %v307
    %v595 = vunpack.c.l.b16 %v308
    %v596 = vunpack.c.l.b16 %v309
    %v597 = vunpack.c.h.b16 %v309
    %v598 = vunpack.c.l.b16 %v310
    %v599 = vunpack.c.l.b16 %v311
    %v600 = vunpack.c.h.b16 %v311
    %v601 = vunpack.c.l.b16 %v312
    %v602 = vunpack.c.l.b16 %v313
    %v603 = vunpack.c.h.b16 %v313
    %v604 = vunpack.c.l.b16 %v314
    %v605 = vunpack.c.l.b16 %v315
    %v606 = vunpack.c.h.b16 %v315
    %v607 = vunpack.c.l.b16 %v316
    %v608 = vunpack.c.l.b16 %v317
    %v609 = vunpack.c.h.b16 %v317
    %v610 = vunpack.c.l.b16 %v318
    %v611 = vunpack.c.l.b16 %v319
    %v612 = vunpack.c.h.b16 %v319
    %v613 = vunpack.c.l.b16 %v320
    %v614 = vunpack.c.l.b16 %v321
    %v615 = vunpack.c.h.b16 %v321
    %v616 = vunpack.c.l.b16 %v322
    %v617 = vunpack.c.l.b16 %v323
    %v618 = vunpack.c.h.b16 %v323
    %v619 = vunpack.c.l.b16 %v324
    %v620 = vunpack.c.l.b16 %v325
    %v621 = vunpack.c.h.b16 %v325
    %v622 = vunpack.c.l.b16 %v326
    %v623 = vunpack.c.l.b16 %v327
    %v624 = vunpack.c.h.b16 %v327
    %v625 = vunpack.c.l.b16 %v328
    %v626 = vunpack.c.l.b16 %v329
    %v627 = vunpack.c.h.b16 %v329
    %v628 = vunpack.c.l.b16 %v330
    %v629 = vunpack.c.l.b16 %v331
    %v630 = vunpack.c.h.b16 %v331
    %v631 = vunpack.c.l.b16 %v332
    %v632 = vunpack.c.l.b16 %v333
    %v633 = vunpack.c.h.b16 %v333
    %v634 = vunpack.c.l.b16 %v334
    %v635 = vunpack.c.l.b16 %v335
    %v636 = vunpack.c.h.b16 %v335
    %v637 = vunpack.c.l.b16 %v336
    %v638 = vunpack.c.l.b16 %v337
    %v639 = vunpack.c.h.b16 %v337
    %v640 = vunpack.c.l.b16 %v338
    %v641 = vunpack.c.l.b16 %v339
    %v642 = vunpack.c.h.b16 %v339
    %v643 = vunpack.c.l.b16 %v340
    %v644 = vunpack.c.l.b16 %v341
    %v645 = vunpack.c.h.b16 %v341
    %v646 = vunpack.c.l.b16 %v342
    %v647 = vunpack.c.l.b16 %v343
    %v648 = vunpack.c.h.b16 %v343
    %v649 = vunpack.c.l.b16 %v344
    %v650 = vunpack.c.l.b16 %v345
    %v651 = vunpack.c.h.b16 %v345
    %v652 = vunpack.c.l.b16 %v346
    %v653 = vunpack.c.l.b16 %v347
    %v654 = vunpack.c.h.b16 %v347
    %v655 = vunpack.c.l.b16 %v348
    %v656 = vunpack.c.l.b16 %v349
    %v657 = vunpack.c.h.b16 %v349
    %v658 = vunpack.c.l.b16 %v350
    %v659 = vunpack.c.l.b16 %v351
    %v660 = vunpack.c.h.b16 %v351
    %v661 = vunpack.c.l.b16 %v352
    %v662 = vunpack.c.l.b16 %v353
    %v663 = vunpack.c.h.b16 %v353
    %v664 = vunpack.c.l.b16 %v354
    %v665 = vunpack.c.l.b16 %v355
    %v666 = vunpack.c.h.b16 %v355
    %v667 = vunpack.c.l.b16 %v356
    %v668 = vunpack.c.l.b16 %v357
    %v669 = vunpack.c.h.b16 %v357
    %v670 = vunpack.c.l.b16 %v358
    %v671 = vunpack.c.l.b16 %v359
    %v672 = vunpack.c.h.b16 %v359
    %v673 = vunpack.c.l.b16 %v360
    %v674 = vunpack.c.l.b16 %v361
    %v675 = vunpack.c.h.b16 %v361
    %v676 = vunpack.c.l.b16 %v362
    %v677 = vunpack.c.l.b16 %v363
    %v678 = vunpack.c.h.b16 %v363
    %v679 = vunpack.c.l.b16 %v364
    %v680 = vunpack.c.l.b16 %v365
    %v681 = vunpack.c.h.b16 %v365
    %v682 = vunpack.c.l.b16 %v366
    %v683 = vunpack.c.l.b16 %v367
    %v684 = vunpack.c.h.b16 %v367
    %v685 = vunpack.c.l.b16 %v368
    %v686 = vunpack.c.l.b16 %v369
    %v687 = vunpack.c.h.b16 %v369
    %v688 = vunpack.c.l.b16 %v370
    %v689 = vunpack.c.l.b16 %v371
    %v690 = vunpack.c.h.b16 %v371
    %v691 = vunpack.c.l.b16 %v372
    %v692 = vunpack.c.l.b16 %v373
    %v693 = vunpack.c.h.b16 %v373
    %v694 = vunpack.c.l.b16 %v374
    %v695 = vunpack.c.l.b16 %v375
    %v696 = vunpack.c.h.b16 %v375
    %v697 = vunpack.c.l.b16 %v376
    %v698 = vunpack.c.l.b16 %v377
    %v699 = vunpack.c.h.b16 %v377
    %v700 = vunpack.c.l.b16 %v378
    %v701 = vunpack.c.l.b16 %v379
    %v702 = vunpack.c.h.b16 %v379
    %v703 = vunpack.c.l.b16 %v380
    %v704 = vunpack.c.l.b16 %v381
    %v705 = vunpack.c.h.b16 %v381
    %v706 = vunpack.c.l.b16 %v382
    %v707 = vunpack.c.l.b16 %v383
    %v708 = vunpack.c.h.b16 %v383
    %v709 = vunpack.c.l.b16 %v384
    %v710 = vunpack.c.l.b16 %v385
    %v711 = vunpack.c.h.b16 %v385
    %v712 = vunpack.c.l.b16 %v386
    %v713 = vunpack.c.l.b16 %v387
    %v714 = vunpack.c.h.b16 %v387
    %v715 = vunpack.c.l.b16 %v388
    %v716 = vunpack.c.l.b16 %v389
    %v717 = vunpack.c.h.b16 %v389
    %v718 = vunpack.c.l.b16 %v390
    %v719 = vunpack.c.l.b16 %v391
    %v720 = vunpack.c.h.b16 %v391
    %v721 = vunpack.c.l.b16 %v392
    %v722 = vunpack.c.l.b16 %v393
    %v723 = vunpack.c.h.b16 %v393
    %v724 = vunpack.c.l.b16 %v394
    %v725 = vunpack.c.l.b16 %v395
    %v726 = vunpack.c.h.b16 %v395
    %v727 = vunpack.c.l.b16 %v396
    %v728 = vunpack.c.l.b16 %v397
    %v729 = vunpack.c.h.b16 %v397
    %v730 = vunpack.c.l.b16 %v398
    %v731 = vunpack.c.l.b16 %v399
    %v732 = vunpack.c.h.b16 %v399
    %v733 = vunpack.c.l.b16 %v400
    %v734 = vunpack.c.l.b16 %v401
    %v735 = vunpack.c.h.b16 %v401
    %v736 = vunpack.c.l.b16 %v402
    %v737 = vunpack.c.l.b16 %v403
    %v738 = vunpack.c.h.b16 %v403
    %v739 = vunpack.c.l.b16 %v404
    %v740 = vunpack.c.l.b16 %v405
    %v741 = vunpack.c.h.b16 %v405
    %v742 = vunpack.c.l.b16 %v406
    %v743 = vunpack.c.l.b16 %v407
    %v744 = vunpack.c.h.b16 %v407
    %v745 = vunpack.c.l.b16 %v408
    %v746 = vpack.c.b16 %v557, %v554
    %v747 = vpack.c.b16 %v558, %v555
    %v748 = vpack.c.b16 %v559, %v556
    %v749 = vpack.c.b16 %v563, %v560
    %v750 = vpack.c.b16 %v564, %v561
    %v751 = vpack.c.b16 %v565, %v562
    %v752 = vpack.c.b16 %v569, %v566
    %v753 = vpack.c.b16 %v570, %v567
    %v754 = vpack.c.b16 %v571, %v568
    %v755 = vpack.c.b16 %v575, %v572
    %v756 = vpack.c.b16 %v576, %v573
    %v757 = vpack.c.b16 %v577, %v574
    %v758 = vpack.c.b16 %v581, %v578
    %v759 = vpack.c.b16 %v582, %v579
    %v760 = vpack.c.b16 %v583, %v580
    %v761 = vpack.c.b16 %v587, %v584
    %v762 = vpack.c.b16 %v588, %v585
    %v763 = vpack.c.b16 %v589, %v586
    %v764 = vpack.c.b16 %v593, %v590
    %v765 = vpack.c.b16 %v594, %v591
    %v766 = vpack.c.b16 %v595, %v592
    %v767 = vpack.c.b16 %v599, %v596
    %v768 = vpack.c.b16 %v600, %v597
    %v769 = vpack.c.b16 %v601, %v598
    %v770 = vpack.c.b16 %v605, %v602
    %v771 = vpack.c.b16 %v606, %v603
    %v772 = vpack.c.b16 %v607, %v604
    %v773 = vpack.c.b16 %v611, %v608
    %v774 = vpack.c.b16 %v612, %v609
    %v775 = vpack.c.b16 %v613, %v610
    %v776 = vpack.c.b16 %v617, %v614
    %v777 = vpack.c.b16 %v618, %v615
    %v778 = vpack.c.b16 %v619, %v616
    %v779 = vpack.c.b16 %v623, %v620
    %v780 = vpack.c.b16 %v624, %v621
    %v781 = vpack.c.b16 %v625, %v622
    %v782 = vpack.c.b16 %v629, %v626
    %v783 = vpack.c.b16 %v630, %v627
    %v784 = vpack.c.b16 %v631, %v628
    %v785 = vpack.c.b16 %v635, %v632
    %v786 = vpack.c.b16 %v636, %v633
    %v787 = vpack.c.b16 %v637, %v634
    %v788 = vpack.c.b16 %v641, %v638
    %v789 = vpack.c.b16 %v642, %v639
    %v790 = vpack.c.b16 %v643, %v640
    %v791 = vpack.c.b16 %v647, %v644
    %v792 = vpack.c.b16 %v648, %v645
    %v793 = vpack.c.b16 %v649, %v646
    %v794 = vpack.c.b16 %v653, %v650
    %v795 = vpack.c.b16 %v654, %v651
    %v796 = vpack.c.b16 %v655, %v652
    %v797 = vpack.c.b16 %v659, %v656
    %v798 = vpack.c.b16 %v660, %v657
    %v799 = vpack.c.b16 %v661, %v658
    %v800 = vpack.c.b16 %v665, %v662
    %v801 = vpack.c.b16 %v666, %v663
    %v802 = vpack.c.b16 %v667, %v664
    %v803 = vpack.c.b16 %v671, %v668
    %v804 = vpack.c.b16 %v672, %v669
    %v805 = vpack.c.b16 %v673, %v670
    %v806 = vpack.c.b16 %v677, %v674
    %v807 = vpack.c.b16 %v678, %v675
    %v808 = vpack.c.b16 %v679, %v676
    %v809 = vpack.c.b16 %v683, %v680
    %v810 = vpack.c.b16 %v684, %v681
    %v811 = vpack.c.b16 %v685, %v682
    %v812 = vpack.c.b16 %v689, %v686
    %v813 = vpack.c.b16 %v690, %v687
    %v814 = vpack.c.b16 %v691, %v688
    %v815 = vpack.c.b16 %v695, %v692
    %v816 = vpack.c.b16 %v696, %v693
    %v817 = vpack.c.b16 %v697, %v694
    %v818 = vpack.c.b16 %v701, %v698
    %v819 = vpack.c.b16 %v702, %v699
    %v820 = vpack.c.b16 %v703, %v700
    %v821 = vpack.c.b16 %v707, %v704
    %v822 = vpack.c.b16 %v708, %v705
    %v823 = vpack.c.b16 %v709, %v706
    %v824 = vpack.c.b16 %v713, %v710
    %v825 = vpack.c.b16 %v714, %v711
    %v826 = vpack.c.b16 %v715, %v712
    %v827 = vpack.c.b16 %v719, %v716
    %v828 = vpack.c.b16 %v720, %v717
    %v829 = vpack.c.b16 %v721, %v718
    %v830 = vpack.c.b16 %v725, %v722
    %v831 = vpack.c.b16 %v726, %v723
    %v832 = vpack.c.b16 %v727, %v724
    %v833 = vpack.c.b16 %v731, %v728
    %v834 = vpack.c.b16 %v732, %v729
    %v835 = vpack.c.b16 %v733, %v730
    %v836 = vpack.c.b16 %v737, %v734
    %v837 = vpack.c.b16 %v738, %v735
    %v838 = vpack.c.b16 %v739, %v736
    %v839 = vpack.c.b16 %v743, %v740
    %v840 = vpack.c.b16 %v744, %v741
    %v841 = vpack.c.b16 %v745, %v742
    %938 = vmatprep.subr.bf16.mxu0 %v747
    %939 = vmatpush1.bf16.msra.mxu0 %v746
    %940 = vmatprep.subr.bf16.mxu0 %v750
    %941 = vmatpush1.bf16.msra.mxu0 %v749
    %942 = vmatprep.subr.bf16.mxu0 %v753
    %943 = vmatpush1.bf16.msra.mxu0 %v752
    %944 = vmatprep.subr.bf16.mxu0 %v756
    %945 = vmatpush1.bf16.msra.mxu0 %v755
    %946 = vmatprep.subr.bf16.mxu0 %v759
    %947 = vmatpush1.bf16.msra.mxu0 %v758
    %948 = vmatprep.subr.bf16.mxu0 %v762
    %949 = vmatpush1.bf16.msra.mxu0 %v761
    %950 = vmatprep.subr.bf16.mxu0 %v765
    %951 = vmatpush1.bf16.msra.mxu0 %v764
    %952 = vmatprep.subr.bf16.mxu0 %v768
    %953 = vmatpush1.bf16.msra.mxu0 %v767
    %954 = vmatprep.subr.bf16.mxu0 %v771
    %955 = vmatpush1.bf16.msra.mxu0 %v770
    %956 = vmatprep.subr.bf16.mxu0 %v774
    %957 = vmatpush1.bf16.msra.mxu0 %v773
    %958 = vmatprep.subr.bf16.mxu0 %v777
    %959 = vmatpush1.bf16.msra.mxu0 %v776
    %960 = vmatprep.subr.bf16.mxu0 %v780
    %961 = vmatpush1.bf16.msra.mxu0 %v779
    %962 = vmatprep.subr.bf16.mxu0 %v783
    %963 = vmatpush1.bf16.msra.mxu0 %v782
    %964 = vmatprep.subr.bf16.mxu0 %v786
    %965 = vmatpush1.bf16.msra.mxu0 %v785
    %966 = vmatprep.subr.bf16.mxu0 %v789
    %967 = vmatpush1.bf16.msra.mxu0 %v788
    %968 = vmatprep.subr.bf16.mxu0 %v792
    %969 = vmatpush1.bf16.msra.mxu0 %v791
    %970 = vmatprep.mubr.bf16.mxu0 %v278
    %971 = vmatmul.mubr.bf16.gmra.mrb[0].mxu0 %v277
    %v972 = vpop.f32.mrb[0].mxu0
    %v973 = vadd.f32 %v414, %v972
    %v974 = vpop.f32.mrb[0].mxu0
    %v975 = vadd.f32 %v418, %v974
    %v976 = vpop.f32.mrb[0].mxu0
    %v977 = vadd.f32 %v414, %v976
    %v978 = vpop.f32.mrb[0].mxu0
    %v979 = vadd.f32 %v418, %v978
    %980 = vdwg.mxu0
    %981 = vmatprep.subr.bf16.mxu0 %v795
    %982 = vmatpush1.bf16.msra.mxu0 %v794
    %983 = vmatprep.subr.bf16.mxu0 %v798
    %984 = vmatpush1.bf16.msra.mxu0 %v797
    %985 = vmatprep.subr.bf16.mxu0 %v801
    %986 = vmatpush1.bf16.msra.mxu0 %v800
    %987 = vmatprep.subr.bf16.mxu0 %v804
    %988 = vmatpush1.bf16.msra.mxu0 %v803
    %989 = vmatprep.subr.bf16.mxu0 %v807
    %990 = vmatpush1.bf16.msra.mxu0 %v806
    %991 = vmatprep.subr.bf16.mxu0 %v810
    %992 = vmatpush1.bf16.msra.mxu0 %v809
    %993 = vmatprep.subr.bf16.mxu0 %v813
    %994 = vmatpush1.bf16.msra.mxu0 %v812
    %995 = vmatprep.subr.bf16.mxu0 %v816
    %996 = vmatpush1.bf16.msra.mxu0 %v815
    %997 = vmatprep.subr.bf16.mxu0 %v819
    %998 = vmatpush1.bf16.msra.mxu0 %v818
    %999 = vmatprep.subr.bf16.mxu0 %v822
    %1000 = vmatpush1.bf16.msra.mxu0 %v821
    %1001 = vmatprep.subr.bf16.mxu0 %v825
    %1002 = vmatpush1.bf16.msra.mxu0 %v824
    %1003 = vmatprep.subr.bf16.mxu0 %v828
    %1004 = vmatpush1.bf16.msra.mxu0 %v827
    %1005 = vmatprep.subr.bf16.mxu0 %v831
    %1006 = vmatpush1.bf16.msra.mxu0 %v830
    %1007 = vmatprep.subr.bf16.mxu0 %v834
    %1008 = vmatpush1.bf16.msra.mxu0 %v833
    %1009 = vmatprep.subr.bf16.mxu0 %v837
    %1010 = vmatpush1.bf16.msra.mxu0 %v836
    %1011 = vmatprep.subr.bf16.mxu0 %v840
    %1012 = vmatpush1.bf16.msra.mxu0 %v839
    %1013 = vmatprep.mubr.bf16.mxu0 %v280
    %1014 = vmatmul.mubr.bf16.gmra.mrb[0].mxu0 %v279
    %v1015 = vpop.f32.mrb[0].mxu0
    %v1016 = vadd.f32 %v973, %v1015
    %v1017 = vpop.f32.mrb[0].mxu0
    %v1018 = vadd.f32 %v975, %v1017
    %v1019 = vpop.f32.mrb[0].mxu0
    %v1020 = vadd.f32 %v977, %v1019
    %v1021 = vpop.f32.mrb[0].mxu0
    %v1022 = vadd.f32 %v979, %v1021
    %1023 = vdwg.mxu0
    %1024 = vmatprep.subr.bf16.mxu0 0
    %1025 = vmatpush1.bf16.msra.mxu0 %v748
    %1026 = vmatprep.subr.bf16.mxu0 0
    %1027 = vmatpush1.bf16.msra.mxu0 %v751
    %1028 = vmatprep.subr.bf16.mxu0 0
    %1029 = vmatpush1.bf16.msra.mxu0 %v754
    %1030 = vmatprep.subr.bf16.mxu0 0
    %1031 = vmatpush1.bf16.msra.mxu0 %v757
    %1032 = vmatprep.subr.bf16.mxu0 0
    %1033 = vmatpush1.bf16.msra.mxu0 %v760
    %1034 = vmatprep.subr.bf16.mxu0 0
    %1035 = vmatpush1.bf16.msra.mxu0 %v763
    %1036 = vmatprep.subr.bf16.mxu0 0
    %1037 = vmatpush1.bf16.msra.mxu0 %v766
    %1038 = vmatprep.subr.bf16.mxu0 0
    %1039 = vmatpush1.bf16.msra.mxu0 %v769
    %1040 = vmatprep.subr.bf16.mxu0 0
    %1041 = vmatpush1.bf16.msra.mxu0 %v772
    %1042 = vmatprep.subr.bf16.mxu0 0
    %1043 = vmatpush1.bf16.msra.mxu0 %v775
    %1044 = vmatprep.subr.bf16.mxu0 0
    %1045 = vmatpush1.bf16.msra.mxu0 %v778
    %1046 = vmatprep.subr.bf16.mxu0 0
    %1047 = vmatpush1.bf16.msra.mxu0 %v781
    %1048 = vmatprep.subr.bf16.mxu0 0
    %1049 = vmatpush1.bf16.msra.mxu0 %v784
    %1050 = vmatprep.subr.bf16.mxu0 0
    %1051 = vmatpush1.bf16.msra.mxu0 %v787
    %1052 = vmatprep.subr.bf16.mxu0 0
    %1053 = vmatpush1.bf16.msra.mxu0 %v790
    %1054 = vmatprep.subr.bf16.mxu0 0
    %1055 = vmatpush1.bf16.msra.mxu0 %v793
    %1056 = vmatprep.mubr.bf16.mxu0 %v278
    %1057 = vmatmul.mubr.bf16.gmra.mrb[0].mxu0 %v277
    %v1058 = vpop.f32.mrb[0].mxu0
    %v1059 = vadd.f32 %v422, %v1058
    %v1060 = vpop.f32.mrb[0].mxu0
    %v1061 = vpop.f32.mrb[0].mxu0
    %v1062 = vadd.f32 %v422, %v1061
    %v1063 = vpop.f32.mrb[0].mxu0
    %1064 = vdwg.mxu0
    %1065 = vmatprep.subr.bf16.mxu0 0
    %1066 = vmatpush1.bf16.msra.mxu0 %v796
    %1067 = vmatprep.subr.bf16.mxu0 0
    %1068 = vmatpush1.bf16.msra.mxu0 %v799
    %1069 = vmatprep.subr.bf16.mxu0 0
    %1070 = vmatpush1.bf16.msra.mxu0 %v802
    %1071 = vmatprep.subr.bf16.mxu0 0
    %1072 = vmatpush1.bf16.msra.mxu0 %v805
    %1073 = vmatprep.subr.bf16.mxu0 0
    %1074 = vmatpush1.bf16.msra.mxu0 %v808
    %1075 = vmatprep.subr.bf16.mxu0 0
    %1076 = vmatpush1.bf16.msra.mxu0 %v811
    %1077 = vmatprep.subr.bf16.mxu0 0
    %1078 = vmatpush1.bf16.msra.mxu0 %v814
    %1079 = vmatprep.subr.bf16.mxu0 0
    %1080 = vmatpush1.bf16.msra.mxu0 %v817
    %1081 = vmatprep.subr.bf16.mxu0 0
    %1082 = vmatpush1.bf16.msra.mxu0 %v820
    %1083 = vmatprep.subr.bf16.mxu0 0
    %1084 = vmatpush1.bf16.msra.mxu0 %v823
    %1085 = vmatprep.subr.bf16.mxu0 0
    %1086 = vmatpush1.bf16.msra.mxu0 %v826
    %1087 = vmatprep.subr.bf16.mxu0 0
    %1088 = vmatpush1.bf16.msra.mxu0 %v829
    %1089 = vmatprep.subr.bf16.mxu0 0
    %1090 = vmatpush1.bf16.msra.mxu0 %v832
    %1091 = vmatprep.subr.bf16.mxu0 0
    %1092 = vmatpush1.bf16.msra.mxu0 %v835
    %1093 = vmatprep.subr.bf16.mxu0 0
    %1094 = vmatpush1.bf16.msra.mxu0 %v838
    %1095 = vmatprep.subr.bf16.mxu0 0
    %1096 = vmatpush1.bf16.msra.mxu0 %v841
    %1097 = vmatprep.mubr.bf16.mxu0 %v280
    %1098 = vmatmul.mubr.bf16.gmra.mrb[0].mxu0 %v279
    %v1099 = vpop.f32.mrb[0].mxu0
    %v1100 = vadd.f32 %v1059, %v1099
    %v1101 = vpop.f32.mrb[0].mxu0
    %v1102 = vpop.f32.mrb[0].mxu0
    %v1103 = vadd.f32 %v1062, %v1102
    %v1104 = vpop.f32.mrb[0].mxu0
    %1105 = vdwg.mxu0
    %v1106 = vmax.f32 %v1016, 0.0
    %v1107 = vmax.f32 %v1018, 0.0
    %v1108 = vmax.f32 %v1100, 0.0
    %v1109 = vmax.f32 %v1020, 0.0
    %v1110 = vmax.f32 %v1022, 0.0
    %v1111 = vmax.f32 %v1103, 0.0
    %v1112 = vpack.c.bf16 %v1109, %v1106
    %v1113 = vpack.c.bf16 %v1110, %v1107
    %v1114 = vpack.c.bf16 %v1111, %v1108
    %v1115 = vld [vmem:[#allocation8] sm:$0xff]
    %v1116 = vld [vmem:[#allocation8 + $0x8] sm:$0xf]
    %v1117 = vld [vmem:[#allocation8 + $0xc] sm:$0xff]
    %v1118 = vld [vmem:[#allocation8 + $0x14] sm:$0xf]
    %v1119 = vld [vmem:[#allocation8 + $0x18] sm:$0xff]
    %v1120 = vld [vmem:[#allocation8 + $0x20] sm:$0xf]
    %v1121 = vld [vmem:[#allocation8 + $0x24] sm:$0xff]
    %v1122 = vld [vmem:[#allocation8 + $0x2c] sm:$0xf]
    %v1123 = vld [vmem:[#allocation8 + $0x30] sm:$0xff]
    %v1124 = vld [vmem:[#allocation8 + $0x38] sm:$0xf]
    %v1125 = vld [vmem:[#allocation8 + $0x3c] sm:$0xff]
    %v1126 = vld [vmem:[#allocation8 + $0x44] sm:$0xf]
    %v1127 = vld [vmem:[#allocation8 + $0x48] sm:$0xff]
    %v1128 = vld [vmem:[#allocation8 + $0x50] sm:$0xf]
    %v1129 = vld [vmem:[#allocation8 + $0x54] sm:$0xff]
    %v1130 = vld [vmem:[#allocation8 + $0x5c] sm:$0xf]
    %v1131 = vld [vmem:[#allocation8 + $0x60] sm:$0xff]
    %v1132 = vld [vmem:[#allocation8 + $0x68] sm:$0xf]
    %v1133 = vld [vmem:[#allocation8 + $0x6c] sm:$0xff]
    %v1134 = vld [vmem:[#allocation8 + $0x74] sm:$0xf]
    %v1135 = vld [vmem:[#allocation8 + $0x78] sm:$0xff]
    %v1136 = vld [vmem:[#allocation8 + $0x80] sm:$0xf]
    %v1137 = vld [vmem:[#allocation8 + $0x84] sm:$0xff]
    %v1138 = vld [vmem:[#allocation8 + $0x8c] sm:$0xf]
    %v1139 = vld [vmem:[#allocation8 + $0x90] sm:$0xff]
    %v1140 = vld [vmem:[#allocation8 + $0x98] sm:$0xf]
    %v1141 = vld [vmem:[#allocation8 + $0x9c] sm:$0xff]
    %v1142 = vld [vmem:[#allocation8 + $0xa4] sm:$0xf]
    %v1143 = vld [vmem:[#allocation8 + $0xa8] sm:$0xff]
    %v1144 = vld [vmem:[#allocation8 + $0xb0] sm:$0xf]
    %v1145 = vld [vmem:[#allocation8 + $0xb4] sm:$0xff]
    %v1146 = vld [vmem:[#allocation8 + $0xbc] sm:$0xf]
    %v1147 = vld [vmem:[#allocation8 + $0xc0] sm:$0xff]
    %v1148 = vld [vmem:[#allocation8 + $0xc8] sm:$0xf]
    %v1149 = vld [vmem:[#allocation8 + $0xcc] sm:$0xff]
    %v1150 = vld [vmem:[#allocation8 + $0xd4] sm:$0xf]
    %v1151 = vld [vmem:[#allocation8 + $0xd8] sm:$0xff]
    %v1152 = vld [vmem:[#allocation8 + $0xe0] sm:$0xf]
    %v1153 = vld [vmem:[#allocation8 + $0xe4] sm:$0xff]
    %v1154 = vld [vmem:[#allocation8 + $0xec] sm:$0xf]
    %v1155 = vld [vmem:[#allocation8 + $0xf0] sm:$0xff]
    %v1156 = vld [vmem:[#allocation8 + $0xf8] sm:$0xf]
    %v1157 = vld [vmem:[#allocation8 + $0xfc] sm:$0xff]
    %v1158 = vld [vmem:[#allocation8 + $0x104] sm:$0xf]
    %v1159 = vld [vmem:[#allocation8 + $0x108] sm:$0xff]
    %v1160 = vld [vmem:[#allocation8 + $0x110] sm:$0xf]
    %v1161 = vld [vmem:[#allocation8 + $0x114] sm:$0xff]
    %v1162 = vld [vmem:[#allocation8 + $0x11c] sm:$0xf]
    %v1163 = vld [vmem:[#allocation8 + $0x120] sm:$0xff]
    %v1164 = vld [vmem:[#allocation8 + $0x128] sm:$0xf]
    %v1165 = vld [vmem:[#allocation8 + $0x12c] sm:$0xff]
    %v1166 = vld [vmem:[#allocation8 + $0x134] sm:$0xf]
    %v1167 = vld [vmem:[#allocation8 + $0x138] sm:$0xff]
    %v1168 = vld [vmem:[#allocation8 + $0x140] sm:$0xf]
    %v1169 = vld [vmem:[#allocation8 + $0x144] sm:$0xff]
    %v1170 = vld [vmem:[#allocation8 + $0x14c] sm:$0xf]
    %v1171 = vld [vmem:[#allocation8 + $0x150] sm:$0xff]
    %v1172 = vld [vmem:[#allocation8 + $0x158] sm:$0xf]
    %v1173 = vld [vmem:[#allocation8 + $0x15c] sm:$0xff]
    %v1174 = vld [vmem:[#allocation8 + $0x164] sm:$0xf]
    %v1175 = vld [vmem:[#allocation8 + $0x168] sm:$0xff]
    %v1176 = vld [vmem:[#allocation8 + $0x170] sm:$0xf]
    %v1177 = vld [vmem:[#allocation8 + $0x174] sm:$0xff]
    %v1178 = vld [vmem:[#allocation8 + $0x17c] sm:$0xf]
    %v1179 = vld [vmem:[#allocation8 + $0x180] sm:$0xff]
    %v1180 = vld [vmem:[#allocation8 + $0x188] sm:$0xf]
    %v1181 = vld [vmem:[#allocation8 + $0x18c] sm:$0xff]
    %v1182 = vld [vmem:[#allocation8 + $0x194] sm:$0xf]
    %v1183 = vld [vmem:[#allocation8 + $0x198] sm:$0xff]
    %v1184 = vld [vmem:[#allocation8 + $0x1a0] sm:$0xf]
    %v1185 = vld [vmem:[#allocation8 + $0x1a4] sm:$0xff]
    %v1186 = vld [vmem:[#allocation8 + $0x1ac] sm:$0xf]
    %v1187 = vld [vmem:[#allocation8 + $0x1b0] sm:$0xff]
    %v1188 = vld [vmem:[#allocation8 + $0x1b8] sm:$0xf]
    %v1189 = vld [vmem:[#allocation8 + $0x1bc] sm:$0xff]
    %v1190 = vld [vmem:[#allocation8 + $0x1c4] sm:$0xf]
    %v1191 = vld [vmem:[#allocation8 + $0x1c8] sm:$0xff]
    %v1192 = vld [vmem:[#allocation8 + $0x1d0] sm:$0xf]
    %v1193 = vld [vmem:[#allocation8 + $0x1d4] sm:$0xff]
    %v1194 = vld [vmem:[#allocation8 + $0x1dc] sm:$0xf]
    %v1195 = vld [vmem:[#allocation8 + $0x1e0] sm:$0xff]
    %v1196 = vld [vmem:[#allocation8 + $0x1e8] sm:$0xf]
    %v1197 = vld [vmem:[#allocation8 + $0x1ec] sm:$0xff]
    %v1198 = vld [vmem:[#allocation8 + $0x1f4] sm:$0xf]
    %v1199 = vld [vmem:[#allocation8 + $0x1f8] sm:$0xff]
    %v1200 = vld [vmem:[#allocation8 + $0x200] sm:$0xf]
    %v1201 = vld [vmem:[#allocation8 + $0x204] sm:$0xff]
    %v1202 = vld [vmem:[#allocation8 + $0x20c] sm:$0xf]
    %v1203 = vld [vmem:[#allocation8 + $0x210] sm:$0xff]
    %v1204 = vld [vmem:[#allocation8 + $0x218] sm:$0xf]
    %v1205 = vld [vmem:[#allocation8 + $0x21c] sm:$0xff]
    %v1206 = vld [vmem:[#allocation8 + $0x224] sm:$0xf]
    %v1207 = vld [vmem:[#allocation8 + $0x228] sm:$0xff]
    %v1208 = vld [vmem:[#allocation8 + $0x230] sm:$0xf]
    %v1209 = vld [vmem:[#allocation8 + $0x234] sm:$0xff]
    %v1210 = vld [vmem:[#allocation8 + $0x23c] sm:$0xf]
    %v1211 = vld [vmem:[%s6] sm:$0x7]
    %v1213 = vlaneseq
    %v1214 = vshrl.u32 %v1213, 7
    %v1215 = vsub.s32 0, %v1214
    %v1216 = vrot.slane %v1211, %v1215
    %v1217 = vlaneseq
    %v1218 = vshrl.u32 %v1217, 7
    %v1219 = vsub.s32 1, %v1218
    %v1220 = vrot.slane %v1211, %v1219
    %v1221 = vlaneseq
    %v1222 = vshrl.u32 %v1221, 7
    %v1223 = vsub.s32 2, %v1222
    %v1224 = vrot.slane %v1211, %v1223
    %v1324 = vunpack.c.l.b16 %v1115
    %v1325 = vunpack.c.h.b16 %v1115
    %v1326 = vunpack.c.l.b16 %v1116
    %v1327 = vunpack.c.l.b16 %v1117
    %v1328 = vunpack.c.h.b16 %v1117
    %v1329 = vunpack.c.l.b16 %v1118
    %v1330 = vunpack.c.l.b16 %v1119
    %v1331 = vunpack.c.h.b16 %v1119
    %v1332 = vunpack.c.l.b16 %v1120
    %v1333 = vunpack.c.l.b16 %v1121
    %v1334 = vunpack.c.h.b16 %v1121
    %v1335 = vunpack.c.l.b16 %v1122
    %v1336 = vunpack.c.l.b16 %v1123
    %v1337 = vunpack.c.h.b16 %v1123
    %v1338 = vunpack.c.l.b16 %v1124
    %v1339 = vunpack.c.l.b16 %v1125
    %v1340 = vunpack.c.h.b16 %v1125
    %v1341 = vunpack.c.l.b16 %v1126
    %v1342 = vunpack.c.l.b16 %v1127
    %v1343 = vunpack.c.h.b16 %v1127
    %v1344 = vunpack.c.l.b16 %v1128
    %v1345 = vunpack.c.l.b16 %v1129
    %v1346 = vunpack.c.h.b16 %v1129
    %v1347 = vunpack.c.l.b16 %v1130
    %v1348 = vunpack.c.l.b16 %v1131
    %v1349 = vunpack.c.h.b16 %v1131
    %v1350 = vunpack.c.l.b16 %v1132
    %v1351 = vunpack.c.l.b16 %v1133
    %v1352 = vunpack.c.h.b16 %v1133
    %v1353 = vunpack.c.l.b16 %v1134
    %v1354 = vunpack.c.l.b16 %v1135
    %v1355 = vunpack.c.h.b16 %v1135
    %v1356 = vunpack.c.l.b16 %v1136
    %v1357 = vunpack.c.l.b16 %v1137
    %v1358 = vunpack.c.h.b16 %v1137
    %v1359 = vunpack.c.l.b16 %v1138
    %v1360 = vunpack.c.l.b16 %v1139
    %v1361 = vunpack.c.h.b16 %v1139
    %v1362 = vunpack.c.l.b16 %v1140
    %v1363 = vunpack.c.l.b16 %v1141
    %v1364 = vunpack.c.h.b16 %v1141
    %v1365 = vunpack.c.l.b16 %v1142
    %v1366 = vunpack.c.l.b16 %v1143
    %v1367 = vunpack.c.h.b16 %v1143
    %v1368 = vunpack.c.l.b16 %v1144
    %v1369 = vunpack.c.l.b16 %v1145
    %v1370 = vunpack.c.h.b16 %v1145
    %v1371 = vunpack.c.l.b16 %v1146
    %v1372 = vunpack.c.l.b16 %v1147
    %v1373 = vunpack.c.h.b16 %v1147
    %v1374 = vunpack.c.l.b16 %v1148
    %v1375 = vunpack.c.l.b16 %v1149
    %v1376 = vunpack.c.h.b16 %v1149
    %v1377 = vunpack.c.l.b16 %v1150
    %v1378 = vunpack.c.l.b16 %v1151
    %v1379 = vunpack.c.h.b16 %v1151
    %v1380 = vunpack.c.l.b16 %v1152
    %v1381 = vunpack.c.l.b16 %v1153
    %v1382 = vunpack.c.h.b16 %v1153
    %v1383 = vunpack.c.l.b16 %v1154
    %v1384 = vunpack.c.l.b16 %v1155
    %v1385 = vunpack.c.h.b16 %v1155
    %v1386 = vunpack.c.l.b16 %v1156
    %v1387 = vunpack.c.l.b16 %v1157
    %v1388 = vunpack.c.h.b16 %v1157
    %v1389 = vunpack.c.l.b16 %v1158
    %v1390 = vunpack.c.l.b16 %v1159
    %v1391 = vunpack.c.h.b16 %v1159
    %v1392 = vunpack.c.l.b16 %v1160
    %v1393 = vunpack.c.l.b16 %v1161
    %v1394 = vunpack.c.h.b16 %v1161
    %v1395 = vunpack.c.l.b16 %v1162
    %v1396 = vunpack.c.l.b16 %v1163
    %v1397 = vunpack.c.h.b16 %v1163
    %v1398 = vunpack.c.l.b16 %v1164
    %v1399 = vunpack.c.l.b16 %v1165
    %v1400 = vunpack.c.h.b16 %v1165
    %v1401 = vunpack.c.l.b16 %v1166
    %v1402 = vunpack.c.l.b16 %v1167
    %v1403 = vunpack.c.h.b16 %v1167
    %v1404 = vunpack.c.l.b16 %v1168
    %v1405 = vunpack.c.l.b16 %v1169
    %v1406 = vunpack.c.h.b16 %v1169
    %v1407 = vunpack.c.l.b16 %v1170
    %v1408 = vunpack.c.l.b16 %v1171
    %v1409 = vunpack.c.h.b16 %v1171
    %v1410 = vunpack.c.l.b16 %v1172
    %v1411 = vunpack.c.l.b16 %v1173
    %v1412 = vunpack.c.h.b16 %v1173
    %v1413 = vunpack.c.l.b16 %v1174
    %v1414 = vunpack.c.l.b16 %v1175
    %v1415 = vunpack.c.h.b16 %v1175
    %v1416 = vunpack.c.l.b16 %v1176
    %v1417 = vunpack.c.l.b16 %v1177
    %v1418 = vunpack.c.h.b16 %v1177
    %v1419 = vunpack.c.l.b16 %v1178
    %v1420 = vunpack.c.l.b16 %v1179
    %v1421 = vunpack.c.h.b16 %v1179
    %v1422 = vunpack.c.l.b16 %v1180
    %v1423 = vunpack.c.l.b16 %v1181
    %v1424 = vunpack.c.h.b16 %v1181
    %v1425 = vunpack.c.l.b16 %v1182
    %v1426 = vunpack.c.l.b16 %v1183
    %v1427 = vunpack.c.h.b16 %v1183
    %v1428 = vunpack.c.l.b16 %v1184
    %v1429 = vunpack.c.l.b16 %v1185
    %v1430 = vunpack.c.h.b16 %v1185
    %v1431 = vunpack.c.l.b16 %v1186
    %v1432 = vunpack.c.l.b16 %v1187
    %v1433 = vunpack.c.h.b16 %v1187
    %v1434 = vunpack.c.l.b16 %v1188
    %v1435 = vunpack.c.l.b16 %v1189
    %v1436 = vunpack.c.h.b16 %v1189
    %v1437 = vunpack.c.l.b16 %v1190
    %v1438 = vunpack.c.l.b16 %v1191
    %v1439 = vunpack.c.h.b16 %v1191
    %v1440 = vunpack.c.l.b16 %v1192
    %v1441 = vunpack.c.l.b16 %v1193
    %v1442 = vunpack.c.h.b16 %v1193
    %v1443 = vunpack.c.l.b16 %v1194
    %v1444 = vunpack.c.l.b16 %v1195
    %v1445 = vunpack.c.h.b16 %v1195
    %v1446 = vunpack.c.l.b16 %v1196
    %v1447 = vunpack.c.l.b16 %v1197
    %v1448 = vunpack.c.h.b16 %v1197
    %v1449 = vunpack.c.l.b16 %v1198
    %v1450 = vunpack.c.l.b16 %v1199
    %v1451 = vunpack.c.h.b16 %v1199
    %v1452 = vunpack.c.l.b16 %v1200
    %v1453 = vunpack.c.l.b16 %v1201
    %v1454 = vunpack.c.h.b16 %v1201
    %v1455 = vunpack.c.l.b16 %v1202
    %v1456 = vunpack.c.l.b16 %v1203
    %v1457 = vunpack.c.h.b16 %v1203
    %v1458 = vunpack.c.l.b16 %v1204
    %v1459 = vunpack.c.l.b16 %v1205
    %v1460 = vunpack.c.h.b16 %v1205
    %v1461 = vunpack.c.l.b16 %v1206
    %v1462 = vunpack.c.l.b16 %v1207
    %v1463 = vunpack.c.h.b16 %v1207
    %v1464 = vunpack.c.l.b16 %v1208
    %v1465 = vunpack.c.l.b16 %v1209
    %v1466 = vunpack.c.h.b16 %v1209
    %v1467 = vunpack.c.l.b16 %v1210
    %v1468 = vpack.c.b16 %v1327, %v1324
    %v1469 = vpack.c.b16 %v1328, %v1325
    %v1470 = vpack.c.b16 %v1329, %v1326
    %v1471 = vpack.c.b16 %v1333, %v1330
    %v1472 = vpack.c.b16 %v1334, %v1331
    %v1473 = vpack.c.b16 %v1335, %v1332
    %v1474 = vpack.c.b16 %v1339, %v1336
    %v1475 = vpack.c.b16 %v1340, %v1337
    %v1476 = vpack.c.b16 %v1341, %v1338
    %v1477 = vpack.c.b16 %v1345, %v1342
    %v1478 = vpack.c.b16 %v1346, %v1343
    %v1479 = vpack.c.b16 %v1347, %v1344
    %v1480 = vpack.c.b16 %v1351, %v1348
    %v1481 = vpack.c.b16 %v1352, %v1349
    %v1482 = vpack.c.b16 %v1353, %v1350
    %v1483 = vpack.c.b16 %v1357, %v1354
    %v1484 = vpack.c.b16 %v1358, %v1355
    %v1485 = vpack.c.b16 %v1359, %v1356
    %v1486 = vpack.c.b16 %v1363, %v1360
    %v1487 = vpack.c.b16 %v1364, %v1361
    %v1488 = vpack.c.b16 %v1365, %v1362
    %v1489 = vpack.c.b16 %v1369, %v1366
    %v1490 = vpack.c.b16 %v1370, %v1367
    %v1491 = vpack.c.b16 %v1371, %v1368
    %v1492 = vpack.c.b16 %v1375, %v1372
    %v1493 = vpack.c.b16 %v1376, %v1373
    %v1494 = vpack.c.b16 %v1377, %v1374
    %v1495 = vpack.c.b16 %v1381, %v1378
    %v1496 = vpack.c.b16 %v1382, %v1379
    %v1497 = vpack.c.b16 %v1383, %v1380
    %v1498 = vpack.c.b16 %v1387, %v1384
    %v1499 = vpack.c.b16 %v1388, %v1385
    %v1500 = vpack.c.b16 %v1389, %v1386
    %v1501 = vpack.c.b16 %v1393, %v1390
    %v1502 = vpack.c.b16 %v1394, %v1391
    %v1503 = vpack.c.b16 %v1395, %v1392
    %v1504 = vpack.c.b16 %v1399, %v1396
    %v1505 = vpack.c.b16 %v1400, %v1397
    %v1506 = vpack.c.b16 %v1401, %v1398
    %v1507 = vpack.c.b16 %v1405, %v1402
    %v1508 = vpack.c.b16 %v1406, %v1403
    %v1509 = vpack.c.b16 %v1407, %v1404
    %v1510 = vpack.c.b16 %v1411, %v1408
    %v1511 = vpack.c.b16 %v1412, %v1409
    %v1512 = vpack.c.b16 %v1413, %v1410
    %v1513 = vpack.c.b16 %v1417, %v1414
    %v1514 = vpack.c.b16 %v1418, %v1415
    %v1515 = vpack.c.b16 %v1419, %v1416
    %v1516 = vpack.c.b16 %v1423, %v1420
    %v1517 = vpack.c.b16 %v1424, %v1421
    %v1518 = vpack.c.b16 %v1425, %v1422
    %v1519 = vpack.c.b16 %v1429, %v1426
    %v1520 = vpack.c.b16 %v1430, %v1427
    %v1521 = vpack.c.b16 %v1431, %v1428
    %v1522 = vpack.c.b16 %v1435, %v1432
    %v1523 = vpack.c.b16 %v1436, %v1433
    %v1524 = vpack.c.b16 %v1437, %v1434
    %v1525 = vpack.c.b16 %v1441, %v1438
    %v1526 = vpack.c.b16 %v1442, %v1439
    %v1527 = vpack.c.b16 %v1443, %v1440
    %v1528 = vpack.c.b16 %v1447, %v1444
    %v1529 = vpack.c.b16 %v1448, %v1445
    %v1530 = vpack.c.b16 %v1449, %v1446
    %v1531 = vpack.c.b16 %v1453, %v1450
    %v1532 = vpack.c.b16 %v1454, %v1451
    %v1533 = vpack.c.b16 %v1455, %v1452
    %v1534 = vpack.c.b16 %v1459, %v1456
    %v1535 = vpack.c.b16 %v1460, %v1457
    %v1536 = vpack.c.b16 %v1461, %v1458
    %v1537 = vpack.c.b16 %v1465, %v1462
    %v1538 = vpack.c.b16 %v1466, %v1463
    %v1539 = vpack.c.b16 %v1467, %v1464
    %1612 = vmatprep.subr.bf16.mxu0 %v1469
    %1613 = vmatpush1.bf16.msra.mxu0 %v1468
    %1614 = vmatprep.subr.bf16.mxu0 %v1472
    %1615 = vmatpush1.bf16.msra.mxu0 %v1471
    %1616 = vmatprep.subr.bf16.mxu0 %v1475
    %1617 = vmatpush1.bf16.msra.mxu0 %v1474
    %1618 = vmatprep.subr.bf16.mxu0 %v1478
    %1619 = vmatpush1.bf16.msra.mxu0 %v1477
    %1620 = vmatprep.subr.bf16.mxu0 %v1481
    %1621 = vmatpush1.bf16.msra.mxu0 %v1480
    %1622 = vmatprep.subr.bf16.mxu0 %v1484
    %1623 = vmatpush1.bf16.msra.mxu0 %v1483
    %1624 = vmatprep.subr.bf16.mxu0 %v1487
    %1625 = vmatpush1.bf16.msra.mxu0 %v1486
    %1626 = vmatprep.subr.bf16.mxu0 %v1490
    %1627 = vmatpush1.bf16.msra.mxu0 %v1489
    %1628 = vmatprep.subr.bf16.mxu0 %v1493
    %1629 = vmatpush1.bf16.msra.mxu0 %v1492
    %1630 = vmatprep.subr.bf16.mxu0 %v1496
    %1631 = vmatpush1.bf16.msra.mxu0 %v1495
    %1632 = vmatprep.subr.bf16.mxu0 %v1499
    %1633 = vmatpush1.bf16.msra.mxu0 %v1498
    %1634 = vmatprep.subr.bf16.mxu0 %v1502
    %1635 = vmatpush1.bf16.msra.mxu0 %v1501
    %1636 = vmatprep.subr.bf16.mxu0 %v1505
    %1637 = vmatpush1.bf16.msra.mxu0 %v1504
    %1638 = vmatprep.subr.bf16.mxu0 %v1508
    %1639 = vmatpush1.bf16.msra.mxu0 %v1507
    %1640 = vmatprep.subr.bf16.mxu0 %v1511
    %1641 = vmatpush1.bf16.msra.mxu0 %v1510
    %1642 = vmatprep.subr.bf16.mxu0 %v1514
    %1643 = vmatpush1.bf16.msra.mxu0 %v1513
    %1644 = vmatprep.mubr.bf16.mxu0 %v1113
    %1645 = vmatmul.mubr.bf16.gmra.mrb[0].mxu0 %v1112
    %v1646 = vpop.f32.mrb[0].mxu0
    %v1647 = vadd.f32 %v1216, %v1646
    %v1648 = vpop.f32.mrb[0].mxu0
    %v1649 = vadd.f32 %v1220, %v1648
    %v1650 = vpop.f32.mrb[0].mxu0
    %v1651 = vadd.f32 %v1216, %v1650
    %v1652 = vpop.f32.mrb[0].mxu0
    %v1653 = vadd.f32 %v1220, %v1652
    %1654 = vdwg.mxu0
    %1655 = vmatprep.subr.bf16.mxu0 %v1517
    %1656 = vmatpush1.bf16.msra.mxu0 %v1516
    %1657 = vmatprep.subr.bf16.mxu0 %v1520
    %1658 = vmatpush1.bf16.msra.mxu0 %v1519
    %1659 = vmatprep.subr.bf16.mxu0 %v1523
    %1660 = vmatpush1.bf16.msra.mxu0 %v1522
    %1661 = vmatprep.subr.bf16.mxu0 %v1526
    %1662 = vmatpush1.bf16.msra.mxu0 %v1525
    %1663 = vmatprep.subr.bf16.mxu0 %v1529
    %1664 = vmatpush1.bf16.msra.mxu0 %v1528
    %1665 = vmatprep.subr.bf16.mxu0 %v1532
    %1666 = vmatpush1.bf16.msra.mxu0 %v1531
    %1667 = vmatprep.subr.bf16.mxu0 %v1535
    %1668 = vmatpush1.bf16.msra.mxu0 %v1534
    %1669 = vmatprep.subr.bf16.mxu0 %v1538
    %1670 = vmatpush1.bf16.msra.mxu0 %v1537
    %1671 = vmatprep.subr.bf16.mxu0 0
    %1672 = vmatpush1.bf16.msra.mxu0 0
    %1673 = vmatprep.subr.bf16.mxu0 0
    %1674 = vmatpush1.bf16.msra.mxu0 0
    %1675 = vmatprep.subr.bf16.mxu0 0
    %1676 = vmatpush1.bf16.msra.mxu0 0
    %1677 = vmatprep.subr.bf16.mxu0 0
    %1678 = vmatpush1.bf16.msra.mxu0 0
    %1679 = vmatprep.subr.bf16.mxu0 0
    %1680 = vmatpush1.bf16.msra.mxu0 0
    %1681 = vmatprep.subr.bf16.mxu0 0
    %1682 = vmatpush1.bf16.msra.mxu0 0
    %1683 = vmatprep.subr.bf16.mxu0 0
    %1684 = vmatpush1.bf16.msra.mxu0 0
    %1685 = vmatprep.subr.bf16.mxu0 0
    %1686 = vmatpush1.bf16.msra.mxu0 0
    %1687 = vmatprep.mubr.bf16.mxu0 0
    %1688 = vmatmul.mubr.bf16.gmra.mrb[0].mxu0 %v1114
    %v1689 = vpop.f32.mrb[0].mxu0
    %v1690 = vadd.f32 %v1647, %v1689
    %v1691 = vpop.f32.mrb[0].mxu0
    %v1692 = vadd.f32 %v1649, %v1691
    %v1693 = vpop.f32.mrb[0].mxu0
    %v1694 = vadd.f32 %v1651, %v1693
    %v1695 = vpop.f32.mrb[0].mxu0
    %v1696 = vadd.f32 %v1653, %v1695
    %1697 = vdwg.mxu0
    %1698 = vmatprep.subr.bf16.mxu0 0
    %1699 = vmatpush1.bf16.msra.mxu0 %v1470
    %1700 = vmatprep.subr.bf16.mxu0 0
    %1701 = vmatpush1.bf16.msra.mxu0 %v1473
    %1702 = vmatprep.subr.bf16.mxu0 0
    %1703 = vmatpush1.bf16.msra.mxu0 %v1476
    %1704 = vmatprep.subr.bf16.mxu0 0
    %1705 = vmatpush1.bf16.msra.mxu0 %v1479
    %1706 = vmatprep.subr.bf16.mxu0 0
    %1707 = vmatpush1.bf16.msra.mxu0 %v1482
    %1708 = vmatprep.subr.bf16.mxu0 0
    %1709 = vmatpush1.bf16.msra.mxu0 %v1485
    %1710 = vmatprep.subr.bf16.mxu0 0
    %1711 = vmatpush1.bf16.msra.mxu0 %v1488
    %1712 = vmatprep.subr.bf16.mxu0 0
    %1713 = vmatpush1.bf16.msra.mxu0 %v1491
    %1714 = vmatprep.subr.bf16.mxu0 0
    %1715 = vmatpush1.bf16.msra.mxu0 %v1494
    %1716 = vmatprep.subr.bf16.mxu0 0
    %1717 = vmatpush1.bf16.msra.mxu0 %v1497
    %1718 = vmatprep.subr.bf16.mxu0 0
    %1719 = vmatpush1.bf16.msra.mxu0 %v1500
    %1720 = vmatprep.subr.bf16.mxu0 0
    %1721 = vmatpush1.bf16.msra.mxu0 %v1503
    %1722 = vmatprep.subr.bf16.mxu0 0
    %1723 = vmatpush1.bf16.msra.mxu0 %v1506
    %1724 = vmatprep.subr.bf16.mxu0 0
    %1725 = vmatpush1.bf16.msra.mxu0 %v1509
    %1726 = vmatprep.subr.bf16.mxu0 0
    %1727 = vmatpush1.bf16.msra.mxu0 %v1512
    %1728 = vmatprep.subr.bf16.mxu0 0
    %1729 = vmatpush1.bf16.msra.mxu0 %v1515
    %1730 = vmatprep.mubr.bf16.mxu0 %v1113
    %1731 = vmatmul.mubr.bf16.gmra.mrb[0].mxu0 %v1112
    %v1732 = vpop.f32.mrb[0].mxu0
    %v1733 = vadd.f32 %v1224, %v1732
    %v1734 = vpop.f32.mrb[0].mxu0
    %v1735 = vpop.f32.mrb[0].mxu0
    %v1736 = vadd.f32 %v1224, %v1735
    %v1737 = vpop.f32.mrb[0].mxu0
    %1738 = vdwg.mxu0
    %1739 = vmatprep.subr.bf16.mxu0 0
    %1740 = vmatpush1.bf16.msra.mxu0 %v1518
    %1741 = vmatprep.subr.bf16.mxu0 0
    %1742 = vmatpush1.bf16.msra.mxu0 %v1521
    %1743 = vmatprep.subr.bf16.mxu0 0
    %1744 = vmatpush1.bf16.msra.mxu0 %v1524
    %1745 = vmatprep.subr.bf16.mxu0 0
    %1746 = vmatpush1.bf16.msra.mxu0 %v1527
    %1747 = vmatprep.subr.bf16.mxu0 0
    %1748 = vmatpush1.bf16.msra.mxu0 %v1530
    %1749 = vmatprep.subr.bf16.mxu0 0
    %1750 = vmatpush1.bf16.msra.mxu0 %v1533
    %1751 = vmatprep.subr.bf16.mxu0 0
    %1752 = vmatpush1.bf16.msra.mxu0 %v1536
    %1753 = vmatprep.subr.bf16.mxu0 0
    %1754 = vmatpush1.bf16.msra.mxu0 %v1539
    %1755 = vmatprep.subr.bf16.mxu0 0
    %1756 = vmatpush1.bf16.msra.mxu0 0
    %1757 = vmatprep.subr.bf16.mxu0 0
    %1758 = vmatpush1.bf16.msra.mxu0 0
    %1759 = vmatprep.subr.bf16.mxu0 0
    %1760 = vmatpush1.bf16.msra.mxu0 0
    %1761 = vmatprep.subr.bf16.mxu0 0
    %1762 = vmatpush1.bf16.msra.mxu0 0
    %1763 = vmatprep.subr.bf16.mxu0 0
    %1764 = vmatpush1.bf16.msra.mxu0 0
    %1765 = vmatprep.subr.bf16.mxu0 0
    %1766 = vmatpush1.bf16.msra.mxu0 0
    %1767 = vmatprep.subr.bf16.mxu0 0
    %1768 = vmatpush1.bf16.msra.mxu0 0
    %1769 = vmatprep.subr.bf16.mxu0 0
    %1770 = vmatpush1.bf16.msra.mxu0 0
    %1771 = vmatprep.mubr.bf16.mxu0 0
    %1772 = vmatmul.mubr.bf16.gmra.mrb[0].mxu0 %v1114
    %v1773 = vpop.f32.mrb[0].mxu0
    %v1774 = vadd.f32 %v1733, %v1773
    %v1775 = vpop.f32.mrb[0].mxu0
    %v1776 = vpop.f32.mrb[0].mxu0
    %v1777 = vadd.f32 %v1736, %v1776
    %v1778 = vpop.f32.mrb[0].mxu0
    %1779 = vdwg.mxu0
    %v1780 = vmax.f32 %v1690, 0.0
    %v1781 = vmax.f32 %v1692, 0.0
    %v1782 = vmax.f32 %v1774, 0.0
    %v1783 = vmax.f32 %v1694, 0.0
    %v1784 = vmax.f32 %v1696, 0.0
    %v1785 = vmax.f32 %v1777, 0.0
    %v1786 = vpack.c.bf16 %v1783, %v1780
    %v1787 = vpack.c.bf16 %v1784, %v1781
    %v1788 = vpack.c.bf16 %v1785, %v1782
    %v1789 = vld [vmem:[#allocation10] sm:$0xf]
    %v1790 = vld [vmem:[#allocation10 + $0x4] sm:$0xf]
    %v1791 = vld [vmem:[#allocation10 + $0x8] sm:$0xf]
    %v1792 = vld [vmem:[#allocation10 + $0xc] sm:$0xf]
    %v1793 = vld [vmem:[#allocation10 + $0x10] sm:$0xf]
    %v1794 = vld [vmem:[#allocation10 + $0x14] sm:$0xf]
    %v1795 = vld [vmem:[#allocation10 + $0x18] sm:$0xf]
    %v1796 = vld [vmem:[#allocation10 + $0x1c] sm:$0xf]
    %v1797 = vld [vmem:[#allocation10 + $0x20] sm:$0xf]
    %v1798 = vld [vmem:[#allocation10 + $0x24] sm:$0xf]
    %v1799 = vld [vmem:[#allocation10 + $0x28] sm:$0xf]
    %v1800 = vld [vmem:[#allocation10 + $0x2c] sm:$0xf]
    %v1801 = vld [vmem:[#allocation10 + $0x30] sm:$0xf]
    %v1802 = vld [vmem:[#allocation10 + $0x34] sm:$0xf]
    %v1803 = vld [vmem:[#allocation10 + $0x38] sm:$0xf]
    %v1804 = vld [vmem:[#allocation10 + $0x3c] sm:$0xf]
    %v1805 = vld [vmem:[#allocation10 + $0x40] sm:$0xf]
    %v1806 = vld [vmem:[#allocation10 + $0x44] sm:$0xf]
    %v1807 = vld [vmem:[#allocation10 + $0x48] sm:$0xf]
    %v1808 = vld [vmem:[#allocation10 + $0x4c] sm:$0xf]
    %v1809 = vld [vmem:[#allocation10 + $0x50] sm:$0xf]
    %v1810 = vld [vmem:[#allocation10 + $0x54] sm:$0xf]
    %v1811 = vld [vmem:[#allocation10 + $0x58] sm:$0xf]
    %v1812 = vld [vmem:[#allocation10 + $0x5c] sm:$0xf]
    %v1813 = vld [vmem:[#allocation10 + $0x60] sm:$0xf]
    %v1814 = vld [vmem:[#allocation10 + $0x64] sm:$0xf]
    %v1815 = vld [vmem:[#allocation10 + $0x68] sm:$0xf]
    %v1816 = vld [vmem:[#allocation10 + $0x6c] sm:$0xf]
    %v1817 = vld [vmem:[#allocation10 + $0x70] sm:$0xf]
    %v1818 = vld [vmem:[#allocation10 + $0x74] sm:$0xf]
    %v1819 = vld [vmem:[#allocation10 + $0x78] sm:$0xf]
    %v1820 = vld [vmem:[#allocation10 + $0x7c] sm:$0xf]
    %v1821 = vld [vmem:[#allocation10 + $0x80] sm:$0xf]
    %v1822 = vld [vmem:[#allocation10 + $0x84] sm:$0xf]
    %v1823 = vld [vmem:[#allocation10 + $0x88] sm:$0xf]
    %v1824 = vld [vmem:[#allocation10 + $0x8c] sm:$0xf]
    %v1825 = vld [vmem:[#allocation10 + $0x90] sm:$0xf]
    %v1826 = vld [vmem:[#allocation10 + $0x94] sm:$0xf]
    %v1827 = vld [vmem:[#allocation10 + $0x98] sm:$0xf]
    %v1828 = vld [vmem:[#allocation10 + $0x9c] sm:$0xf]
    %v1829 = vld [vmem:[#allocation10 + $0xa0] sm:$0xf]
    %v1830 = vld [vmem:[#allocation10 + $0xa4] sm:$0xf]
    %v1831 = vld [vmem:[#allocation10 + $0xa8] sm:$0xf]
    %v1832 = vld [vmem:[#allocation10 + $0xac] sm:$0xf]
    %v1833 = vld [vmem:[#allocation10 + $0xb0] sm:$0xf]
    %v1834 = vld [vmem:[#allocation10 + $0xb4] sm:$0xf]
    %v1835 = vld [vmem:[#allocation10 + $0xb8] sm:$0xf]
    %v1836 = vld [vmem:[#allocation10 + $0xbc] sm:$0xf]
    %v1837 = vld [vmem:[%s8] sm:$0x1]
    %v1839 = vlaneseq
    %v1840 = vshrl.u32 %v1839, 7
    %v1841 = vsub.s32 0, %v1840
    %v1842 = vrot.slane %v1837, %v1841
    %v1892 = vunpack.c.l.b16 %v1789
    %v1893 = vunpack.c.l.b16 %v1790
    %v1894 = vunpack.c.l.b16 %v1791
    %v1895 = vunpack.c.l.b16 %v1792
    %v1896 = vunpack.c.l.b16 %v1793
    %v1897 = vunpack.c.l.b16 %v1794
    %v1898 = vunpack.c.l.b16 %v1795
    %v1899 = vunpack.c.l.b16 %v1796
    %v1900 = vunpack.c.l.b16 %v1797
    %v1901 = vunpack.c.l.b16 %v1798
    %v1902 = vunpack.c.l.b16 %v1799
    %v1903 = vunpack.c.l.b16 %v1800
    %v1904 = vunpack.c.l.b16 %v1801
    %v1905 = vunpack.c.l.b16 %v1802
    %v1906 = vunpack.c.l.b16 %v1803
    %v1907 = vunpack.c.l.b16 %v1804
    %v1908 = vunpack.c.l.b16 %v1805
    %v1909 = vunpack.c.l.b16 %v1806
    %v1910 = vunpack.c.l.b16 %v1807
    %v1911 = vunpack.c.l.b16 %v1808
    %v1912 = vunpack.c.l.b16 %v1809
    %v1913 = vunpack.c.l.b16 %v1810
    %v1914 = vunpack.c.l.b16 %v1811
    %v1915 = vunpack.c.l.b16 %v1812
    %v1916 = vunpack.c.l.b16 %v1813
    %v1917 = vunpack.c.l.b16 %v1814
    %v1918 = vunpack.c.l.b16 %v1815
    %v1919 = vunpack.c.l.b16 %v1816
    %v1920 = vunpack.c.l.b16 %v1817
    %v1921 = vunpack.c.l.b16 %v1818
    %v1922 = vunpack.c.l.b16 %v1819
    %v1923 = vunpack.c.l.b16 %v1820
    %v1924 = vunpack.c.l.b16 %v1821
    %v1925 = vunpack.c.l.b16 %v1822
    %v1926 = vunpack.c.l.b16 %v1823
    %v1927 = vunpack.c.l.b16 %v1824
    %v1928 = vunpack.c.l.b16 %v1825
    %v1929 = vunpack.c.l.b16 %v1826
    %v1930 = vunpack.c.l.b16 %v1827
    %v1931 = vunpack.c.l.b16 %v1828
    %v1932 = vunpack.c.l.b16 %v1829
    %v1933 = vunpack.c.l.b16 %v1830
    %v1934 = vunpack.c.l.b16 %v1831
    %v1935 = vunpack.c.l.b16 %v1832
    %v1936 = vunpack.c.l.b16 %v1833
    %v1937 = vunpack.c.l.b16 %v1834
    %v1938 = vunpack.c.l.b16 %v1835
    %v1939 = vunpack.c.l.b16 %v1836
    %v1940 = vpack.c.b16 %v1893, %v1892
    %v1941 = vpack.c.b16 %v1895, %v1894
    %v1942 = vpack.c.b16 %v1897, %v1896
    %v1943 = vpack.c.b16 %v1899, %v1898
    %v1944 = vpack.c.b16 %v1901, %v1900
    %v1945 = vpack.c.b16 %v1903, %v1902
    %v1946 = vpack.c.b16 %v1905, %v1904
    %v1947 = vpack.c.b16 %v1907, %v1906
    %v1948 = vpack.c.b16 %v1909, %v1908
    %v1949 = vpack.c.b16 %v1911, %v1910
    %v1950 = vpack.c.b16 %v1913, %v1912
    %v1951 = vpack.c.b16 %v1915, %v1914
    %v1952 = vpack.c.b16 %v1917, %v1916
    %v1953 = vpack.c.b16 %v1919, %v1918
    %v1954 = vpack.c.b16 %v1921, %v1920
    %v1955 = vpack.c.b16 %v1923, %v1922
    %v1956 = vpack.c.b16 %v1925, %v1924
    %v1957 = vpack.c.b16 %v1927, %v1926
    %v1958 = vpack.c.b16 %v1929, %v1928
    %v1959 = vpack.c.b16 %v1931, %v1930
    %v1960 = vpack.c.b16 %v1933, %v1932
    %v1961 = vpack.c.b16 %v1935, %v1934
    %v1962 = vpack.c.b16 %v1937, %v1936
    %v1963 = vpack.c.b16 %v1939, %v1938
    %1988 = vmatprep.subr.bf16.mxu0 0
    %1989 = vmatpush1.bf16.msra.mxu0 %v1940
    %1990 = vmatprep.subr.bf16.mxu0 0
    %1991 = vmatpush1.bf16.msra.mxu0 %v1941
    %1992 = vmatprep.subr.bf16.mxu0 0
    %1993 = vmatpush1.bf16.msra.mxu0 %v1942
    %1994 = vmatprep.subr.bf16.mxu0 0
    %1995 = vmatpush1.bf16.msra.mxu0 %v1943
    %1996 = vmatprep.subr.bf16.mxu0 0
    %1997 = vmatpush1.bf16.msra.mxu0 %v1944
    %1998 = vmatprep.subr.bf16.mxu0 0
    %1999 = vmatpush1.bf16.msra.mxu0 %v1945
    %2000 = vmatprep.subr.bf16.mxu0 0
    %2001 = vmatpush1.bf16.msra.mxu0 %v1946
    %2002 = vmatprep.subr.bf16.mxu0 0
    %2003 = vmatpush1.bf16.msra.mxu0 %v1947
    %2004 = vmatprep.subr.bf16.mxu0 0
    %2005 = vmatpush1.bf16.msra.mxu0 %v1948
    %2006 = vmatprep.subr.bf16.mxu0 0
    %2007 = vmatpush1.bf16.msra.mxu0 %v1949
    %2008 = vmatprep.subr.bf16.mxu0 0
    %2009 = vmatpush1.bf16.msra.mxu0 %v1950
    %2010 = vmatprep.subr.bf16.mxu0 0
    %2011 = vmatpush1.bf16.msra.mxu0 %v1951
    %2012 = vmatprep.subr.bf16.mxu0 0
    %2013 = vmatpush1.bf16.msra.mxu0 %v1952
    %2014 = vmatprep.subr.bf16.mxu0 0
    %2015 = vmatpush1.bf16.msra.mxu0 %v1953
    %2016 = vmatprep.subr.bf16.mxu0 0
    %2017 = vmatpush1.bf16.msra.mxu0 %v1954
    %2018 = vmatprep.subr.bf16.mxu0 0
    %2019 = vmatpush1.bf16.msra.mxu0 %v1955
    %2020 = vmatprep.mubr.bf16.mxu0 %v1787
    %2021 = vmatmul.mubr.bf16.gmra.mrb[0].mxu0 %v1786
    %v2022 = vpop.f32.mrb[0].mxu0
    %v2023 = vadd.f32 %v1842, %v2022
    %v2024 = vpop.f32.mrb[0].mxu0
    %v2025 = vpop.f32.mrb[0].mxu0
    %v2026 = vadd.f32 %v1842, %v2025
    %v2027 = vpop.f32.mrb[0].mxu0
    %2028 = vdwg.mxu0
    %2029 = vmatprep.subr.bf16.mxu0 0
    %2030 = vmatpush1.bf16.msra.mxu0 %v1956
    %2031 = vmatprep.subr.bf16.mxu0 0
    %2032 = vmatpush1.bf16.msra.mxu0 %v1957
    %2033 = vmatprep.subr.bf16.mxu0 0
    %2034 = vmatpush1.bf16.msra.mxu0 %v1958
    %2035 = vmatprep.subr.bf16.mxu0 0
    %2036 = vmatpush1.bf16.msra.mxu0 %v1959
    %2037 = vmatprep.subr.bf16.mxu0 0
    %2038 = vmatpush1.bf16.msra.mxu0 %v1960
    %2039 = vmatprep.subr.bf16.mxu0 0
    %2040 = vmatpush1.bf16.msra.mxu0 %v1961
    %2041 = vmatprep.subr.bf16.mxu0 0
    %2042 = vmatpush1.bf16.msra.mxu0 %v1962
    %2043 = vmatprep.subr.bf16.mxu0 0
    %2044 = vmatpush1.bf16.msra.mxu0 %v1963
    %2045 = vmatprep.subr.bf16.mxu0 0
    %2046 = vmatpush1.bf16.msra.mxu0 0
    %2047 = vmatprep.subr.bf16.mxu0 0
    %2048 = vmatpush1.bf16.msra.mxu0 0
    %2049 = vmatprep.subr.bf16.mxu0 0
    %2050 = vmatpush1.bf16.msra.mxu0 0
    %2051 = vmatprep.subr.bf16.mxu0 0
    %2052 = vmatpush1.bf16.msra.mxu0 0
    %2053 = vmatprep.subr.bf16.mxu0 0
    %2054 = vmatpush1.bf16.msra.mxu0 0
    %2055 = vmatprep.subr.bf16.mxu0 0
    %2056 = vmatpush1.bf16.msra.mxu0 0
    %2057 = vmatprep.subr.bf16.mxu0 0
    %2058 = vmatpush1.bf16.msra.mxu0 0
    %2059 = vmatprep.subr.bf16.mxu0 0
    %2060 = vmatpush1.bf16.msra.mxu0 0
    %2061 = vmatprep.mubr.bf16.mxu0 0
    %2062 = vmatmul.mubr.bf16.gmra.mrb[0].mxu0 %v1788
    %v2063 = vpop.f32.mrb[0].mxu0
    %v2064 = vadd.f32 %v2023, %v2063
    %v2065 = vpop.f32.mrb[0].mxu0
    %v2066 = vpop.f32.mrb[0].mxu0
    %v2067 = vadd.f32 %v2026, %v2066
    %v2068 = vpop.f32.mrb[0].mxu0
    %2069 = vdwg.mxu0
    %v2070 = vpack.c.bf16 %v2067, %v2064
    %v2072 = vunpack.c.l.b16 %v2070
    %v2073 = vunpack.c.h.b16 %v2070
    %v2074 = vpack.c.b16 %v2072, %v2072
    %v2075 = vpack.c.b16 %v2073, %v2073
    %2078 = vst [vmem:[#allocation11] sm:$0xf] %v2074
    %2079 = vst [vmem:[#allocation11 + $0x4] sm:$0xf] %v2075
    // Predicated region
    $region58: #{tpu_custom_call.1} parent=1 // pred_check
      _
    $region59: #{tpu_custom_call.1} parent=1 // pred_check_branch
      %2081 = sbr.rel (0) target = $region61
    $region60: #{tpu_custom_call.1} parent=1 // pred_region
      %s2083 = ssub.s32 128, 128
      %2084 = vsyncadd [#allocation4], %s2083
      %s2085 = sshll.u32 [#allocation11], 4
      %s2086 = int_to_ptr.vmem [resolvable:$true] %s2085
      %2091 = dma.vmem_to_hbm [thread:$0]  %s2086, 128, %s9, [#allocation4], 64, 64, 4
    $region61: #{tpu_custom_call.1} parent=1 // pred_fallthru
      _
    // Predicated region
    $region62: #{tpu_custom_call.1} parent=1 // pred_check
      _
    $region63: #{tpu_custom_call.1} parent=1 // pred_check_branch
      %2093 = sbr.rel (0) target = $region65
    $region64: #{tpu_custom_call.1} parent=1 // pred_region
      %2094 = dma.done [#allocation4], 128
    $region65: #{tpu_custom_call.1} parent=1 // pred_fallthru
      _
    %2095 = vsyncpa [#allocation3], 1
    %2096 = vsyncpa [#allocation6], 1
    %2097 = vsyncpa [#allocation9], 1
    %2098 = vsyncpa [#allocation4], 1

</llo_original>
